<compile_context>
chip_gen: v6e
topology: v6e:2x2x1
jax: 0.10.0
libtpu: 0.0.40
codegen_flags: <defaults>
</compile_context>

<pallas_src>
import functools

import jax
import jax.numpy as jnp
from jax.experimental import pallas as pl
from jax.experimental.pallas import tpu as pltpu


# ----------------------------- config (opt) ---------------------------------
class Opt:
    bottleneck_size = 32
    dim_template = 2        # input_size
    hidden_neurons = 32
    num_layers = 2
    activation = "relu"


def get_activation(name):
    getter = {
        "relu": lambda x: jnp.maximum(x, 0.0),
        "sigmoid": jax.nn.sigmoid,
        "softplus": jax.nn.softplus,
        "logsigmoid": jax.nn.log_sigmoid,
        "softsign": jax.nn.soft_sign,
        "tanh": jnp.tanh,
    }
    return getter[name]


# ------------------------------- kernel --------------------------------------
def mapping_kernel(num_layers, d_in, act, matmul_dtype, precision,
                   x_ref, lat_ref,
                   w1_ref, w2_ref, wl_ref, wlast_ref,
                   shifts_ref, blast_ref,
                   o_ref):
    # One grid step = (one batch element, one lane-dense point tile).
    x = x_ref[0]                       # (d_in, TN)    f32
    lat = lat_ref[0]                   # (bott, 1)     f32, bn1/bias/latent folded
    w1 = w1_ref[...]                   # (bott, d_in)  f32, bn1-scaled

    # conv1: K = d_in (tiny) -> VPU broadcast multiply-adds, not an MXU pass.
    h = w1[:, 0:1] * x[0:1, :]
    for j in range(1, d_in):
        h = h + w1[:, j:j + 1] * x[j:j + 1, :]
    h = act(h + lat)                                            # (bott, TN) f32

    # conv2 + folded bn2
    h = jnp.dot(w2_ref[...], h.astype(matmul_dtype),
                preferred_element_type=jnp.float32, precision=precision)
    h = act(h + shifts_ref[0])                                  # (hid, TN) f32

    # hidden conv_list / bn_list layers (static unroll)
    for i in range(num_layers):
        h = jnp.dot(wl_ref[i], h.astype(matmul_dtype),
                    preferred_element_type=jnp.float32, precision=precision)
        h = act(h + shifts_ref[i + 1])

    # last_conv (no BN, no activation); output block is (3, TN) -> lane-dense store
    o_ref[0] = (jnp.dot(wlast_ref[...], h.astype(matmul_dtype),
                        preferred_element_type=jnp.float32, precision=precision)
                + blast_ref[...]).astype(o_ref.dtype)


# --------------------------- tile selection -----------------------------------
def _choose_tile(N, B, tile_n_cap, min_steps=4):
    """Pick a lane-dense point tile that divides round_up(N, 128).

    Choosing a divisor means x / out never need padding beyond the 128 boundary
    (and none at all when N % 128 == 0), eliminating full-array pad/slice HBM
    copies in the wrapper.  The tile is also capped so the 2-D grid keeps at
    least `min_steps` total steps (>= 2 per TensorCore on v7x's dual-TC megacore).
    Returns (tile_n, padded_N).
    """
    n128 = pl.cdiv(N, 128) * 128
    k = n128 // 128                                   # number of 128-lane chunks
    cap = max(1, min(int(tile_n_cap) // 128, k))
    divisors = [d for d in range(1, cap + 1) if k % d == 0]
    good = [d for d in divisors if B * (k // d) >= min_steps]
    d = max(good) if good else max(divisors)
    return d * 128, n128


# ------------------------------ wrapper ---------------------------------------
def mapping2d_to_3d(x_ncw, latent, params, opt, *, tile_n=8192,
                    matmul_dtype=jnp.bfloat16):
    """x_ncw: (B, dim_template, N), latent: (B, bottleneck, 1).
    Returns (B, 3, N) float32, matching the PyTorch module's NCW output layout.

    tile_n: upper bound on the point-tile (lane) width; the actual tile is a
    multiple of 128 dividing round_up(N, 128), shrunk to keep >= 4 grid steps.
    matmul_dtype: bf16 by default (production choice on all generations); pass
    jnp.float32 for a bit-tighter path (HIGHEST-precision MXU passes).
    """
    B, d_in, N = x_ncw.shape
    bott, hid, nl, d_out = (opt.bottleneck_size, opt.hidden_neurons,
                            opt.num_layers, 3)
    assert d_in == opt.dim_template

    # --- fold BN (inference running stats), biases and latent outside the kernel.
    # act(s*(W@h + b) + t) == act((s*W)@h + (s*b + t))
    w1f = (params["w1"] * params["s1"]).astype(jnp.float32)              # (bott, d_in)
    lat_eff = (params["s1"][None] * (params["b1"][None] + latent)
               + params["t1"][None]).astype(jnp.float32)                 # (B, bott, 1)
    w2f = (params["w2"] * params["s2"]).astype(matmul_dtype)             # (hid, bott)
    c2 = params["s2"] * params["b2"] + params["t2"]                      # (hid, 1)
    wlf = (params["wl"] * params["sl"]).astype(matmul_dtype)             # (nl, hid, hid)
    cl = params["sl"] * params["bl"] + params["tl"]                      # (nl, hid, 1)
    shifts = jnp.concatenate([c2[None], cl], axis=0).astype(jnp.float32) # (nl+1, hid, 1)
    wlast = params["wlast"].astype(matmul_dtype)                         # (d_out, hid)
    blast = params["blast"].astype(jnp.float32)                          # (d_out, 1)

    # --- tile: multiple-of-128 divisor of round_up(N,128); pad only if N % 128 != 0.
    tn, n_pad = _choose_tile(N, B, tile_n)
    x_p = x_ncw if n_pad == N else jnp.pad(
        x_ncw, ((0, 0), (0, 0), (0, n_pad - N)))
    num_n = n_pad // tn

    act = get_activation(opt.activation)
    f32_path = jnp.dtype(matmul_dtype) == jnp.dtype(jnp.float32)
    precision = jax.lax.Precision.HIGHEST if f32_path else None
    kernel = functools.partial(mapping_kernel, nl, d_in, act, matmul_dtype,
                               precision)

    full = lambda shape: pl.BlockSpec(shape, lambda b, n: (0,) * len(shape))

    # Advisory cost estimate so XLA can schedule surrounding HLO around the call.
    flops = 2 * B * N * (d_in * bott + bott * hid + nl * hid * hid + hid * d_out)
    transc = 0 if opt.activation == "relu" else B * N * (bott + (nl + 1) * hid)
    bytes_accessed = 4 * B * N * (d_in + d_out) + 4 * B * bott

    out = pl.pallas_call(
        kernel,
        out_shape=jax.ShapeDtypeStruct((B, d_out, n_pad), jnp.float32),
        grid_spec=pltpu.PrefetchScalarGridSpec(
            num_scalar_prefetch=0,
            grid=(B, num_n),
            in_specs=[
                pl.BlockSpec((1, d_in, tn), lambda b, n: (b, 0, n)),   # x tile
                pl.BlockSpec((1, bott, 1), lambda b, n: (b, 0, 0)),    # folded latent
                full((bott, d_in)),                                    # w1 (bn1-scaled)
                full((hid, bott)),                                     # w2 (bn2-scaled)
                full((nl, hid, hid)),                                  # conv_list (scaled)
                full((d_out, hid)),                                    # last_conv w
                full((nl + 1, hid, 1)),                                # packed shifts
                full((d_out, 1)),                                      # last_conv b
            ],
            out_specs=pl.BlockSpec((1, d_out, tn), lambda b, n: (b, 0, n)),
        ),
        compiler_params=pltpu.CompilerParams(
            dimension_semantics=("parallel", "parallel"),
            vmem_limit_bytes=32 * 1024 * 1024),
        cost_estimate=pl.CostEstimate(flops=flops, transcendentals=transc,
                                      bytes_accessed=bytes_accessed),
    )(x_p, lat_eff, w1f, w2f, wlf, wlast, shifts, blast)

    return out if n_pad == N else out[:, :, :N]


# ----------------------- deterministic param init -----------------------------
def init_params(key, opt):
    d_in, bott, hid, nl, d_out = (opt.dim_template, opt.bottleneck_size,
                                  opt.hidden_neurons, opt.num_layers, 3)
    eps = 1e-5
    keys = jax.random.split(key, 11)

    def bn_fold(k, c, prefix=()):
        kg, kb, km, kv = jax.random.split(k, 4)
        shp = prefix + (c, 1)
        gamma = 1.0 + 0.1 * jax.random.normal(kg, shp, jnp.float32)
        beta = 0.1 * jax.random.normal(kb, shp, jnp.float32)
        mean = 0.1 * jax.random.normal(km, shp, jnp.float32)
        var = jnp.abs(jax.random.normal(kv, shp, jnp.float32)) + 0.5
        scale = gamma / jnp.sqrt(var + eps)
        shift = beta - mean * scale
        return scale, shift

    s1, t1 = bn_fold(keys[8], bott)
    s2, t2 = bn_fold(keys[9], hid)
    sl, tl = bn_fold(keys[10], hid, (nl,))

    # Conv1d weights stored channel-major (C_out, C_in); biases as (C, 1) columns.
    return {
        "w1": 0.2 * jax.random.normal(keys[0], (bott, d_in), jnp.float32),
        "b1": 0.1 * jax.random.normal(keys[1], (bott, 1), jnp.float32),
        "w2": 0.2 * jax.random.normal(keys[2], (hid, bott), jnp.float32),
        "b2": 0.1 * jax.random.normal(keys[3], (hid, 1), jnp.float32),
        "wl": 0.2 * jax.random.normal(keys[4], (nl, hid, hid), jnp.float32),
        "bl": 0.1 * jax.random.normal(keys[5], (nl, hid, 1), jnp.float32),
        "wlast": 0.2 * jax.random.normal(keys[6], (d_out, hid), jnp.float32),
        "blast": 0.1 * jax.random.normal(keys[7], (d_out, 1), jnp.float32),
        "s1": s1, "t1": t1, "s2": s2, "t2": t2, "sl": sl, "tl": tl,
    }


# ------------------------------ reference -------------------------------------
def reference(x_ncw, latent, p, opt):
    """Pure-JAX mirror of the PyTorch forward (inference-mode BN), NCW layout."""
    act = get_activation(opt.activation)
    h = jnp.einsum("oc,bcn->bon", p["w1"], x_ncw) + p["b1"] + latent
    h = act(h * p["s1"] + p["t1"])
    h = jnp.einsum("oc,bcn->bon", p["w2"], h) + p["b2"]
    h = act(h * p["s2"] + p["t2"])
    for i in range(opt.num_layers):
        h = jnp.einsum("oc,bcn->bon", p["wl"][i], h) + p["bl"][i]
        h = act(h * p["sl"][i] + p["tl"][i])
    return jnp.einsum("oc,bcn->bon", p["wlast"], h) + p["blast"]


if __name__ == "__main__":
    opt = Opt()
    B, N = 2, 1024                      # small: 2 charts x 1024 points
    key = jax.random.PRNGKey(0)
    kx, kl, kp = jax.random.split(key, 3)

    x = jax.random.normal(kx, (B, opt.dim_template, N), jnp.float32)       # (B, 2, N)
    latent = jax.random.normal(kl, (B, opt.bottleneck_size, 1), jnp.float32)
    params = init_params(kp, opt)

    ref = reference(x, latent, params, opt)

    # f32 path with HIGHEST precision (tight check vs reference).
    out_f32 = jax.block_until_ready(
        mapping2d_to_3d(x, latent, params, opt, matmul_dtype=jnp.float32))
    assert out_f32.shape == (B, 3, N), out_f32.shape
    assert jnp.allclose(out_f32, ref, atol=1e-4, rtol=1e-4), "f32 mismatch vs reference"

    # Default (bf16 MXU-input) production path; coarse sanity check only.
    out_bf16 = jax.block_until_ready(mapping2d_to_3d(x, latent, params, opt))
    assert out_bf16.shape == (B, 3, N)
    assert bool(jnp.all(jnp.isfinite(out_bf16)))
    assert jnp.allclose(out_bf16, ref, atol=0.5, rtol=0.2), "bf16 path diverged"

    # Ragged-N path (exercises the 128-boundary pad + tile-divisor selection).
    N2 = 1000
    x2 = jax.random.normal(kx, (B, opt.dim_template, N2), jnp.float32)
    ref2 = reference(x2, latent, params, opt)
    out2 = jax.block_until_ready(mapping2d_to_3d(x2, latent, params, opt))
    assert out2.shape == (B, 3, N2), out2.shape
    assert jnp.allclose(out2, ref2, atol=0.5, rtol=0.2), "ragged-N path diverged"

    print("KERNEL_OK")
</pallas_src>

<mosaic_0001>
module attributes {stable_mosaic.version = 11 : i64} {
  func.func @mapping_kernel(%arg0: i32, %arg1: i32, %arg2: memref<1x2x512xf32, #tpu.memory_space<vmem>>, %arg3: memref<1x32x1xf32, #tpu.memory_space<vmem>>, %arg4: memref<32x2xf32, #tpu.memory_space<vmem>>, %arg5: memref<32x32xf32, #tpu.memory_space<vmem>>, %arg6: memref<2x32x32xf32, #tpu.memory_space<vmem>>, %arg7: memref<3x32xf32, #tpu.memory_space<vmem>>, %arg8: memref<3x32x1xf32, #tpu.memory_space<vmem>>, %arg9: memref<3x1xf32, #tpu.memory_space<vmem>>, %arg10: memref<1x3x512xf32, #tpu.memory_space<vmem>>) attributes {dimension_semantics = [#tpu.dimension_semantics<parallel>, #tpu.dimension_semantics<parallel>], iteration_bounds = array<i64: 2, 2>, scalar_prefetch = 0 : i64, scratch_operands = 0 : i64, tpu.core_type = #tpu.core_type<tc>, window_params = [{transform_indices = @transform_0, window_bounds = array<i64: 1, 2, 512>}, {transform_indices = @transform_1, window_bounds = array<i64: 1, 32, 1>}, {pipeline_mode = #tpu.pipeline_mode<synchronous>, transform_indices = @transform_2, window_bounds = array<i64: 32, 2>}, {pipeline_mode = #tpu.pipeline_mode<synchronous>, transform_indices = @transform_3, window_bounds = array<i64: 32, 32>}, {pipeline_mode = #tpu.pipeline_mode<synchronous>, transform_indices = @transform_4, window_bounds = array<i64: 2, 32, 32>}, {pipeline_mode = #tpu.pipeline_mode<synchronous>, transform_indices = @transform_5, window_bounds = array<i64: 3, 32>}, {pipeline_mode = #tpu.pipeline_mode<synchronous>, transform_indices = @transform_6, window_bounds = array<i64: 3, 32, 1>}, {pipeline_mode = #tpu.pipeline_mode<synchronous>, transform_indices = @transform_7, window_bounds = array<i64: 3, 1>}, {transform_indices = @transform_8, window_bounds = array<i64: 1, 3, 512>}]} {
    %c0 = arith.constant 0 : index
    %c0_0 = arith.constant 0 : index
    %c0_1 = arith.constant 0 : index
    %0 = vector.load %arg2[%c0, %c0_0, %c0_1] : memref<1x2x512xf32, #tpu.memory_space<vmem>>, vector<1x2x512xf32>
    %1 = vector.shape_cast %0 : vector<1x2x512xf32> to vector<2x512xf32>
    %c0_2 = arith.constant 0 : index
    %c0_3 = arith.constant 0 : index
    %c0_4 = arith.constant 0 : index
    %2 = vector.load %arg3[%c0_2, %c0_3, %c0_4] : memref<1x32x1xf32, #tpu.memory_space<vmem>>, vector<1x32x1xf32>
    %3 = vector.shape_cast %2 : vector<1x32x1xf32> to vector<32x1xf32>
    %c0_5 = arith.constant 0 : index
    %c0_6 = arith.constant 0 : index
    %4 = vector.load %arg4[%c0_5, %c0_6] : memref<32x2xf32, #tpu.memory_space<vmem>>, vector<32x2xf32>
    %5 = vector.extract_strided_slice %4 {offsets = [0, 0], sizes = [32, 1], strides = [1, 1]} : vector<32x2xf32> to vector<32x1xf32>
    %6 = vector.extract_strided_slice %1 {offsets = [0, 0], sizes = [1, 512], strides = [1, 1]} : vector<2x512xf32> to vector<1x512xf32>
    %7 = vector.broadcast %5 : vector<32x1xf32> to vector<32x512xf32>
    %8 = vector.broadcast %6 : vector<1x512xf32> to vector<32x512xf32>
    %9 = arith.mulf %7, %8 : vector<32x512xf32>
    %10 = vector.extract_strided_slice %4 {offsets = [0, 1], sizes = [32, 1], strides = [1, 1]} : vector<32x2xf32> to vector<32x1xf32>
    %11 = vector.extract_strided_slice %1 {offsets = [1, 0], sizes = [1, 512], strides = [1, 1]} : vector<2x512xf32> to vector<1x512xf32>
    %12 = vector.broadcast %10 : vector<32x1xf32> to vector<32x512xf32>
    %13 = vector.broadcast %11 : vector<1x512xf32> to vector<32x512xf32>
    %14 = arith.mulf %12, %13 : vector<32x512xf32>
    %15 = arith.addf %9, %14 : vector<32x512xf32>
    %16 = vector.broadcast %3 : vector<32x1xf32> to vector<32x512xf32>
    %17 = arith.addf %15, %16 : vector<32x512xf32>
    %cst = arith.constant 0.000000e+00 : f32
    %18 = vector.broadcast %cst : f32 to vector<32x512xf32>
    %19 = arith.maximumf %17, %18 : vector<32x512xf32>
    %c0_7 = arith.constant 0 : index
    %c0_8 = arith.constant 0 : index
    %20 = vector.load %arg5[%c0_7, %c0_8] : memref<32x32xf32, #tpu.memory_space<vmem>>, vector<32x32xf32>
    %cst_9 = arith.constant dense<0.000000e+00> : vector<32x512xf32>
    %21 = tpu.matmul %20, %19, %cst_9 {dimension_numbers = #tpu.dot_dimension_numbers<[1], [0], [0], [1], [0, 0, 1, 1], [], []>, precision = #tpu.contract_precision<fp32>} : vector<32x32xf32>, vector<32x512xf32>, vector<32x512xf32> -> vector<32x512xf32>
    %c0_10 = arith.constant 0 : index
    %c0_11 = arith.constant 0 : index
    %c0_12 = arith.constant 0 : index
    %22 = vector.load %arg8[%c0_10, %c0_11, %c0_12] : memref<3x32x1xf32, #tpu.memory_space<vmem>>, vector<1x32x1xf32>
    %23 = vector.shape_cast %22 : vector<1x32x1xf32> to vector<32x1xf32>
    %24 = vector.broadcast %23 : vector<32x1xf32> to vector<32x512xf32>
    %25 = arith.addf %21, %24 : vector<32x512xf32>
    %cst_13 = arith.constant 0.000000e+00 : f32
    %26 = vector.broadcast %cst_13 : f32 to vector<32x512xf32>
    %27 = arith.maximumf %25, %26 : vector<32x512xf32>
    %c0_14 = arith.constant 0 : index
    %c0_15 = arith.constant 0 : index
    %c0_16 = arith.constant 0 : index
    %28 = vector.load %arg6[%c0_14, %c0_15, %c0_16] : memref<2x32x32xf32, #tpu.memory_space<vmem>>, vector<1x32x32xf32>
    %29 = vector.shape_cast %28 : vector<1x32x32xf32> to vector<32x32xf32>
    %cst_17 = arith.constant dense<0.000000e+00> : vector<32x512xf32>
    %30 = tpu.matmul %29, %27, %cst_17 {dimension_numbers = #tpu.dot_dimension_numbers<[1], [0], [0], [1], [0, 0, 1, 1], [], []>, precision = #tpu.contract_precision<fp32>} : vector<32x32xf32>, vector<32x512xf32>, vector<32x512xf32> -> vector<32x512xf32>
    %c1 = arith.constant 1 : index
    %c0_18 = arith.constant 0 : index
    %c0_19 = arith.constant 0 : index
    %31 = vector.load %arg8[%c1, %c0_18, %c0_19] : memref<3x32x1xf32, #tpu.memory_space<vmem>>, vector<1x32x1xf32>
    %32 = vector.shape_cast %31 : vector<1x32x1xf32> to vector<32x1xf32>
    %33 = vector.broadcast %32 : vector<32x1xf32> to vector<32x512xf32>
    %34 = arith.addf %30, %33 : vector<32x512xf32>
    %cst_20 = arith.constant 0.000000e+00 : f32
    %35 = vector.broadcast %cst_20 : f32 to vector<32x512xf32>
    %36 = arith.maximumf %34, %35 : vector<32x512xf32>
    %c1_21 = arith.constant 1 : index
    %c0_22 = arith.constant 0 : index
    %c0_23 = arith.constant 0 : index
    %37 = vector.load %arg6[%c1_21, %c0_22, %c0_23] : memref<2x32x32xf32, #tpu.memory_space<vmem>>, vector<1x32x32xf32>
    %38 = vector.shape_cast %37 : vector<1x32x32xf32> to vector<32x32xf32>
    %cst_24 = arith.constant dense<0.000000e+00> : vector<32x512xf32>
    %39 = tpu.matmul %38, %36, %cst_24 {dimension_numbers = #tpu.dot_dimension_numbers<[1], [0], [0], [1], [0, 0, 1, 1], [], []>, precision = #tpu.contract_precision<fp32>} : vector<32x32xf32>, vector<32x512xf32>, vector<32x512xf32> -> vector<32x512xf32>
    %c2 = arith.constant 2 : index
    %c0_25 = arith.constant 0 : index
    %c0_26 = arith.constant 0 : index
    %40 = vector.load %arg8[%c2, %c0_25, %c0_26] : memref<3x32x1xf32, #tpu.memory_space<vmem>>, vector<1x32x1xf32>
    %41 = vector.shape_cast %40 : vector<1x32x1xf32> to vector<32x1xf32>
    %42 = vector.broadcast %41 : vector<32x1xf32> to vector<32x512xf32>
    %43 = arith.addf %39, %42 : vector<32x512xf32>
    %cst_27 = arith.constant 0.000000e+00 : f32
    %44 = vector.broadcast %cst_27 : f32 to vector<32x512xf32>
    %45 = arith.maximumf %43, %44 : vector<32x512xf32>
    %c0_28 = arith.constant 0 : index
    %c0_29 = arith.constant 0 : index
    %46 = vector.load %arg7[%c0_28, %c0_29] : memref<3x32xf32, #tpu.memory_space<vmem>>, vector<3x32xf32>
    %cst_30 = arith.constant dense<0.000000e+00> : vector<3x512xf32>
    %47 = tpu.matmul %46, %45, %cst_30 {dimension_numbers = #tpu.dot_dimension_numbers<[1], [0], [0], [1], [0, 0, 1, 1], [], []>, precision = #tpu.contract_precision<fp32>} : vector<3x32xf32>, vector<32x512xf32>, vector<3x512xf32> -> vector<3x512xf32>
    %c0_31 = arith.constant 0 : index
    %c0_32 = arith.constant 0 : index
    %48 = vector.load %arg9[%c0_31, %c0_32] : memref<3x1xf32, #tpu.memory_space<vmem>>, vector<3x1xf32>
    %49 = vector.broadcast %48 : vector<3x1xf32> to vector<3x512xf32>
    %50 = arith.addf %47, %49 : vector<3x512xf32>
    %c0_33 = arith.constant 0 : index
    %c0_34 = arith.constant 0 : index
    %c0_35 = arith.constant 0 : index
    %51 = vector.load %arg10[%c0_33, %c0_34, %c0_35] : memref<1x3x512xf32, #tpu.memory_space<vmem>>, vector<1x3x512xf32>
    %52 = vector.shape_cast %51 : vector<1x3x512xf32> to vector<3x512xf32>
    %53 = vector.shape_cast %50 : vector<3x512xf32> to vector<1x3x512xf32>
    tpu.vector_store %arg10[%c0_33, %c0_34, %c0_35], %53 {strides = array<i32>} : memref<1x3x512xf32, #tpu.memory_space<vmem>>, vector<1x3x512xf32>,
    return
  }
  func.func @transform_0(%arg0: i32, %arg1: i32) -> (i32, i32, i32) {
    %c0_i32 = arith.constant 0 : i32
    %c0_i32_0 = arith.constant 0 : i32
    return %arg0, %c0_i32, %arg1 : i32, i32, i32
  }
  func.func @transform_1(%arg0: i32, %arg1: i32) -> (i32, i32, i32) {
    %c0_i32 = arith.constant 0 : i32
    %c0_i32_0 = arith.constant 0 : i32
    %c0_i32_1 = arith.constant 0 : i32
    return %arg0, %c0_i32, %c0_i32_0 : i32, i32, i32
  }
  func.func @transform_2(%arg0: i32, %arg1: i32) -> (i32, i32) {
    %c0_i32 = arith.constant 0 : i32
    %c0_i32_0 = arith.constant 0 : i32
    %c0_i32_1 = arith.constant 0 : i32
    return %c0_i32, %c0_i32_0 : i32, i32
  }
  func.func @transform_3(%arg0: i32, %arg1: i32) -> (i32, i32) {
    %c0_i32 = arith.constant 0 : i32
    %c0_i32_0 = arith.constant 0 : i32
    %c0_i32_1 = arith.constant 0 : i32
    return %c0_i32, %c0_i32_0 : i32, i32
  }
  func.func @transform_4(%arg0: i32, %arg1: i32) -> (i32, i32, i32) {
    %c0_i32 = arith.constant 0 : i32
    %c0_i32_0 = arith.constant 0 : i32
    %c0_i32_1 = arith.constant 0 : i32
    %c0_i32_2 = arith.constant 0 : i32
    return %c0_i32, %c0_i32_0, %c0_i32_1 : i32, i32, i32
  }
  func.func @transform_5(%arg0: i32, %arg1: i32) -> (i32, i32) {
    %c0_i32 = arith.constant 0 : i32
    %c0_i32_0 = arith.constant 0 : i32
    %c0_i32_1 = arith.constant 0 : i32
    return %c0_i32, %c0_i32_0 : i32, i32
  }
  func.func @transform_6(%arg0: i32, %arg1: i32) -> (i32, i32, i32) {
    %c0_i32 = arith.constant 0 : i32
    %c0_i32_0 = arith.constant 0 : i32
    %c0_i32_1 = arith.constant 0 : i32
    %c0_i32_2 = arith.constant 0 : i32
    return %c0_i32, %c0_i32_0, %c0_i32_1 : i32, i32, i32
  }
  func.func @transform_7(%arg0: i32, %arg1: i32) -> (i32, i32) {
    %c0_i32 = arith.constant 0 : i32
    %c0_i32_0 = arith.constant 0 : i32
    %c0_i32_1 = arith.constant 0 : i32
    return %c0_i32, %c0_i32_0 : i32, i32
  }
  func.func @transform_8(%arg0: i32, %arg1: i32) -> (i32, i32, i32) {
    %c0_i32 = arith.constant 0 : i32
    %c0_i32_0 = arith.constant 0 : i32
    return %arg0, %c0_i32, %arg1 : i32, i32, i32
  }
}

</mosaic_0001>

<llo_original>
// kernel: tpu_custom_call.1
$region0: #{tpu_custom_call.1}
  #allocation0 [shape = 'u32[]', space=smem, size = 0x4, offset = 0x4, fixed_abs, tag = 'smem constant byte address 0x4 - core index']
  #allocation1 [shape = 'u32[144,128]{1,0:T(1,128)}', space=vmem, size = 0x12000, scoped, tag = 'internal scratch']
  %s0 = inlined_call_operand.vmem [shape: f32[2,2,1024], index: 0, kind: input, shape index: {}]
  %s1 = inlined_call_operand.vmem [shape: f32[2,32,1], index: 1, kind: input, shape index: {}]
  %s2 = inlined_call_operand.vmem [shape: f32[32,2], index: 2, kind: input, shape index: {}]
  %s3 = inlined_call_operand.vmem [shape: f32[32,32], index: 3, kind: input, shape index: {}]
  %s4 = inlined_call_operand.vmem [shape: f32[2,32,32], index: 4, kind: input, shape index: {}]
  %s5 = inlined_call_operand.vmem [shape: f32[3,32], index: 5, kind: input, shape index: {}]
  %s6 = inlined_call_operand.vmem [shape: f32[3,32,1], index: 6, kind: input, shape index: {}]
  %s7 = inlined_call_operand.vmem [shape: f32[3,1], index: 7, kind: input, shape index: {}]
  %s8 = inlined_call_operand.vmem [shape: f32[2,3,1024], index: 8, kind: output, shape index: {}]
  %s9 = sld [smem:[#allocation0]]
  $region65: #{tpu_custom_call.1} parent=0
    _
  %s11 = ssub.s32 1, %s9
  %s12 = scalar_select 0, %s11, %s9
  loop: start=0, step=1, limit=6
  $region2: #{tpu_custom_call.1} parent=0 // loop_pre_header
    _
  $region3: #{tpu_custom_call.1} parent=0 // loop_header
    %s14 = sphi 0, %s18
    %p15 = scmp.ge.s32.totalorder %s14, 6
    %s21 = sphi 0, %s33
    %s22 = sphi 0, %s29
    %s23 = sphi 0, %s21
    %s24 = sphi 0, %s22
    %s25 = sphi 0, %s23
    %s26 = sphi 0, %s24
    %s38 = sphi 0, %s40
    %s41 = sphi 0, %s38
    %s42 = sphi 0, %s41
    %s58 = sphi 0, %s42
    %s64 = sphi 0, %s66
    %s67 = sphi 0, %s64
    %s68 = sphi 0, %s67
    %s84 = sphi 0, %s68
    %s88 = sphi 0, %s88
    %s90 = sphi 0, %s88
    %s91 = sphi 0, %s90
    %s105 = sphi 0, %s91
    %s109 = sphi 0, %s109
    %s111 = sphi 0, %s109
    %s112 = sphi 0, %s111
    %s126 = sphi 0, %s112
    %s130 = sphi 0, %s130
    %s132 = sphi 0, %s130
    %s133 = sphi 0, %s132
    %s147 = sphi 0, %s133
    %s151 = sphi 0, %s151
    %s153 = sphi 0, %s151
    %s154 = sphi 0, %s153
    %s168 = sphi 0, %s154
    %s172 = sphi 0, %s172
    %s174 = sphi 0, %s172
    %s175 = sphi 0, %s174
    %s189 = sphi 0, %s175
    %s193 = sphi 0, %s193
    %s195 = sphi 0, %s193
    %s196 = sphi 0, %s195
    %s210 = sphi 0, %s196
    %s218 = sphi 0, %s220
    %s221 = sphi 0, %s218
    %s222 = sphi 0, %s221
    %s238 = sphi 0, %s222
  $region4: #{tpu_custom_call.1} parent=0 // loop_header_branch
    %17 = sbr.rel (%p15) target = $region8
  $region5: #{tpu_custom_call.1} parent=0 // loop_body
    %s19 = ssub.s32 %s14, 1
    %s20 = ssub.s32 %s14, 2
    %s27 = sadd.s32 1, %s22
    %p28 = scmp.ge.s32.totalorder %s27, 2
    %s29 = scalar_select %p28, 0, %s27
    %s30 = sadd.s32 1, %s21
    %s31 = scalar_select %p28, %s30, %s21
    %p32 = scmp.ge.s32.totalorder %s31, 2
    %s33 = scalar_select %p32, 0, %s31
    %s34 = ssub.s32 %s21, %s33
    %s35 = ssub.s32 %s22, %s29
    %s36 = sor.u32 %s34, %s35
    %p37 = scmp.eq.s32.totalorder %s36, 0
    %s39 = sadd.s32 %s38, 1
    %s40 = scalar_select %p37, %s38, %s39
    %p43 = pneg %p37
    %p44 = scmp.eq.s32.totalorder %s14, 3
    %p45 = por %p43, %p44
    %p46 = scmp.ne.s32.totalorder %s38, %s41
    %p47 = scmp.eq.s32.totalorder %s14, 0
    %p48 = por %p46, %p47
    %p49 = scmp.ne.s32.totalorder %s38, %s41
    %p50 = scmp.eq.s32.totalorder %s19, 3
    %p51 = por %p49, %p50
    %p52 = scmp.ne.s32.totalorder %s41, %s42
    %p53 = scmp.eq.s32.totalorder %s19, 0
    %p54 = por %p52, %p53
    %p55 = scmp.ne.s32.totalorder %s41, %s42
    %p56 = scmp.eq.s32.totalorder %s20, 3
    %p57 = por %p55, %p56
    %p59 = scmp.ne.s32.totalorder %s42, %s58
    %p60 = scmp.eq.s32.totalorder %s20, 0
    %p61 = por %p59, %p60
    %s62 = ssub.s32 %s21, %s33
    %p63 = scmp.eq.s32.totalorder %s62, 0
    %s65 = sadd.s32 %s64, 1
    %s66 = scalar_select %p63, %s64, %s65
    %p69 = pneg %p63
    %p70 = scmp.eq.s32.totalorder %s14, 3
    %p71 = por %p69, %p70
    %p72 = scmp.ne.s32.totalorder %s64, %s67
    %p73 = scmp.eq.s32.totalorder %s14, 0
    %p74 = por %p72, %p73
    %p75 = scmp.ne.s32.totalorder %s64, %s67
    %p76 = scmp.eq.s32.totalorder %s19, 3
    %p77 = por %p75, %p76
    %p78 = scmp.ne.s32.totalorder %s67, %s68
    %p79 = scmp.eq.s32.totalorder %s19, 0
    %p80 = por %p78, %p79
    %p81 = scmp.ne.s32.totalorder %s67, %s68
    %p82 = scmp.eq.s32.totalorder %s20, 3
    %p83 = por %p81, %p82
    %p85 = scmp.ne.s32.totalorder %s68, %s84
    %p86 = scmp.eq.s32.totalorder %s20, 0
    %p87 = por %p85, %p86
    %s89 = sadd.s32 %s88, 1
    %p92 = scmp.eq.s32.totalorder %s14, 3
    %p93 = scmp.ne.s32.totalorder %s88, %s90
    %p94 = scmp.eq.s32.totalorder %s14, 0
    %p95 = por %p93, %p94
    %p96 = scmp.ne.s32.totalorder %s88, %s90
    %p97 = scmp.eq.s32.totalorder %s19, 3
    %p98 = por %p96, %p97
    %p99 = scmp.ne.s32.totalorder %s90, %s91
    %p100 = scmp.eq.s32.totalorder %s19, 0
    %p101 = por %p99, %p100
    %p102 = scmp.ne.s32.totalorder %s90, %s91
    %p103 = scmp.eq.s32.totalorder %s20, 3
    %p104 = por %p102, %p103
    %p106 = scmp.ne.s32.totalorder %s91, %s105
    %p107 = scmp.eq.s32.totalorder %s20, 0
    %p108 = por %p106, %p107
    %s110 = sadd.s32 %s109, 1
    %p113 = scmp.eq.s32.totalorder %s14, 3
    %p114 = scmp.ne.s32.totalorder %s109, %s111
    %p115 = scmp.eq.s32.totalorder %s14, 0
    %p116 = por %p114, %p115
    %p117 = scmp.ne.s32.totalorder %s109, %s111
    %p118 = scmp.eq.s32.totalorder %s19, 3
    %p119 = por %p117, %p118
    %p120 = scmp.ne.s32.totalorder %s111, %s112
    %p121 = scmp.eq.s32.totalorder %s19, 0
    %p122 = por %p120, %p121
    %p123 = scmp.ne.s32.totalorder %s111, %s112
    %p124 = scmp.eq.s32.totalorder %s20, 3
    %p125 = por %p123, %p124
    %p127 = scmp.ne.s32.totalorder %s112, %s126
    %p128 = scmp.eq.s32.totalorder %s20, 0
    %p129 = por %p127, %p128
    %s131 = sadd.s32 %s130, 1
    %p134 = scmp.eq.s32.totalorder %s14, 3
    %p135 = scmp.ne.s32.totalorder %s130, %s132
    %p136 = scmp.eq.s32.totalorder %s14, 0
    %p137 = por %p135, %p136
    %p138 = scmp.ne.s32.totalorder %s130, %s132
    %p139 = scmp.eq.s32.totalorder %s19, 3
    %p140 = por %p138, %p139
    %p141 = scmp.ne.s32.totalorder %s132, %s133
    %p142 = scmp.eq.s32.totalorder %s19, 0
    %p143 = por %p141, %p142
    %p144 = scmp.ne.s32.totalorder %s132, %s133
    %p145 = scmp.eq.s32.totalorder %s20, 3
    %p146 = por %p144, %p145
    %p148 = scmp.ne.s32.totalorder %s133, %s147
    %p149 = scmp.eq.s32.totalorder %s20, 0
    %p150 = por %p148, %p149
    %s152 = sadd.s32 %s151, 1
    %p155 = scmp.eq.s32.totalorder %s14, 3
    %p156 = scmp.ne.s32.totalorder %s151, %s153
    %p157 = scmp.eq.s32.totalorder %s14, 0
    %p158 = por %p156, %p157
    %p159 = scmp.ne.s32.totalorder %s151, %s153
    %p160 = scmp.eq.s32.totalorder %s19, 3
    %p161 = por %p159, %p160
    %p162 = scmp.ne.s32.totalorder %s153, %s154
    %p163 = scmp.eq.s32.totalorder %s19, 0
    %p164 = por %p162, %p163
    %p165 = scmp.ne.s32.totalorder %s153, %s154
    %p166 = scmp.eq.s32.totalorder %s20, 3
    %p167 = por %p165, %p166
    %p169 = scmp.ne.s32.totalorder %s154, %s168
    %p170 = scmp.eq.s32.totalorder %s20, 0
    %p171 = por %p169, %p170
    %s173 = sadd.s32 %s172, 1
    %p176 = scmp.eq.s32.totalorder %s14, 3
    %p177 = scmp.ne.s32.totalorder %s172, %s174
    %p178 = scmp.eq.s32.totalorder %s14, 0
    %p179 = por %p177, %p178
    %p180 = scmp.ne.s32.totalorder %s172, %s174
    %p181 = scmp.eq.s32.totalorder %s19, 3
    %p182 = por %p180, %p181
    %p183 = scmp.ne.s32.totalorder %s174, %s175
    %p184 = scmp.eq.s32.totalorder %s19, 0
    %p185 = por %p183, %p184
    %p186 = scmp.ne.s32.totalorder %s174, %s175
    %p187 = scmp.eq.s32.totalorder %s20, 3
    %p188 = por %p186, %p187
    %p190 = scmp.ne.s32.totalorder %s175, %s189
    %p191 = scmp.eq.s32.totalorder %s20, 0
    %p192 = por %p190, %p191
    %s194 = sadd.s32 %s193, 1
    %p197 = scmp.eq.s32.totalorder %s14, 3
    %p198 = scmp.ne.s32.totalorder %s193, %s195
    %p199 = scmp.eq.s32.totalorder %s14, 0
    %p200 = por %p198, %p199
    %p201 = scmp.ne.s32.totalorder %s193, %s195
    %p202 = scmp.eq.s32.totalorder %s19, 3
    %p203 = por %p201, %p202
    %p204 = scmp.ne.s32.totalorder %s195, %s196
    %p205 = scmp.eq.s32.totalorder %s19, 0
    %p206 = por %p204, %p205
    %p207 = scmp.ne.s32.totalorder %s195, %s196
    %p208 = scmp.eq.s32.totalorder %s20, 3
    %p209 = por %p207, %p208
    %p211 = scmp.ne.s32.totalorder %s196, %s210
    %p212 = scmp.eq.s32.totalorder %s20, 0
    %p213 = por %p211, %p212
    %s214 = ssub.s32 %s21, %s33
    %s215 = ssub.s32 %s22, %s29
    %s216 = sor.u32 %s214, %s215
    %p217 = scmp.eq.s32.totalorder %s216, 0
    %s219 = sadd.s32 %s218, 1
    %s220 = scalar_select %p217, %s218, %s219
    %p223 = pneg %p217
    %p224 = scmp.eq.s32.totalorder %s14, 3
    %p225 = por %p223, %p224
    %p226 = scmp.ne.s32.totalorder %s218, %s221
    %p227 = scmp.eq.s32.totalorder %s14, 0
    %p228 = por %p226, %p227
    %p229 = scmp.ne.s32.totalorder %s218, %s221
    %p230 = scmp.eq.s32.totalorder %s19, 3
    %p231 = por %p229, %p230
    %p232 = scmp.ne.s32.totalorder %s221, %s222
    %p233 = scmp.eq.s32.totalorder %s19, 0
    %p234 = por %p232, %p233
    %p235 = scmp.ne.s32.totalorder %s221, %s222
    %p236 = scmp.eq.s32.totalorder %s20, 3
    %p237 = por %p235, %p236
    %p239 = scmp.ne.s32.totalorder %s222, %s238
    %p240 = scmp.eq.s32.totalorder %s20, 0
    %p241 = por %p239, %p240
    %p242 = scmp.le.s32.totalorder 1, %s14
    %p243 = scmp.lt.s32.totalorder %s14, 5
    %p244 = pnand %p242, %p243
    %p245 = pneg %p244
    // Predicated region
    $region9: #{tpu_custom_call.1} parent=5 // pred_check
      _
    $region10: #{tpu_custom_call.1} parent=5 // pred_check_branch
      %247 = sbr.rel (%p244) target = $region12
    $region11: #{tpu_custom_call.1} parent=5 // pred_region
      %s248 = ssub.s32 %s14, 1
      // Predicated region
      $region13: #{tpu_custom_call.1} parent=11 // pred_check
        %p249 = pneg %p101
      $region14: #{tpu_custom_call.1} parent=11 // pred_check_branch
        %251 = sbr.rel (%p249) target = $region16
      $region15: #{tpu_custom_call.1} parent=11 // pred_region
        _
      $region16: #{tpu_custom_call.1} parent=11 // pred_fallthru
        _
      // Predicated region
      $region17: #{tpu_custom_call.1} parent=11 // pred_check
        %p252 = pneg %p122
      $region18: #{tpu_custom_call.1} parent=11 // pred_check_branch
        %254 = sbr.rel (%p252) target = $region20
      $region19: #{tpu_custom_call.1} parent=11 // pred_region
        _
      $region20: #{tpu_custom_call.1} parent=11 // pred_fallthru
        _
      // Predicated region
      $region21: #{tpu_custom_call.1} parent=11 // pred_check
        %p255 = pneg %p143
      $region22: #{tpu_custom_call.1} parent=11 // pred_check_branch
        %257 = sbr.rel (%p255) target = $region24
      $region23: #{tpu_custom_call.1} parent=11 // pred_region
        _
      $region24: #{tpu_custom_call.1} parent=11 // pred_fallthru
        _
      // Predicated region
      $region25: #{tpu_custom_call.1} parent=11 // pred_check
        %p258 = pneg %p164
      $region26: #{tpu_custom_call.1} parent=11 // pred_check_branch
        %260 = sbr.rel (%p258) target = $region28
      $region27: #{tpu_custom_call.1} parent=11 // pred_region
        _
      $region28: #{tpu_custom_call.1} parent=11 // pred_fallthru
        _
      // Predicated region
      $region29: #{tpu_custom_call.1} parent=11 // pred_check
        %p261 = pneg %p185
      $region30: #{tpu_custom_call.1} parent=11 // pred_check_branch
        %263 = sbr.rel (%p261) target = $region32
      $region31: #{tpu_custom_call.1} parent=11 // pred_region
        _
      $region32: #{tpu_custom_call.1} parent=11 // pred_fallthru
        _
      // Predicated region
      $region33: #{tpu_custom_call.1} parent=11 // pred_check
        %p264 = pneg %p206
      $region34: #{tpu_custom_call.1} parent=11 // pred_check_branch
        %266 = sbr.rel (%p264) target = $region36
      $region35: #{tpu_custom_call.1} parent=11 // pred_region
        _
      $region36: #{tpu_custom_call.1} parent=11 // pred_fallthru
        _
    $region12: #{tpu_custom_call.1} parent=5 // pred_fallthru
      _
    %p267 = scmp.lt.s32.totalorder %s14, 4
    // Predicated region
    $region37: #{tpu_custom_call.1} parent=5 // pred_check
      %p268 = pneg %p267
    $region38: #{tpu_custom_call.1} parent=5 // pred_check_branch
      %270 = sbr.rel (%p268) target = $region40
    $region39: #{tpu_custom_call.1} parent=5 // pred_region
      // Predicated region
      $region41: #{tpu_custom_call.1} parent=39 // pred_check
        %p271 = pneg %p48
      $region42: #{tpu_custom_call.1} parent=39 // pred_check_branch
        %273 = sbr.rel (%p271) target = $region44
      $region43: #{tpu_custom_call.1} parent=39 // pred_region
        %s274 = smul.u32 4, %s22
        %p275 = scmp.lt.s32.totalorder %s21, 1
        %s276 = scalar_select %p275, %s21, 1
        %p277 = scmp.lt.s32.totalorder %s274, 7
        %s278 = scalar_select %p277, %s274, 7
        %s279 = smul.addr %s276, 8
        %s280 = sadd.s32 %s278, %s279
        %s281 = smul.addr %s280, 2
        %s282 = scalar_lea.vmem %s0, %s281
        %s283 = smul.u32 4, %s22
      $region44: #{tpu_custom_call.1} parent=39 // pred_fallthru
        _
      // Predicated region
      $region45: #{tpu_custom_call.1} parent=39 // pred_check
        %p284 = pneg %p74
      $region46: #{tpu_custom_call.1} parent=39 // pred_check_branch
        %286 = sbr.rel (%p284) target = $region48
      $region47: #{tpu_custom_call.1} parent=39 // pred_region
        %p287 = scmp.lt.s32.totalorder %s21, 1
        %s288 = scalar_select %p287, %s21, 1
        %s289 = smul.addr %s288, 4
        %s290 = smul.addr %s289, 8
        %s291 = scalar_lea.vmem %s1, %s290
      $region48: #{tpu_custom_call.1} parent=39 // pred_fallthru
        _
    $region40: #{tpu_custom_call.1} parent=5 // pred_fallthru
      _
    %p292 = scmp.le.s32.totalorder 1, %s14
    %p293 = scmp.lt.s32.totalorder %s14, 5
    %p294 = pnand %p292, %p293
    %p295 = pneg %p294
    // Predicated region
    $region49: #{tpu_custom_call.1} parent=5 // pred_check
      _
    $region50: #{tpu_custom_call.1} parent=5 // pred_check_branch
      %297 = sbr.rel (%p294) target = $region52
    $region51: #{tpu_custom_call.1} parent=5 // pred_region
      %s298 = ssub.s32 %s14, 1
      %s299 = smul.u32 4, %s24
      %p300 = scmp.lt.s32.totalorder %s23, 1
      %s301 = scalar_select %p300, %s23, 1
      %p302 = scmp.lt.s32.totalorder %s299, 7
      %s303 = scalar_select %p302, %s299, 7
      %s304 = smul.addr %s301, 8
      %s305 = sadd.s32 %s303, %s304
      %s306 = smul.addr %s305, 2
      %s307 = scalar_lea.vmem %s0, %s306
      %p308 = pneg %p54
      %p309 = pneg %p51
      %p310 = scmp.lt.s32.totalorder %s23, 1
      %s311 = scalar_select %p310, %s23, 1
      %s312 = smul.addr %s311, 4
      %s313 = smul.addr %s312, 8
      %s314 = scalar_lea.vmem %s1, %s313
      %p315 = pneg %p80
      %p316 = pneg %p77
      %p317 = pneg %p101
      %p318 = pneg %p98
      %p319 = pneg %p122
      %p320 = pneg %p119
      %p321 = pneg %p143
      %p322 = pneg %p140
      %p323 = pneg %p164
      %p324 = pneg %p161
      %p325 = pneg %p185
      %p326 = pneg %p182
      %p327 = pneg %p206
      %p328 = pneg %p203
      %p329 = pneg %p234
      %p330 = pneg %p231
      %s331 = smul.u32 4, %s24
      %p332 = scmp.lt.s32.totalorder %s23, 1
      %s333 = scalar_select %p332, %s23, 1
      %p334 = scmp.lt.s32.totalorder %s331, 7
      %s335 = scalar_select %p334, %s331, 7
      %s336 = smul.addr %s333, 8
      %s337 = sadd.s32 %s335, %s336
      %s338 = smul.addr %s337, 4
      %s339 = scalar_lea.vmem %s8, %s338
      %s340 = smul.u32 4, %s24
      %p341 = scmp.lt.s32.totalorder %s23, 1
      %s342 = scalar_select %p341, %s23, 1
      %p343 = scmp.lt.s32.totalorder %s340, 7
      %s344 = scalar_select %p343, %s340, 7
      %s345 = smul.addr %s342, 8
      %s346 = sadd.s32 %s344, %s345
      %s347 = smul.addr %s346, 2
      %s348 = scalar_lea.vmem %s0, %s347
      %s349 = smul.u32 4, %s24
      %p350 = scmp.lt.s32.totalorder %s23, 1
      %s351 = scalar_select %p350, %s23, 1
      %s352 = smul.addr %s351, 4
      %s353 = smul.addr %s352, 8
      %s354 = scalar_lea.vmem %s1, %s353
      %s355 = smul.u32 4, %s24
      %p356 = scmp.lt.s32.totalorder %s23, 1
      %s357 = scalar_select %p356, %s23, 1
      %p358 = scmp.lt.s32.totalorder %s355, 7
      %s359 = scalar_select %p358, %s355, 7
      %s360 = smul.addr %s357, 8
      %s361 = sadd.s32 %s359, %s360
      %s362 = smul.addr %s361, 4
      %s363 = scalar_lea.vmem %s8, %s362
      %s364 = smul.u32 4, %s24
      %v365 = vld [vmem:[%s348] sm:$0xff]
      %v366 = vld [vmem:[%s354] sm:$0xff]
      %v367 = vld [vmem:[%s354 + $0x8] sm:$0xff]
      %v368 = vld [vmem:[%s354 + $0x10] sm:$0xff]
      %v369 = vld [vmem:[%s354 + $0x18] sm:$0xff]
      %v370 = vld [vmem:[%s2] sm:$0xff]
      %v371 = vld [vmem:[%s2 + $0x8] sm:$0xff]
      %v372 = vld [vmem:[%s2 + $0x10] sm:$0xff]
      %v373 = vld [vmem:[%s2 + $0x18] sm:$0xff]
      %375 = vset.pattern.permute.xlu0 0
      %376 = vperm.xlu0 %375, %v370
      %v377 = vpop.permute.xlu0 %376
      %380 = vset.pattern.permute.xlu0 0
      %381 = vperm.xlu0 %380, %v371
      %v382 = vpop.permute.xlu0 %381
      %385 = vset.pattern.permute.xlu0 0
      %386 = vperm.xlu0 %385, %v372
      %v387 = vpop.permute.xlu0 %386
      %390 = vset.pattern.permute.xlu0 0
      %391 = vperm.xlu0 %390, %v373
      %v392 = vpop.permute.xlu0 %391
      %v395 = vlaneseq
      %v396 = vshrl.u32 %v395, 7
      %v397 = vsub.s32 0, %v396
      %v398 = vrot.slane %v365, %v397
      %v399 = vlaneseq
      %v400 = vshrl.u32 %v399, 7
      %v401 = vsub.s32 2, %v400
      %v402 = vrot.slane %v365, %v401
      %v403 = vlaneseq
      %v404 = vshrl.u32 %v403, 7
      %v405 = vsub.s32 4, %v404
      %v406 = vrot.slane %v365, %v405
      %v407 = vlaneseq
      %v408 = vshrl.u32 %v407, 7
      %v409 = vsub.s32 6, %v408
      %v410 = vrot.slane %v365, %v409
      %v415 = vlaneseq
      %v416 = vshrl.u32 %v415, 7
      %v417 = vsub.s32 0, %v416
      %v418 = vrot.slane %v398, %v417
      %v419 = vlaneseq
      %v420 = vshrl.u32 %v419, 7
      %v421 = vsub.s32 0, %v420
      %v422 = vrot.slane %v402, %v421
      %v423 = vlaneseq
      %v424 = vshrl.u32 %v423, 7
      %v425 = vsub.s32 0, %v424
      %v426 = vrot.slane %v406, %v425
      %v427 = vlaneseq
      %v428 = vshrl.u32 %v427, 7
      %v429 = vsub.s32 0, %v428
      %v430 = vrot.slane %v410, %v429
      %v431 = vmul.f32 %v377, %v418
      %v432 = vmul.f32 %v377, %v422
      %v433 = vmul.f32 %v377, %v426
      %v434 = vmul.f32 %v377, %v430
      %v435 = vmul.f32 %v382, %v418
      %v436 = vmul.f32 %v382, %v422
      %v437 = vmul.f32 %v382, %v426
      %v438 = vmul.f32 %v382, %v430
      %v439 = vmul.f32 %v387, %v418
      %v440 = vmul.f32 %v387, %v422
      %v441 = vmul.f32 %v387, %v426
      %v442 = vmul.f32 %v387, %v430
      %v443 = vmul.f32 %v392, %v418
      %v444 = vmul.f32 %v392, %v422
      %v445 = vmul.f32 %v392, %v426
      %v446 = vmul.f32 %v392, %v430
      %447 = vset.pattern.permute.xlu0 1
      %448 = vperm.xlu0 %447, %v370
      %v449 = vpop.permute.xlu0 %448
      %451 = vset.pattern.permute.xlu0 1
      %452 = vperm.xlu0 %451, %v371
      %v453 = vpop.permute.xlu0 %452
      %455 = vset.pattern.permute.xlu0 1
      %456 = vperm.xlu0 %455, %v372
      %v457 = vpop.permute.xlu0 %456
      %459 = vset.pattern.permute.xlu0 1
      %460 = vperm.xlu0 %459, %v373
      %v461 = vpop.permute.xlu0 %460
      %v463 = vlaneseq
      %v464 = vshrl.u32 %v463, 7
      %v465 = vsub.s32 1, %v464
      %v466 = vrot.slane %v365, %v465
      %v467 = vlaneseq
      %v468 = vshrl.u32 %v467, 7
      %v469 = vsub.s32 3, %v468
      %v470 = vrot.slane %v365, %v469
      %v471 = vlaneseq
      %v472 = vshrl.u32 %v471, 7
      %v473 = vsub.s32 5, %v472
      %v474 = vrot.slane %v365, %v473
      %v475 = vlaneseq
      %v476 = vshrl.u32 %v475, 7
      %v477 = vsub.s32 7, %v476
      %v478 = vrot.slane %v365, %v477
      %v483 = vlaneseq
      %v484 = vshrl.u32 %v483, 7
      %v485 = vsub.s32 1, %v484
      %v486 = vrot.slane %v466, %v485
      %v487 = vlaneseq
      %v488 = vshrl.u32 %v487, 7
      %v489 = vsub.s32 1, %v488
      %v490 = vrot.slane %v470, %v489
      %v491 = vlaneseq
      %v492 = vshrl.u32 %v491, 7
      %v493 = vsub.s32 1, %v492
      %v494 = vrot.slane %v474, %v493
      %v495 = vlaneseq
      %v496 = vshrl.u32 %v495, 7
      %v497 = vsub.s32 1, %v496
      %v498 = vrot.slane %v478, %v497
      %v499 = vmul.f32 %v449, %v486
      %v500 = vmul.f32 %v449, %v490
      %v501 = vmul.f32 %v449, %v494
      %v502 = vmul.f32 %v449, %v498
      %v503 = vmul.f32 %v453, %v486
      %v504 = vmul.f32 %v453, %v490
      %v505 = vmul.f32 %v453, %v494
      %v506 = vmul.f32 %v453, %v498
      %v507 = vmul.f32 %v457, %v486
      %v508 = vmul.f32 %v457, %v490
      %v509 = vmul.f32 %v457, %v494
      %v510 = vmul.f32 %v457, %v498
      %v511 = vmul.f32 %v461, %v486
      %v512 = vmul.f32 %v461, %v490
      %v513 = vmul.f32 %v461, %v494
      %v514 = vmul.f32 %v461, %v498
      %v515 = vadd.f32 %v431, %v499
      %v516 = vadd.f32 %v432, %v500
      %v517 = vadd.f32 %v433, %v501
      %v518 = vadd.f32 %v434, %v502
      %v519 = vadd.f32 %v435, %v503
      %v520 = vadd.f32 %v436, %v504
      %v521 = vadd.f32 %v437, %v505
      %v522 = vadd.f32 %v438, %v506
      %v523 = vadd.f32 %v439, %v507
      %v524 = vadd.f32 %v440, %v508
      %v525 = vadd.f32 %v441, %v509
      %v526 = vadd.f32 %v442, %v510
      %v527 = vadd.f32 %v443, %v511
      %v528 = vadd.f32 %v444, %v512
      %v529 = vadd.f32 %v445, %v513
      %v530 = vadd.f32 %v446, %v514
      %532 = vset.pattern.permute.xlu0 0
      %533 = vperm.xlu0 %532, %v366
      %v534 = vpop.permute.xlu0 %533
      %537 = vset.pattern.permute.xlu0 0
      %538 = vperm.xlu0 %537, %v367
      %v539 = vpop.permute.xlu0 %538
      %542 = vset.pattern.permute.xlu0 0
      %543 = vperm.xlu0 %542, %v368
      %v544 = vpop.permute.xlu0 %543
      %547 = vset.pattern.permute.xlu0 0
      %548 = vperm.xlu0 %547, %v369
      %v549 = vpop.permute.xlu0 %548
      %v551 = vadd.f32 %v515, %v534
      %v552 = vadd.f32 %v516, %v534
      %v553 = vadd.f32 %v517, %v534
      %v554 = vadd.f32 %v518, %v534
      %v555 = vadd.f32 %v519, %v539
      %v556 = vadd.f32 %v520, %v539
      %v557 = vadd.f32 %v521, %v539
      %v558 = vadd.f32 %v522, %v539
      %v559 = vadd.f32 %v523, %v544
      %v560 = vadd.f32 %v524, %v544
      %v561 = vadd.f32 %v525, %v544
      %v562 = vadd.f32 %v526, %v544
      %v563 = vadd.f32 %v527, %v549
      %v564 = vadd.f32 %v528, %v549
      %v565 = vadd.f32 %v529, %v549
      %v566 = vadd.f32 %v530, %v549
      %v567 = vmax.f32 %v551, 0.0
      %v568 = vmax.f32 %v552, 0.0
      %v569 = vmax.f32 %v553, 0.0
      %v570 = vmax.f32 %v554, 0.0
      %v571 = vmax.f32 %v555, 0.0
      %v572 = vmax.f32 %v556, 0.0
      %v573 = vmax.f32 %v557, 0.0
      %v574 = vmax.f32 %v558, 0.0
      %v575 = vmax.f32 %v559, 0.0
      %v576 = vmax.f32 %v560, 0.0
      %v577 = vmax.f32 %v561, 0.0
      %v578 = vmax.f32 %v562, 0.0
      %v579 = vmax.f32 %v563, 0.0
      %v580 = vmax.f32 %v564, 0.0
      %v581 = vmax.f32 %v565, 0.0
      %v582 = vmax.f32 %v566, 0.0
      %v583 = vld [vmem:[%s3] sm:$0xff]
      %v584 = vld [vmem:[%s3 + $0x8] sm:$0xff]
      %v585 = vld [vmem:[%s3 + $0x10] sm:$0xff]
      %v586 = vld [vmem:[%s3 + $0x18] sm:$0xff]
      %v587 = vld [vmem:[%s6] sm:$0xff]
      %v588 = vld [vmem:[%s6 + $0x8] sm:$0xff]
      %v589 = vld [vmem:[%s6 + $0x10] sm:$0xff]
      %v590 = vld [vmem:[%s6 + $0x18] sm:$0xff]
      %592 = vset.pattern.permute.xlu0 0
      %593 = vperm.xlu0 %592, %v587
      %v594 = vpop.permute.xlu0 %593
      %597 = vset.pattern.permute.xlu0 0
      %598 = vperm.xlu0 %597, %v588
      %v599 = vpop.permute.xlu0 %598
      %602 = vset.pattern.permute.xlu0 0
      %603 = vperm.xlu0 %602, %v589
      %v604 = vpop.permute.xlu0 %603
      %607 = vset.pattern.permute.xlu0 0
      %608 = vperm.xlu0 %607, %v590
      %v609 = vpop.permute.xlu0 %608
      %vm611 = vcmask 261120
      %v613 = vsel %vm611, %v583, 0
      %v616 = vsel %vm611, %v584, 0
      %v619 = vsel %vm611, %v585, 0
      %v622 = vsel %vm611, %v586, 0
      %624 = vmatprep.subr.mxu0 0.0
      %625 = vmatpush1.msra.mxu0 0.0
      %626 = vmatprep.subr.mxu0 0.0
      %627 = vmatpush1.msra.mxu0 0.0
      %628 = vmatprep.subr.mxu0 0.0
      %629 = vmatpush1.msra.mxu0 0.0
      %630 = vmatprep.subr.mxu0 0.0
      %631 = vmatpush1.msra.mxu0 0.0
      %632 = vmatprep.subr.mxu0 0.0
      %633 = vmatpush1.msra.mxu0 0.0
      %634 = vmatprep.subr.mxu0 0.0
      %635 = vmatpush1.msra.mxu0 0.0
      %636 = vmatprep.subr.mxu0 0.0
      %637 = vmatpush1.msra.mxu0 0.0
      %638 = vmatprep.subr.mxu0 0.0
      %639 = vmatpush1.msra.mxu0 0.0
      %640 = vmatprep.subr.mxu0 0.0
      %641 = vmatpush1.msra.mxu0 0.0
      %642 = vmatprep.subr.mxu0 0.0
      %643 = vmatpush1.msra.mxu0 0.0
      %644 = vmatprep.subr.mxu0 0.0
      %645 = vmatpush1.msra.mxu0 0.0
      %646 = vmatprep.subr.mxu0 0.0
      %647 = vmatpush1.msra.mxu0 0.0
      %v648 = vand.u32 %v580, 4294901760
      %649 = vmatprep.subr.mxu0 %v648
      %v650 = vand.u32 %v579, 4294901760
      %651 = vmatpush1.msra.mxu0 %v650
      %v652 = vand.u32 %v576, 4294901760
      %653 = vmatprep.subr.mxu0 %v652
      %v654 = vand.u32 %v575, 4294901760
      %655 = vmatpush1.msra.mxu0 %v654
      %v656 = vand.u32 %v572, 4294901760
      %657 = vmatprep.subr.mxu0 %v656
      %v658 = vand.u32 %v571, 4294901760
      %659 = vmatpush1.msra.mxu0 %v658
      %v660 = vand.u32 %v568, 4294901760
      %661 = vmatprep.subr.mxu0 %v660
      %v662 = vand.u32 %v567, 4294901760
      %663 = vmatpush1.msra.mxu0 %v662
      %664 = vmatprep.subr.mxu0 0.0
      %665 = vmatpush2.msra.mxu0 0.0
      %666 = vmatprep.subr.mxu0 0.0
      %667 = vmatpush2.msra.mxu0 0.0
      %668 = vmatprep.subr.mxu0 0.0
      %669 = vmatpush2.msra.mxu0 0.0
      %670 = vmatprep.subr.mxu0 0.0
      %671 = vmatpush2.msra.mxu0 0.0
      %672 = vmatprep.subr.mxu0 0.0
      %673 = vmatpush2.msra.mxu0 0.0
      %674 = vmatprep.subr.mxu0 0.0
      %675 = vmatpush2.msra.mxu0 0.0
      %676 = vmatprep.subr.mxu0 0.0
      %677 = vmatpush2.msra.mxu0 0.0
      %678 = vmatprep.subr.mxu0 0.0
      %679 = vmatpush2.msra.mxu0 0.0
      %680 = vmatprep.subr.mxu0 0.0
      %681 = vmatpush2.msra.mxu0 0.0
      %682 = vmatprep.subr.mxu0 0.0
      %683 = vmatpush2.msra.mxu0 0.0
      %684 = vmatprep.subr.mxu0 0.0
      %685 = vmatpush2.msra.mxu0 0.0
      %686 = vmatprep.subr.mxu0 0.0
      %687 = vmatpush2.msra.mxu0 0.0
      %688 = vmatprep.subr.mxu0 0.0
      %689 = vmatpush2.msra.mxu0 0.0
      %690 = vmatprep.subr.mxu0 0.0
      %691 = vmatpush2.msra.mxu0 0.0
      %692 = vmatprep.subr.mxu0 0.0
      %693 = vmatpush2.msra.mxu0 0.0
      %694 = vmatprep.subr.mxu0 0.0
      %695 = vmatpush2.msra.mxu0 0.0
      %696 = vmatprep.mubr.f32.mxu0 0.0
      %v697 = vand.u32 %v613, 4294901760
      %v698 = vsub.f32 %v613, %v697
      %v699 = vand.u32 %v698, 4294901760
      %v700 = vsub.f32 %v698, %v699
      %v701 = vand.u32 %v700, 4294901760
      %702 = vmatmul.mubr.f32.gmra.mxu0 %v701
      %v703 = vpop.f32.mrf.mxu0
      %v704 = vadd.f32 %v594, %v703
      %v705 = vpop.f32.mrf.mxu0
      %v706 = vadd.f32 %v594, %v705
      %707 = vmatprep.mubr.f32.mxu0 0.0
      %v708 = vand.u32 %v616, 4294901760
      %v709 = vsub.f32 %v616, %v708
      %v710 = vand.u32 %v709, 4294901760
      %v711 = vsub.f32 %v709, %v710
      %v712 = vand.u32 %v711, 4294901760
      %713 = vmatmul.mubr.f32.gmra.mxu0 %v712
      %v714 = vpop.f32.mrf.mxu0
      %v715 = vadd.f32 %v599, %v714
      %v716 = vpop.f32.mrf.mxu0
      %v717 = vadd.f32 %v599, %v716
      %718 = vmatprep.mubr.f32.mxu0 0.0
      %v719 = vand.u32 %v619, 4294901760
      %v720 = vsub.f32 %v619, %v719
      %v721 = vand.u32 %v720, 4294901760
      %v722 = vsub.f32 %v720, %v721
      %v723 = vand.u32 %v722, 4294901760
      %724 = vmatmul.mubr.f32.gmra.mxu0 %v723
      %v725 = vpop.f32.mrf.mxu0
      %v726 = vadd.f32 %v604, %v725
      %v727 = vpop.f32.mrf.mxu0
      %v728 = vadd.f32 %v604, %v727
      %729 = vmatprep.mubr.f32.mxu0 0.0
      %v730 = vand.u32 %v622, 4294901760
      %v731 = vsub.f32 %v622, %v730
      %v732 = vand.u32 %v731, 4294901760
      %v733 = vsub.f32 %v731, %v732
      %v734 = vand.u32 %v733, 4294901760
      %735 = vmatmul.mubr.f32.gmra.mxu0 %v734
      %v736 = vpop.f32.mrf.mxu0
      %v737 = vadd.f32 %v609, %v736
      %v738 = vpop.f32.mrf.mxu0
      %v739 = vadd.f32 %v609, %v738
      %740 = vdwg.mxu0
      %741 = vmatprep.subr.mxu0 0.0
      %742 = vmatpush1.msra.mxu0 0.0
      %743 = vmatprep.subr.mxu0 0.0
      %744 = vmatpush1.msra.mxu0 0.0
      %745 = vmatprep.subr.mxu0 0.0
      %746 = vmatpush1.msra.mxu0 0.0
      %747 = vmatprep.subr.mxu0 0.0
      %748 = vmatpush1.msra.mxu0 0.0
      %749 = vmatprep.subr.mxu0 0.0
      %750 = vmatpush1.msra.mxu0 0.0
      %751 = vmatprep.subr.mxu0 0.0
      %752 = vmatpush1.msra.mxu0 0.0
      %753 = vmatprep.subr.mxu0 0.0
      %754 = vmatpush1.msra.mxu0 0.0
      %755 = vmatprep.subr.mxu0 0.0
      %756 = vmatpush1.msra.mxu0 0.0
      %757 = vmatprep.subr.mxu0 0.0
      %758 = vmatpush1.msra.mxu0 0.0
      %759 = vmatprep.subr.mxu0 0.0
      %760 = vmatpush1.msra.mxu0 0.0
      %761 = vmatprep.subr.mxu0 0.0
      %762 = vmatpush1.msra.mxu0 0.0
      %763 = vmatprep.subr.mxu0 0.0
      %764 = vmatpush1.msra.mxu0 0.0
      %v765 = vand.u32 %v580, 4294901760
      %v766 = vsub.f32 %v580, %v765
      %v767 = vand.u32 %v766, 4294901760
      %v768 = vsub.f32 %v766, %v767
      %v769 = vand.u32 %v768, 4294901760
      %770 = vmatprep.subr.mxu0 %v769
      %v771 = vand.u32 %v579, 4294901760
      %v772 = vsub.f32 %v579, %v771
      %v773 = vand.u32 %v772, 4294901760
      %v774 = vsub.f32 %v772, %v773
      %v775 = vand.u32 %v774, 4294901760
      %776 = vmatpush1.msra.mxu0 %v775
      %v777 = vand.u32 %v576, 4294901760
      %v778 = vsub.f32 %v576, %v777
      %v779 = vand.u32 %v778, 4294901760
      %v780 = vsub.f32 %v778, %v779
      %v781 = vand.u32 %v780, 4294901760
      %782 = vmatprep.subr.mxu0 %v781
      %v783 = vand.u32 %v575, 4294901760
      %v784 = vsub.f32 %v575, %v783
      %v785 = vand.u32 %v784, 4294901760
      %v786 = vsub.f32 %v784, %v785
      %v787 = vand.u32 %v786, 4294901760
      %788 = vmatpush1.msra.mxu0 %v787
      %v789 = vand.u32 %v572, 4294901760
      %v790 = vsub.f32 %v572, %v789
      %v791 = vand.u32 %v790, 4294901760
      %v792 = vsub.f32 %v790, %v791
      %v793 = vand.u32 %v792, 4294901760
      %794 = vmatprep.subr.mxu0 %v793
      %v795 = vand.u32 %v571, 4294901760
      %v796 = vsub.f32 %v571, %v795
      %v797 = vand.u32 %v796, 4294901760
      %v798 = vsub.f32 %v796, %v797
      %v799 = vand.u32 %v798, 4294901760
      %800 = vmatpush1.msra.mxu0 %v799
      %v801 = vand.u32 %v568, 4294901760
      %v802 = vsub.f32 %v568, %v801
      %v803 = vand.u32 %v802, 4294901760
      %v804 = vsub.f32 %v802, %v803
      %v805 = vand.u32 %v804, 4294901760
      %806 = vmatprep.subr.mxu0 %v805
      %v807 = vand.u32 %v567, 4294901760
      %v808 = vsub.f32 %v567, %v807
      %v809 = vand.u32 %v808, 4294901760
      %v810 = vsub.f32 %v808, %v809
      %v811 = vand.u32 %v810, 4294901760
      %812 = vmatpush1.msra.mxu0 %v811
      %813 = vmatprep.subr.mxu0 0.0
      %814 = vmatpush2.msra.mxu0 0.0
      %815 = vmatprep.subr.mxu0 0.0
      %816 = vmatpush2.msra.mxu0 0.0
      %817 = vmatprep.subr.mxu0 0.0
      %818 = vmatpush2.msra.mxu0 0.0
      %819 = vmatprep.subr.mxu0 0.0
      %820 = vmatpush2.msra.mxu0 0.0
      %821 = vmatprep.subr.mxu0 0.0
      %822 = vmatpush2.msra.mxu0 0.0
      %823 = vmatprep.subr.mxu0 0.0
      %824 = vmatpush2.msra.mxu0 0.0
      %825 = vmatprep.subr.mxu0 0.0
      %826 = vmatpush2.msra.mxu0 0.0
      %827 = vmatprep.subr.mxu0 0.0
      %828 = vmatpush2.msra.mxu0 0.0
      %829 = vmatprep.subr.mxu0 0.0
      %830 = vmatpush2.msra.mxu0 0.0
      %831 = vmatprep.subr.mxu0 0.0
      %832 = vmatpush2.msra.mxu0 0.0
      %833 = vmatprep.subr.mxu0 0.0
      %834 = vmatpush2.msra.mxu0 0.0
      %835 = vmatprep.subr.mxu0 0.0
      %836 = vmatpush2.msra.mxu0 0.0
      %837 = vmatprep.subr.mxu0 0.0
      %838 = vmatpush2.msra.mxu0 0.0
      %839 = vmatprep.subr.mxu0 0.0
      %840 = vmatpush2.msra.mxu0 0.0
      %841 = vmatprep.subr.mxu0 0.0
      %842 = vmatpush2.msra.mxu0 0.0
      %843 = vmatprep.subr.mxu0 0.0
      %844 = vmatpush2.msra.mxu0 0.0
      %845 = vmatprep.mubr.f32.mxu0 0.0
      %v846 = vand.u32 %v613, 4294901760
      %847 = vmatmul.mubr.f32.gmra.mxu0 %v846
      %v848 = vpop.f32.mrf.mxu0
      %v849 = vadd.f32 %v704, %v848
      %v850 = vpop.f32.mrf.mxu0
      %v851 = vadd.f32 %v706, %v850
      %852 = vmatprep.mubr.f32.mxu0 0.0
      %v853 = vand.u32 %v616, 4294901760
      %854 = vmatmul.mubr.f32.gmra.mxu0 %v853
      %v855 = vpop.f32.mrf.mxu0
      %v856 = vadd.f32 %v715, %v855
      %v857 = vpop.f32.mrf.mxu0
      %v858 = vadd.f32 %v717, %v857
      %859 = vmatprep.mubr.f32.mxu0 0.0
      %v860 = vand.u32 %v619, 4294901760
      %861 = vmatmul.mubr.f32.gmra.mxu0 %v860
      %v862 = vpop.f32.mrf.mxu0
      %v863 = vadd.f32 %v726, %v862
      %v864 = vpop.f32.mrf.mxu0
      %v865 = vadd.f32 %v728, %v864
      %866 = vmatprep.mubr.f32.mxu0 0.0
      %v867 = vand.u32 %v622, 4294901760
      %868 = vmatmul.mubr.f32.gmra.mxu0 %v867
      %v869 = vpop.f32.mrf.mxu0
      %v870 = vadd.f32 %v737, %v869
      %v871 = vpop.f32.mrf.mxu0
      %v872 = vadd.f32 %v739, %v871
      %873 = vdwg.mxu0
      %874 = vmatprep.subr.mxu0 0.0
      %875 = vmatpush1.msra.mxu0 0.0
      %876 = vmatprep.subr.mxu0 0.0
      %877 = vmatpush1.msra.mxu0 0.0
      %878 = vmatprep.subr.mxu0 0.0
      %879 = vmatpush1.msra.mxu0 0.0
      %880 = vmatprep.subr.mxu0 0.0
      %881 = vmatpush1.msra.mxu0 0.0
      %882 = vmatprep.subr.mxu0 0.0
      %883 = vmatpush1.msra.mxu0 0.0
      %884 = vmatprep.subr.mxu0 0.0
      %885 = vmatpush1.msra.mxu0 0.0
      %886 = vmatprep.subr.mxu0 0.0
      %887 = vmatpush1.msra.mxu0 0.0
      %888 = vmatprep.subr.mxu0 0.0
      %889 = vmatpush1.msra.mxu0 0.0
      %890 = vmatprep.subr.mxu0 0.0
      %891 = vmatpush1.msra.mxu0 0.0
      %892 = vmatprep.subr.mxu0 0.0
      %893 = vmatpush1.msra.mxu0 0.0
      %894 = vmatprep.subr.mxu0 0.0
      %895 = vmatpush1.msra.mxu0 0.0
      %896 = vmatprep.subr.mxu0 0.0
      %897 = vmatpush1.msra.mxu0 0.0
      %v898 = vand.u32 %v580, 4294901760
      %v899 = vsub.f32 %v580, %v898
      %900 = vmatprep.subr.mxu0 %v899
      %v901 = vand.u32 %v579, 4294901760
      %v902 = vsub.f32 %v579, %v901
      %903 = vmatpush1.msra.mxu0 %v902
      %v904 = vand.u32 %v576, 4294901760
      %v905 = vsub.f32 %v576, %v904
      %906 = vmatprep.subr.mxu0 %v905
      %v907 = vand.u32 %v575, 4294901760
      %v908 = vsub.f32 %v575, %v907
      %909 = vmatpush1.msra.mxu0 %v908
      %v910 = vand.u32 %v572, 4294901760
      %v911 = vsub.f32 %v572, %v910
      %912 = vmatprep.subr.mxu0 %v911
      %v913 = vand.u32 %v571, 4294901760
      %v914 = vsub.f32 %v571, %v913
      %915 = vmatpush1.msra.mxu0 %v914
      %v916 = vand.u32 %v568, 4294901760
      %v917 = vsub.f32 %v568, %v916
      %918 = vmatprep.subr.mxu0 %v917
      %v919 = vand.u32 %v567, 4294901760
      %v920 = vsub.f32 %v567, %v919
      %921 = vmatpush1.msra.mxu0 %v920
      %922 = vmatprep.subr.mxu0 0.0
      %923 = vmatpush2.msra.mxu0 0.0
      %924 = vmatprep.subr.mxu0 0.0
      %925 = vmatpush2.msra.mxu0 0.0
      %926 = vmatprep.subr.mxu0 0.0
      %927 = vmatpush2.msra.mxu0 0.0
      %928 = vmatprep.subr.mxu0 0.0
      %929 = vmatpush2.msra.mxu0 0.0
      %930 = vmatprep.subr.mxu0 0.0
      %931 = vmatpush2.msra.mxu0 0.0
      %932 = vmatprep.subr.mxu0 0.0
      %933 = vmatpush2.msra.mxu0 0.0
      %934 = vmatprep.subr.mxu0 0.0
      %935 = vmatpush2.msra.mxu0 0.0
      %936 = vmatprep.subr.mxu0 0.0
      %937 = vmatpush2.msra.mxu0 0.0
      %938 = vmatprep.subr.mxu0 0.0
      %939 = vmatpush2.msra.mxu0 0.0
      %940 = vmatprep.subr.mxu0 0.0
      %941 = vmatpush2.msra.mxu0 0.0
      %942 = vmatprep.subr.mxu0 0.0
      %943 = vmatpush2.msra.mxu0 0.0
      %944 = vmatprep.subr.mxu0 0.0
      %945 = vmatpush2.msra.mxu0 0.0
      %946 = vmatprep.subr.mxu0 0.0
      %947 = vmatpush2.msra.mxu0 0.0
      %948 = vmatprep.subr.mxu0 0.0
      %949 = vmatpush2.msra.mxu0 0.0
      %950 = vmatprep.subr.mxu0 0.0
      %951 = vmatpush2.msra.mxu0 0.0
      %952 = vmatprep.subr.mxu0 0.0
      %953 = vmatpush2.msra.mxu0 0.0
      %954 = vmatprep.mubr.f32.mxu0 0.0
      %v955 = vand.u32 %v613, 4294901760
      %v956 = vsub.f32 %v613, %v955
      %957 = vmatmul.mubr.f32.gmra.mxu0 %v956
      %v958 = vpop.f32.mrf.mxu0
      %v959 = vadd.f32 %v849, %v958
      %v960 = vpop.f32.mrf.mxu0
      %v961 = vadd.f32 %v851, %v960
      %962 = vmatprep.mubr.f32.mxu0 0.0
      %v963 = vand.u32 %v616, 4294901760
      %v964 = vsub.f32 %v616, %v963
      %965 = vmatmul.mubr.f32.gmra.mxu0 %v964
      %v966 = vpop.f32.mrf.mxu0
      %v967 = vadd.f32 %v856, %v966
      %v968 = vpop.f32.mrf.mxu0
      %v969 = vadd.f32 %v858, %v968
      %970 = vmatprep.mubr.f32.mxu0 0.0
      %v971 = vand.u32 %v619, 4294901760
      %v972 = vsub.f32 %v619, %v971
      %973 = vmatmul.mubr.f32.gmra.mxu0 %v972
      %v974 = vpop.f32.mrf.mxu0
      %v975 = vadd.f32 %v863, %v974
      %v976 = vpop.f32.mrf.mxu0
      %v977 = vadd.f32 %v865, %v976
      %978 = vmatprep.mubr.f32.mxu0 0.0
      %v979 = vand.u32 %v622, 4294901760
      %v980 = vsub.f32 %v622, %v979
      %981 = vmatmul.mubr.f32.gmra.mxu0 %v980
      %v982 = vpop.f32.mrf.mxu0
      %v983 = vadd.f32 %v870, %v982
      %v984 = vpop.f32.mrf.mxu0
      %v985 = vadd.f32 %v872, %v984
      %986 = vdwg.mxu0
      %987 = vmatprep.subr.mxu0 0.0
      %988 = vmatpush1.msra.mxu0 0.0
      %989 = vmatprep.subr.mxu0 0.0
      %990 = vmatpush1.msra.mxu0 0.0
      %991 = vmatprep.subr.mxu0 0.0
      %992 = vmatpush1.msra.mxu0 0.0
      %993 = vmatprep.subr.mxu0 0.0
      %994 = vmatpush1.msra.mxu0 0.0
      %995 = vmatprep.subr.mxu0 0.0
      %996 = vmatpush1.msra.mxu0 0.0
      %997 = vmatprep.subr.mxu0 0.0
      %998 = vmatpush1.msra.mxu0 0.0
      %999 = vmatprep.subr.mxu0 0.0
      %1000 = vmatpush1.msra.mxu0 0.0
      %1001 = vmatprep.subr.mxu0 0.0
      %1002 = vmatpush1.msra.mxu0 0.0
      %1003 = vmatprep.subr.mxu0 0.0
      %1004 = vmatpush1.msra.mxu0 0.0
      %1005 = vmatprep.subr.mxu0 0.0
      %1006 = vmatpush1.msra.mxu0 0.0
      %1007 = vmatprep.subr.mxu0 0.0
      %1008 = vmatpush1.msra.mxu0 0.0
      %1009 = vmatprep.subr.mxu0 0.0
      %1010 = vmatpush1.msra.mxu0 0.0
      %v1011 = vand.u32 %v580, 4294901760
      %1012 = vmatprep.subr.mxu0 %v1011
      %v1013 = vand.u32 %v579, 4294901760
      %1014 = vmatpush1.msra.mxu0 %v1013
      %v1015 = vand.u32 %v576, 4294901760
      %1016 = vmatprep.subr.mxu0 %v1015
      %v1017 = vand.u32 %v575, 4294901760
      %1018 = vmatpush1.msra.mxu0 %v1017
      %v1019 = vand.u32 %v572, 4294901760
      %1020 = vmatprep.subr.mxu0 %v1019
      %v1021 = vand.u32 %v571, 4294901760
      %1022 = vmatpush1.msra.mxu0 %v1021
      %v1023 = vand.u32 %v568, 4294901760
      %1024 = vmatprep.subr.mxu0 %v1023
      %v1025 = vand.u32 %v567, 4294901760
      %1026 = vmatpush1.msra.mxu0 %v1025
      %1027 = vmatprep.subr.mxu0 0.0
      %1028 = vmatpush2.msra.mxu0 0.0
      %1029 = vmatprep.subr.mxu0 0.0
      %1030 = vmatpush2.msra.mxu0 0.0
      %1031 = vmatprep.subr.mxu0 0.0
      %1032 = vmatpush2.msra.mxu0 0.0
      %1033 = vmatprep.subr.mxu0 0.0
      %1034 = vmatpush2.msra.mxu0 0.0
      %1035 = vmatprep.subr.mxu0 0.0
      %1036 = vmatpush2.msra.mxu0 0.0
      %1037 = vmatprep.subr.mxu0 0.0
      %1038 = vmatpush2.msra.mxu0 0.0
      %1039 = vmatprep.subr.mxu0 0.0
      %1040 = vmatpush2.msra.mxu0 0.0
      %1041 = vmatprep.subr.mxu0 0.0
      %1042 = vmatpush2.msra.mxu0 0.0
      %1043 = vmatprep.subr.mxu0 0.0
      %1044 = vmatpush2.msra.mxu0 0.0
      %1045 = vmatprep.subr.mxu0 0.0
      %1046 = vmatpush2.msra.mxu0 0.0
      %1047 = vmatprep.subr.mxu0 0.0
      %1048 = vmatpush2.msra.mxu0 0.0
      %1049 = vmatprep.subr.mxu0 0.0
      %1050 = vmatpush2.msra.mxu0 0.0
      %1051 = vmatprep.subr.mxu0 0.0
      %1052 = vmatpush2.msra.mxu0 0.0
      %1053 = vmatprep.subr.mxu0 0.0
      %1054 = vmatpush2.msra.mxu0 0.0
      %1055 = vmatprep.subr.mxu0 0.0
      %1056 = vmatpush2.msra.mxu0 0.0
      %1057 = vmatprep.subr.mxu0 0.0
      %1058 = vmatpush2.msra.mxu0 0.0
      %1059 = vmatprep.mubr.f32.mxu0 0.0
      %v1060 = vand.u32 %v613, 4294901760
      %v1061 = vsub.f32 %v613, %v1060
      %v1062 = vand.u32 %v1061, 4294901760
      %1063 = vmatmul.mubr.f32.gmra.mxu0 %v1062
      %v1064 = vpop.f32.mrf.mxu0
      %v1065 = vadd.f32 %v959, %v1064
      %v1066 = vpop.f32.mrf.mxu0
      %v1067 = vadd.f32 %v961, %v1066
      %1068 = vmatprep.mubr.f32.mxu0 0.0
      %v1069 = vand.u32 %v616, 4294901760
      %v1070 = vsub.f32 %v616, %v1069
      %v1071 = vand.u32 %v1070, 4294901760
      %1072 = vmatmul.mubr.f32.gmra.mxu0 %v1071
      %v1073 = vpop.f32.mrf.mxu0
      %v1074 = vadd.f32 %v967, %v1073
      %v1075 = vpop.f32.mrf.mxu0
      %v1076 = vadd.f32 %v969, %v1075
      %1077 = vmatprep.mubr.f32.mxu0 0.0
      %v1078 = vand.u32 %v619, 4294901760
      %v1079 = vsub.f32 %v619, %v1078
      %v1080 = vand.u32 %v1079, 4294901760
      %1081 = vmatmul.mubr.f32.gmra.mxu0 %v1080
      %v1082 = vpop.f32.mrf.mxu0
      %v1083 = vadd.f32 %v975, %v1082
      %v1084 = vpop.f32.mrf.mxu0
      %v1085 = vadd.f32 %v977, %v1084
      %1086 = vmatprep.mubr.f32.mxu0 0.0
      %v1087 = vand.u32 %v622, 4294901760
      %v1088 = vsub.f32 %v622, %v1087
      %v1089 = vand.u32 %v1088, 4294901760
      %1090 = vmatmul.mubr.f32.gmra.mxu0 %v1089
      %v1091 = vpop.f32.mrf.mxu0
      %v1092 = vadd.f32 %v983, %v1091
      %v1093 = vpop.f32.mrf.mxu0
      %v1094 = vadd.f32 %v985, %v1093
      %1095 = vdwg.mxu0
      %1096 = vmatprep.subr.mxu0 0.0
      %1097 = vmatpush1.msra.mxu0 0.0
      %1098 = vmatprep.subr.mxu0 0.0
      %1099 = vmatpush1.msra.mxu0 0.0
      %1100 = vmatprep.subr.mxu0 0.0
      %1101 = vmatpush1.msra.mxu0 0.0
      %1102 = vmatprep.subr.mxu0 0.0
      %1103 = vmatpush1.msra.mxu0 0.0
      %1104 = vmatprep.subr.mxu0 0.0
      %1105 = vmatpush1.msra.mxu0 0.0
      %1106 = vmatprep.subr.mxu0 0.0
      %1107 = vmatpush1.msra.mxu0 0.0
      %1108 = vmatprep.subr.mxu0 0.0
      %1109 = vmatpush1.msra.mxu0 0.0
      %1110 = vmatprep.subr.mxu0 0.0
      %1111 = vmatpush1.msra.mxu0 0.0
      %1112 = vmatprep.subr.mxu0 0.0
      %1113 = vmatpush1.msra.mxu0 0.0
      %1114 = vmatprep.subr.mxu0 0.0
      %1115 = vmatpush1.msra.mxu0 0.0
      %1116 = vmatprep.subr.mxu0 0.0
      %1117 = vmatpush1.msra.mxu0 0.0
      %1118 = vmatprep.subr.mxu0 0.0
      %1119 = vmatpush1.msra.mxu0 0.0
      %v1120 = vand.u32 %v580, 4294901760
      %v1121 = vsub.f32 %v580, %v1120
      %v1122 = vand.u32 %v1121, 4294901760
      %1123 = vmatprep.subr.mxu0 %v1122
      %v1124 = vand.u32 %v579, 4294901760
      %v1125 = vsub.f32 %v579, %v1124
      %v1126 = vand.u32 %v1125, 4294901760
      %1127 = vmatpush1.msra.mxu0 %v1126
      %v1128 = vand.u32 %v576, 4294901760
      %v1129 = vsub.f32 %v576, %v1128
      %v1130 = vand.u32 %v1129, 4294901760
      %1131 = vmatprep.subr.mxu0 %v1130
      %v1132 = vand.u32 %v575, 4294901760
      %v1133 = vsub.f32 %v575, %v1132
      %v1134 = vand.u32 %v1133, 4294901760
      %1135 = vmatpush1.msra.mxu0 %v1134
      %v1136 = vand.u32 %v572, 4294901760
      %v1137 = vsub.f32 %v572, %v1136
      %v1138 = vand.u32 %v1137, 4294901760
      %1139 = vmatprep.subr.mxu0 %v1138
      %v1140 = vand.u32 %v571, 4294901760
      %v1141 = vsub.f32 %v571, %v1140
      %v1142 = vand.u32 %v1141, 4294901760
      %1143 = vmatpush1.msra.mxu0 %v1142
      %v1144 = vand.u32 %v568, 4294901760
      %v1145 = vsub.f32 %v568, %v1144
      %v1146 = vand.u32 %v1145, 4294901760
      %1147 = vmatprep.subr.mxu0 %v1146
      %v1148 = vand.u32 %v567, 4294901760
      %v1149 = vsub.f32 %v567, %v1148
      %v1150 = vand.u32 %v1149, 4294901760
      %1151 = vmatpush1.msra.mxu0 %v1150
      %1152 = vmatprep.subr.mxu0 0.0
      %1153 = vmatpush2.msra.mxu0 0.0
      %1154 = vmatprep.subr.mxu0 0.0
      %1155 = vmatpush2.msra.mxu0 0.0
      %1156 = vmatprep.subr.mxu0 0.0
      %1157 = vmatpush2.msra.mxu0 0.0
      %1158 = vmatprep.subr.mxu0 0.0
      %1159 = vmatpush2.msra.mxu0 0.0
      %1160 = vmatprep.subr.mxu0 0.0
      %1161 = vmatpush2.msra.mxu0 0.0
      %1162 = vmatprep.subr.mxu0 0.0
      %1163 = vmatpush2.msra.mxu0 0.0
      %1164 = vmatprep.subr.mxu0 0.0
      %1165 = vmatpush2.msra.mxu0 0.0
      %1166 = vmatprep.subr.mxu0 0.0
      %1167 = vmatpush2.msra.mxu0 0.0
      %1168 = vmatprep.subr.mxu0 0.0
      %1169 = vmatpush2.msra.mxu0 0.0
      %1170 = vmatprep.subr.mxu0 0.0
      %1171 = vmatpush2.msra.mxu0 0.0
      %1172 = vmatprep.subr.mxu0 0.0
      %1173 = vmatpush2.msra.mxu0 0.0
      %1174 = vmatprep.subr.mxu0 0.0
      %1175 = vmatpush2.msra.mxu0 0.0
      %1176 = vmatprep.subr.mxu0 0.0
      %1177 = vmatpush2.msra.mxu0 0.0
      %1178 = vmatprep.subr.mxu0 0.0
      %1179 = vmatpush2.msra.mxu0 0.0
      %1180 = vmatprep.subr.mxu0 0.0
      %1181 = vmatpush2.msra.mxu0 0.0
      %1182 = vmatprep.subr.mxu0 0.0
      %1183 = vmatpush2.msra.mxu0 0.0
      %1184 = vmatprep.mubr.f32.mxu0 0.0
      %v1185 = vand.u32 %v613, 4294901760
      %1186 = vmatmul.mubr.f32.gmra.mxu0 %v1185
      %v1187 = vpop.f32.mrf.mxu0
      %v1188 = vadd.f32 %v1065, %v1187
      %v1189 = vpop.f32.mrf.mxu0
      %v1190 = vadd.f32 %v1067, %v1189
      %1191 = vmatprep.mubr.f32.mxu0 0.0
      %v1192 = vand.u32 %v616, 4294901760
      %1193 = vmatmul.mubr.f32.gmra.mxu0 %v1192
      %v1194 = vpop.f32.mrf.mxu0
      %v1195 = vadd.f32 %v1074, %v1194
      %v1196 = vpop.f32.mrf.mxu0
      %v1197 = vadd.f32 %v1076, %v1196
      %1198 = vmatprep.mubr.f32.mxu0 0.0
      %v1199 = vand.u32 %v619, 4294901760
      %1200 = vmatmul.mubr.f32.gmra.mxu0 %v1199
      %v1201 = vpop.f32.mrf.mxu0
      %v1202 = vadd.f32 %v1083, %v1201
      %v1203 = vpop.f32.mrf.mxu0
      %v1204 = vadd.f32 %v1085, %v1203
      %1205 = vmatprep.mubr.f32.mxu0 0.0
      %v1206 = vand.u32 %v622, 4294901760
      %1207 = vmatmul.mubr.f32.gmra.mxu0 %v1206
      %v1208 = vpop.f32.mrf.mxu0
      %v1209 = vadd.f32 %v1092, %v1208
      %v1210 = vpop.f32.mrf.mxu0
      %v1211 = vadd.f32 %v1094, %v1210
      %1212 = vdwg.mxu0
      %1213 = vmatprep.subr.mxu0 0.0
      %1214 = vmatpush1.msra.mxu0 0.0
      %1215 = vmatprep.subr.mxu0 0.0
      %1216 = vmatpush1.msra.mxu0 0.0
      %1217 = vmatprep.subr.mxu0 0.0
      %1218 = vmatpush1.msra.mxu0 0.0
      %1219 = vmatprep.subr.mxu0 0.0
      %1220 = vmatpush1.msra.mxu0 0.0
      %1221 = vmatprep.subr.mxu0 0.0
      %1222 = vmatpush1.msra.mxu0 0.0
      %1223 = vmatprep.subr.mxu0 0.0
      %1224 = vmatpush1.msra.mxu0 0.0
      %1225 = vmatprep.subr.mxu0 0.0
      %1226 = vmatpush1.msra.mxu0 0.0
      %1227 = vmatprep.subr.mxu0 0.0
      %1228 = vmatpush1.msra.mxu0 0.0
      %1229 = vmatprep.subr.mxu0 0.0
      %1230 = vmatpush1.msra.mxu0 0.0
      %1231 = vmatprep.subr.mxu0 0.0
      %1232 = vmatpush1.msra.mxu0 0.0
      %1233 = vmatprep.subr.mxu0 0.0
      %1234 = vmatpush1.msra.mxu0 0.0
      %1235 = vmatprep.subr.mxu0 0.0
      %1236 = vmatpush1.msra.mxu0 0.0
      %v1237 = vand.u32 %v580, 4294901760
      %1238 = vmatprep.subr.mxu0 %v1237
      %v1239 = vand.u32 %v579, 4294901760
      %1240 = vmatpush1.msra.mxu0 %v1239
      %v1241 = vand.u32 %v576, 4294901760
      %1242 = vmatprep.subr.mxu0 %v1241
      %v1243 = vand.u32 %v575, 4294901760
      %1244 = vmatpush1.msra.mxu0 %v1243
      %v1245 = vand.u32 %v572, 4294901760
      %1246 = vmatprep.subr.mxu0 %v1245
      %v1247 = vand.u32 %v571, 4294901760
      %1248 = vmatpush1.msra.mxu0 %v1247
      %v1249 = vand.u32 %v568, 4294901760
      %1250 = vmatprep.subr.mxu0 %v1249
      %v1251 = vand.u32 %v567, 4294901760
      %1252 = vmatpush1.msra.mxu0 %v1251
      %1253 = vmatprep.subr.mxu0 0.0
      %1254 = vmatpush2.msra.mxu0 0.0
      %1255 = vmatprep.subr.mxu0 0.0
      %1256 = vmatpush2.msra.mxu0 0.0
      %1257 = vmatprep.subr.mxu0 0.0
      %1258 = vmatpush2.msra.mxu0 0.0
      %1259 = vmatprep.subr.mxu0 0.0
      %1260 = vmatpush2.msra.mxu0 0.0
      %1261 = vmatprep.subr.mxu0 0.0
      %1262 = vmatpush2.msra.mxu0 0.0
      %1263 = vmatprep.subr.mxu0 0.0
      %1264 = vmatpush2.msra.mxu0 0.0
      %1265 = vmatprep.subr.mxu0 0.0
      %1266 = vmatpush2.msra.mxu0 0.0
      %1267 = vmatprep.subr.mxu0 0.0
      %1268 = vmatpush2.msra.mxu0 0.0
      %1269 = vmatprep.subr.mxu0 0.0
      %1270 = vmatpush2.msra.mxu0 0.0
      %1271 = vmatprep.subr.mxu0 0.0
      %1272 = vmatpush2.msra.mxu0 0.0
      %1273 = vmatprep.subr.mxu0 0.0
      %1274 = vmatpush2.msra.mxu0 0.0
      %1275 = vmatprep.subr.mxu0 0.0
      %1276 = vmatpush2.msra.mxu0 0.0
      %1277 = vmatprep.subr.mxu0 0.0
      %1278 = vmatpush2.msra.mxu0 0.0
      %1279 = vmatprep.subr.mxu0 0.0
      %1280 = vmatpush2.msra.mxu0 0.0
      %1281 = vmatprep.subr.mxu0 0.0
      %1282 = vmatpush2.msra.mxu0 0.0
      %1283 = vmatprep.subr.mxu0 0.0
      %1284 = vmatpush2.msra.mxu0 0.0
      %1285 = vmatprep.mubr.f32.mxu0 0.0
      %v1286 = vand.u32 %v613, 4294901760
      %1287 = vmatmul.mubr.f32.gmra.mxu0 %v1286
      %v1288 = vpop.f32.mrf.mxu0
      %v1289 = vadd.f32 %v1188, %v1288
      %v1290 = vpop.f32.mrf.mxu0
      %v1291 = vadd.f32 %v1190, %v1290
      %1292 = vmatprep.mubr.f32.mxu0 0.0
      %v1293 = vand.u32 %v616, 4294901760
      %1294 = vmatmul.mubr.f32.gmra.mxu0 %v1293
      %v1295 = vpop.f32.mrf.mxu0
      %v1296 = vadd.f32 %v1195, %v1295
      %v1297 = vpop.f32.mrf.mxu0
      %v1298 = vadd.f32 %v1197, %v1297
      %1299 = vmatprep.mubr.f32.mxu0 0.0
      %v1300 = vand.u32 %v619, 4294901760
      %1301 = vmatmul.mubr.f32.gmra.mxu0 %v1300
      %v1302 = vpop.f32.mrf.mxu0
      %v1303 = vadd.f32 %v1202, %v1302
      %v1304 = vpop.f32.mrf.mxu0
      %v1305 = vadd.f32 %v1204, %v1304
      %1306 = vmatprep.mubr.f32.mxu0 0.0
      %v1307 = vand.u32 %v622, 4294901760
      %1308 = vmatmul.mubr.f32.gmra.mxu0 %v1307
      %v1309 = vpop.f32.mrf.mxu0
      %v1310 = vadd.f32 %v1209, %v1309
      %v1311 = vpop.f32.mrf.mxu0
      %v1312 = vadd.f32 %v1211, %v1311
      %1313 = vdwg.mxu0
      %1314 = vmatprep.subr.mxu0 0.0
      %1315 = vmatpush1.msra.mxu0 0.0
      %1316 = vmatprep.subr.mxu0 0.0
      %1317 = vmatpush1.msra.mxu0 0.0
      %1318 = vmatprep.subr.mxu0 0.0
      %1319 = vmatpush1.msra.mxu0 0.0
      %1320 = vmatprep.subr.mxu0 0.0
      %1321 = vmatpush1.msra.mxu0 0.0
      %1322 = vmatprep.subr.mxu0 0.0
      %1323 = vmatpush1.msra.mxu0 0.0
      %1324 = vmatprep.subr.mxu0 0.0
      %1325 = vmatpush1.msra.mxu0 0.0
      %1326 = vmatprep.subr.mxu0 0.0
      %1327 = vmatpush1.msra.mxu0 0.0
      %1328 = vmatprep.subr.mxu0 0.0
      %1329 = vmatpush1.msra.mxu0 0.0
      %1330 = vmatprep.subr.mxu0 0.0
      %1331 = vmatpush1.msra.mxu0 0.0
      %1332 = vmatprep.subr.mxu0 0.0
      %1333 = vmatpush1.msra.mxu0 0.0
      %1334 = vmatprep.subr.mxu0 0.0
      %1335 = vmatpush1.msra.mxu0 0.0
      %1336 = vmatprep.subr.mxu0 0.0
      %1337 = vmatpush1.msra.mxu0 0.0
      %v1338 = vand.u32 %v582, 4294901760
      %1339 = vmatprep.subr.mxu0 %v1338
      %v1340 = vand.u32 %v581, 4294901760
      %1341 = vmatpush1.msra.mxu0 %v1340
      %v1342 = vand.u32 %v578, 4294901760
      %1343 = vmatprep.subr.mxu0 %v1342
      %v1344 = vand.u32 %v577, 4294901760
      %1345 = vmatpush1.msra.mxu0 %v1344
      %v1346 = vand.u32 %v574, 4294901760
      %1347 = vmatprep.subr.mxu0 %v1346
      %v1348 = vand.u32 %v573, 4294901760
      %1349 = vmatpush1.msra.mxu0 %v1348
      %v1350 = vand.u32 %v570, 4294901760
      %1351 = vmatprep.subr.mxu0 %v1350
      %v1352 = vand.u32 %v569, 4294901760
      %1353 = vmatpush1.msra.mxu0 %v1352
      %1354 = vmatprep.subr.mxu0 0.0
      %1355 = vmatpush2.msra.mxu0 0.0
      %1356 = vmatprep.subr.mxu0 0.0
      %1357 = vmatpush2.msra.mxu0 0.0
      %1358 = vmatprep.subr.mxu0 0.0
      %1359 = vmatpush2.msra.mxu0 0.0
      %1360 = vmatprep.subr.mxu0 0.0
      %1361 = vmatpush2.msra.mxu0 0.0
      %1362 = vmatprep.subr.mxu0 0.0
      %1363 = vmatpush2.msra.mxu0 0.0
      %1364 = vmatprep.subr.mxu0 0.0
      %1365 = vmatpush2.msra.mxu0 0.0
      %1366 = vmatprep.subr.mxu0 0.0
      %1367 = vmatpush2.msra.mxu0 0.0
      %1368 = vmatprep.subr.mxu0 0.0
      %1369 = vmatpush2.msra.mxu0 0.0
      %1370 = vmatprep.subr.mxu0 0.0
      %1371 = vmatpush2.msra.mxu0 0.0
      %1372 = vmatprep.subr.mxu0 0.0
      %1373 = vmatpush2.msra.mxu0 0.0
      %1374 = vmatprep.subr.mxu0 0.0
      %1375 = vmatpush2.msra.mxu0 0.0
      %1376 = vmatprep.subr.mxu0 0.0
      %1377 = vmatpush2.msra.mxu0 0.0
      %1378 = vmatprep.subr.mxu0 0.0
      %1379 = vmatpush2.msra.mxu0 0.0
      %1380 = vmatprep.subr.mxu0 0.0
      %1381 = vmatpush2.msra.mxu0 0.0
      %1382 = vmatprep.subr.mxu0 0.0
      %1383 = vmatpush2.msra.mxu0 0.0
      %1384 = vmatprep.subr.mxu0 0.0
      %1385 = vmatpush2.msra.mxu0 0.0
      %1386 = vmatprep.mubr.f32.mxu0 0.0
      %v1387 = vand.u32 %v613, 4294901760
      %v1388 = vsub.f32 %v613, %v1387
      %v1389 = vand.u32 %v1388, 4294901760
      %v1390 = vsub.f32 %v1388, %v1389
      %v1391 = vand.u32 %v1390, 4294901760
      %1392 = vmatmul.mubr.f32.gmra.mxu0 %v1391
      %v1393 = vpop.f32.mrf.mxu0
      %v1394 = vadd.f32 %v594, %v1393
      %v1395 = vpop.f32.mrf.mxu0
      %v1396 = vadd.f32 %v594, %v1395
      %1397 = vmatprep.mubr.f32.mxu0 0.0
      %v1398 = vand.u32 %v616, 4294901760
      %v1399 = vsub.f32 %v616, %v1398
      %v1400 = vand.u32 %v1399, 4294901760
      %v1401 = vsub.f32 %v1399, %v1400
      %v1402 = vand.u32 %v1401, 4294901760
      %1403 = vmatmul.mubr.f32.gmra.mxu0 %v1402
      %v1404 = vpop.f32.mrf.mxu0
      %v1405 = vadd.f32 %v599, %v1404
      %v1406 = vpop.f32.mrf.mxu0
      %v1407 = vadd.f32 %v599, %v1406
      %1408 = vmatprep.mubr.f32.mxu0 0.0
      %v1409 = vand.u32 %v619, 4294901760
      %v1410 = vsub.f32 %v619, %v1409
      %v1411 = vand.u32 %v1410, 4294901760
      %v1412 = vsub.f32 %v1410, %v1411
      %v1413 = vand.u32 %v1412, 4294901760
      %1414 = vmatmul.mubr.f32.gmra.mxu0 %v1413
      %v1415 = vpop.f32.mrf.mxu0
      %v1416 = vadd.f32 %v604, %v1415
      %v1417 = vpop.f32.mrf.mxu0
      %v1418 = vadd.f32 %v604, %v1417
      %1419 = vmatprep.mubr.f32.mxu0 0.0
      %v1420 = vand.u32 %v622, 4294901760
      %v1421 = vsub.f32 %v622, %v1420
      %v1422 = vand.u32 %v1421, 4294901760
      %v1423 = vsub.f32 %v1421, %v1422
      %v1424 = vand.u32 %v1423, 4294901760
      %1425 = vmatmul.mubr.f32.gmra.mxu0 %v1424
      %v1426 = vpop.f32.mrf.mxu0
      %v1427 = vadd.f32 %v609, %v1426
      %v1428 = vpop.f32.mrf.mxu0
      %v1429 = vadd.f32 %v609, %v1428
      %1430 = vdwg.mxu0
      %1431 = vmatprep.subr.mxu0 0.0
      %1432 = vmatpush1.msra.mxu0 0.0
      %1433 = vmatprep.subr.mxu0 0.0
      %1434 = vmatpush1.msra.mxu0 0.0
      %1435 = vmatprep.subr.mxu0 0.0
      %1436 = vmatpush1.msra.mxu0 0.0
      %1437 = vmatprep.subr.mxu0 0.0
      %1438 = vmatpush1.msra.mxu0 0.0
      %1439 = vmatprep.subr.mxu0 0.0
      %1440 = vmatpush1.msra.mxu0 0.0
      %1441 = vmatprep.subr.mxu0 0.0
      %1442 = vmatpush1.msra.mxu0 0.0
      %1443 = vmatprep.subr.mxu0 0.0
      %1444 = vmatpush1.msra.mxu0 0.0
      %1445 = vmatprep.subr.mxu0 0.0
      %1446 = vmatpush1.msra.mxu0 0.0
      %1447 = vmatprep.subr.mxu0 0.0
      %1448 = vmatpush1.msra.mxu0 0.0
      %1449 = vmatprep.subr.mxu0 0.0
      %1450 = vmatpush1.msra.mxu0 0.0
      %1451 = vmatprep.subr.mxu0 0.0
      %1452 = vmatpush1.msra.mxu0 0.0
      %1453 = vmatprep.subr.mxu0 0.0
      %1454 = vmatpush1.msra.mxu0 0.0
      %v1455 = vand.u32 %v582, 4294901760
      %v1456 = vsub.f32 %v582, %v1455
      %v1457 = vand.u32 %v1456, 4294901760
      %v1458 = vsub.f32 %v1456, %v1457
      %v1459 = vand.u32 %v1458, 4294901760
      %1460 = vmatprep.subr.mxu0 %v1459
      %v1461 = vand.u32 %v581, 4294901760
      %v1462 = vsub.f32 %v581, %v1461
      %v1463 = vand.u32 %v1462, 4294901760
      %v1464 = vsub.f32 %v1462, %v1463
      %v1465 = vand.u32 %v1464, 4294901760
      %1466 = vmatpush1.msra.mxu0 %v1465
      %v1467 = vand.u32 %v578, 4294901760
      %v1468 = vsub.f32 %v578, %v1467
      %v1469 = vand.u32 %v1468, 4294901760
      %v1470 = vsub.f32 %v1468, %v1469
      %v1471 = vand.u32 %v1470, 4294901760
      %1472 = vmatprep.subr.mxu0 %v1471
      %v1473 = vand.u32 %v577, 4294901760
      %v1474 = vsub.f32 %v577, %v1473
      %v1475 = vand.u32 %v1474, 4294901760
      %v1476 = vsub.f32 %v1474, %v1475
      %v1477 = vand.u32 %v1476, 4294901760
      %1478 = vmatpush1.msra.mxu0 %v1477
      %v1479 = vand.u32 %v574, 4294901760
      %v1480 = vsub.f32 %v574, %v1479
      %v1481 = vand.u32 %v1480, 4294901760
      %v1482 = vsub.f32 %v1480, %v1481
      %v1483 = vand.u32 %v1482, 4294901760
      %1484 = vmatprep.subr.mxu0 %v1483
      %v1485 = vand.u32 %v573, 4294901760
      %v1486 = vsub.f32 %v573, %v1485
      %v1487 = vand.u32 %v1486, 4294901760
      %v1488 = vsub.f32 %v1486, %v1487
      %v1489 = vand.u32 %v1488, 4294901760
      %1490 = vmatpush1.msra.mxu0 %v1489
      %v1491 = vand.u32 %v570, 4294901760
      %v1492 = vsub.f32 %v570, %v1491
      %v1493 = vand.u32 %v1492, 4294901760
      %v1494 = vsub.f32 %v1492, %v1493
      %v1495 = vand.u32 %v1494, 4294901760
      %1496 = vmatprep.subr.mxu0 %v1495
      %v1497 = vand.u32 %v569, 4294901760
      %v1498 = vsub.f32 %v569, %v1497
      %v1499 = vand.u32 %v1498, 4294901760
      %v1500 = vsub.f32 %v1498, %v1499
      %v1501 = vand.u32 %v1500, 4294901760
      %1502 = vmatpush1.msra.mxu0 %v1501
      %1503 = vmatprep.subr.mxu0 0.0
      %1504 = vmatpush2.msra.mxu0 0.0
      %1505 = vmatprep.subr.mxu0 0.0
      %1506 = vmatpush2.msra.mxu0 0.0
      %1507 = vmatprep.subr.mxu0 0.0
      %1508 = vmatpush2.msra.mxu0 0.0
      %1509 = vmatprep.subr.mxu0 0.0
      %1510 = vmatpush2.msra.mxu0 0.0
      %1511 = vmatprep.subr.mxu0 0.0
      %1512 = vmatpush2.msra.mxu0 0.0
      %1513 = vmatprep.subr.mxu0 0.0
      %1514 = vmatpush2.msra.mxu0 0.0
      %1515 = vmatprep.subr.mxu0 0.0
      %1516 = vmatpush2.msra.mxu0 0.0
      %1517 = vmatprep.subr.mxu0 0.0
      %1518 = vmatpush2.msra.mxu0 0.0
      %1519 = vmatprep.subr.mxu0 0.0
      %1520 = vmatpush2.msra.mxu0 0.0
      %1521 = vmatprep.subr.mxu0 0.0
      %1522 = vmatpush2.msra.mxu0 0.0
      %1523 = vmatprep.subr.mxu0 0.0
      %1524 = vmatpush2.msra.mxu0 0.0
      %1525 = vmatprep.subr.mxu0 0.0
      %1526 = vmatpush2.msra.mxu0 0.0
      %1527 = vmatprep.subr.mxu0 0.0
      %1528 = vmatpush2.msra.mxu0 0.0
      %1529 = vmatprep.subr.mxu0 0.0
      %1530 = vmatpush2.msra.mxu0 0.0
      %1531 = vmatprep.subr.mxu0 0.0
      %1532 = vmatpush2.msra.mxu0 0.0
      %1533 = vmatprep.subr.mxu0 0.0
      %1534 = vmatpush2.msra.mxu0 0.0
      %1535 = vmatprep.mubr.f32.mxu0 0.0
      %v1536 = vand.u32 %v613, 4294901760
      %1537 = vmatmul.mubr.f32.gmra.mxu0 %v1536
      %v1538 = vpop.f32.mrf.mxu0
      %v1539 = vadd.f32 %v1394, %v1538
      %v1540 = vpop.f32.mrf.mxu0
      %v1541 = vadd.f32 %v1396, %v1540
      %1542 = vmatprep.mubr.f32.mxu0 0.0
      %v1543 = vand.u32 %v616, 4294901760
      %1544 = vmatmul.mubr.f32.gmra.mxu0 %v1543
      %v1545 = vpop.f32.mrf.mxu0
      %v1546 = vadd.f32 %v1405, %v1545
      %v1547 = vpop.f32.mrf.mxu0
      %v1548 = vadd.f32 %v1407, %v1547
      %1549 = vmatprep.mubr.f32.mxu0 0.0
      %v1550 = vand.u32 %v619, 4294901760
      %1551 = vmatmul.mubr.f32.gmra.mxu0 %v1550
      %v1552 = vpop.f32.mrf.mxu0
      %v1553 = vadd.f32 %v1416, %v1552
      %v1554 = vpop.f32.mrf.mxu0
      %v1555 = vadd.f32 %v1418, %v1554
      %1556 = vmatprep.mubr.f32.mxu0 0.0
      %v1557 = vand.u32 %v622, 4294901760
      %1558 = vmatmul.mubr.f32.gmra.mxu0 %v1557
      %v1559 = vpop.f32.mrf.mxu0
      %v1560 = vadd.f32 %v1427, %v1559
      %v1561 = vpop.f32.mrf.mxu0
      %v1562 = vadd.f32 %v1429, %v1561
      %1563 = vdwg.mxu0
      %1564 = vmatprep.subr.mxu0 0.0
      %1565 = vmatpush1.msra.mxu0 0.0
      %1566 = vmatprep.subr.mxu0 0.0
      %1567 = vmatpush1.msra.mxu0 0.0
      %1568 = vmatprep.subr.mxu0 0.0
      %1569 = vmatpush1.msra.mxu0 0.0
      %1570 = vmatprep.subr.mxu0 0.0
      %1571 = vmatpush1.msra.mxu0 0.0
      %1572 = vmatprep.subr.mxu0 0.0
      %1573 = vmatpush1.msra.mxu0 0.0
      %1574 = vmatprep.subr.mxu0 0.0
      %1575 = vmatpush1.msra.mxu0 0.0
      %1576 = vmatprep.subr.mxu0 0.0
      %1577 = vmatpush1.msra.mxu0 0.0
      %1578 = vmatprep.subr.mxu0 0.0
      %1579 = vmatpush1.msra.mxu0 0.0
      %1580 = vmatprep.subr.mxu0 0.0
      %1581 = vmatpush1.msra.mxu0 0.0
      %1582 = vmatprep.subr.mxu0 0.0
      %1583 = vmatpush1.msra.mxu0 0.0
      %1584 = vmatprep.subr.mxu0 0.0
      %1585 = vmatpush1.msra.mxu0 0.0
      %1586 = vmatprep.subr.mxu0 0.0
      %1587 = vmatpush1.msra.mxu0 0.0
      %v1588 = vand.u32 %v582, 4294901760
      %v1589 = vsub.f32 %v582, %v1588
      %1590 = vmatprep.subr.mxu0 %v1589
      %v1591 = vand.u32 %v581, 4294901760
      %v1592 = vsub.f32 %v581, %v1591
      %1593 = vmatpush1.msra.mxu0 %v1592
      %v1594 = vand.u32 %v578, 4294901760
      %v1595 = vsub.f32 %v578, %v1594
      %1596 = vmatprep.subr.mxu0 %v1595
      %v1597 = vand.u32 %v577, 4294901760
      %v1598 = vsub.f32 %v577, %v1597
      %1599 = vmatpush1.msra.mxu0 %v1598
      %v1600 = vand.u32 %v574, 4294901760
      %v1601 = vsub.f32 %v574, %v1600
      %1602 = vmatprep.subr.mxu0 %v1601
      %v1603 = vand.u32 %v573, 4294901760
      %v1604 = vsub.f32 %v573, %v1603
      %1605 = vmatpush1.msra.mxu0 %v1604
      %v1606 = vand.u32 %v570, 4294901760
      %v1607 = vsub.f32 %v570, %v1606
      %1608 = vmatprep.subr.mxu0 %v1607
      %v1609 = vand.u32 %v569, 4294901760
      %v1610 = vsub.f32 %v569, %v1609
      %1611 = vmatpush1.msra.mxu0 %v1610
      %1612 = vmatprep.subr.mxu0 0.0
      %1613 = vmatpush2.msra.mxu0 0.0
      %1614 = vmatprep.subr.mxu0 0.0
      %1615 = vmatpush2.msra.mxu0 0.0
      %1616 = vmatprep.subr.mxu0 0.0
      %1617 = vmatpush2.msra.mxu0 0.0
      %1618 = vmatprep.subr.mxu0 0.0
      %1619 = vmatpush2.msra.mxu0 0.0
      %1620 = vmatprep.subr.mxu0 0.0
      %1621 = vmatpush2.msra.mxu0 0.0
      %1622 = vmatprep.subr.mxu0 0.0
      %1623 = vmatpush2.msra.mxu0 0.0
      %1624 = vmatprep.subr.mxu0 0.0
      %1625 = vmatpush2.msra.mxu0 0.0
      %1626 = vmatprep.subr.mxu0 0.0
      %1627 = vmatpush2.msra.mxu0 0.0
      %1628 = vmatprep.subr.mxu0 0.0
      %1629 = vmatpush2.msra.mxu0 0.0
      %1630 = vmatprep.subr.mxu0 0.0
      %1631 = vmatpush2.msra.mxu0 0.0
      %1632 = vmatprep.subr.mxu0 0.0
      %1633 = vmatpush2.msra.mxu0 0.0
      %1634 = vmatprep.subr.mxu0 0.0
      %1635 = vmatpush2.msra.mxu0 0.0
      %1636 = vmatprep.subr.mxu0 0.0
      %1637 = vmatpush2.msra.mxu0 0.0
      %1638 = vmatprep.subr.mxu0 0.0
      %1639 = vmatpush2.msra.mxu0 0.0
      %1640 = vmatprep.subr.mxu0 0.0
      %1641 = vmatpush2.msra.mxu0 0.0
      %1642 = vmatprep.subr.mxu0 0.0
      %1643 = vmatpush2.msra.mxu0 0.0
      %1644 = vmatprep.mubr.f32.mxu0 0.0
      %v1645 = vand.u32 %v613, 4294901760
      %v1646 = vsub.f32 %v613, %v1645
      %1647 = vmatmul.mubr.f32.gmra.mxu0 %v1646
      %v1648 = vpop.f32.mrf.mxu0
      %v1649 = vadd.f32 %v1539, %v1648
      %v1650 = vpop.f32.mrf.mxu0
      %v1651 = vadd.f32 %v1541, %v1650
      %1652 = vmatprep.mubr.f32.mxu0 0.0
      %v1653 = vand.u32 %v616, 4294901760
      %v1654 = vsub.f32 %v616, %v1653
      %1655 = vmatmul.mubr.f32.gmra.mxu0 %v1654
      %v1656 = vpop.f32.mrf.mxu0
      %v1657 = vadd.f32 %v1546, %v1656
      %v1658 = vpop.f32.mrf.mxu0
      %v1659 = vadd.f32 %v1548, %v1658
      %1660 = vmatprep.mubr.f32.mxu0 0.0
      %v1661 = vand.u32 %v619, 4294901760
      %v1662 = vsub.f32 %v619, %v1661
      %1663 = vmatmul.mubr.f32.gmra.mxu0 %v1662
      %v1664 = vpop.f32.mrf.mxu0
      %v1665 = vadd.f32 %v1553, %v1664
      %v1666 = vpop.f32.mrf.mxu0
      %v1667 = vadd.f32 %v1555, %v1666
      %1668 = vmatprep.mubr.f32.mxu0 0.0
      %v1669 = vand.u32 %v622, 4294901760
      %v1670 = vsub.f32 %v622, %v1669
      %1671 = vmatmul.mubr.f32.gmra.mxu0 %v1670
      %v1672 = vpop.f32.mrf.mxu0
      %v1673 = vadd.f32 %v1560, %v1672
      %v1674 = vpop.f32.mrf.mxu0
      %v1675 = vadd.f32 %v1562, %v1674
      %1676 = vdwg.mxu0
      %1677 = vmatprep.subr.mxu0 0.0
      %1678 = vmatpush1.msra.mxu0 0.0
      %1679 = vmatprep.subr.mxu0 0.0
      %1680 = vmatpush1.msra.mxu0 0.0
      %1681 = vmatprep.subr.mxu0 0.0
      %1682 = vmatpush1.msra.mxu0 0.0
      %1683 = vmatprep.subr.mxu0 0.0
      %1684 = vmatpush1.msra.mxu0 0.0
      %1685 = vmatprep.subr.mxu0 0.0
      %1686 = vmatpush1.msra.mxu0 0.0
      %1687 = vmatprep.subr.mxu0 0.0
      %1688 = vmatpush1.msra.mxu0 0.0
      %1689 = vmatprep.subr.mxu0 0.0
      %1690 = vmatpush1.msra.mxu0 0.0
      %1691 = vmatprep.subr.mxu0 0.0
      %1692 = vmatpush1.msra.mxu0 0.0
      %1693 = vmatprep.subr.mxu0 0.0
      %1694 = vmatpush1.msra.mxu0 0.0
      %1695 = vmatprep.subr.mxu0 0.0
      %1696 = vmatpush1.msra.mxu0 0.0
      %1697 = vmatprep.subr.mxu0 0.0
      %1698 = vmatpush1.msra.mxu0 0.0
      %1699 = vmatprep.subr.mxu0 0.0
      %1700 = vmatpush1.msra.mxu0 0.0
      %v1701 = vand.u32 %v582, 4294901760
      %1702 = vmatprep.subr.mxu0 %v1701
      %v1703 = vand.u32 %v581, 4294901760
      %1704 = vmatpush1.msra.mxu0 %v1703
      %v1705 = vand.u32 %v578, 4294901760
      %1706 = vmatprep.subr.mxu0 %v1705
      %v1707 = vand.u32 %v577, 4294901760
      %1708 = vmatpush1.msra.mxu0 %v1707
      %v1709 = vand.u32 %v574, 4294901760
      %1710 = vmatprep.subr.mxu0 %v1709
      %v1711 = vand.u32 %v573, 4294901760
      %1712 = vmatpush1.msra.mxu0 %v1711
      %v1713 = vand.u32 %v570, 4294901760
      %1714 = vmatprep.subr.mxu0 %v1713
      %v1715 = vand.u32 %v569, 4294901760
      %1716 = vmatpush1.msra.mxu0 %v1715
      %1717 = vmatprep.subr.mxu0 0.0
      %1718 = vmatpush2.msra.mxu0 0.0
      %1719 = vmatprep.subr.mxu0 0.0
      %1720 = vmatpush2.msra.mxu0 0.0
      %1721 = vmatprep.subr.mxu0 0.0
      %1722 = vmatpush2.msra.mxu0 0.0
      %1723 = vmatprep.subr.mxu0 0.0
      %1724 = vmatpush2.msra.mxu0 0.0
      %1725 = vmatprep.subr.mxu0 0.0
      %1726 = vmatpush2.msra.mxu0 0.0
      %1727 = vmatprep.subr.mxu0 0.0
      %1728 = vmatpush2.msra.mxu0 0.0
      %1729 = vmatprep.subr.mxu0 0.0
      %1730 = vmatpush2.msra.mxu0 0.0
      %1731 = vmatprep.subr.mxu0 0.0
      %1732 = vmatpush2.msra.mxu0 0.0
      %1733 = vmatprep.subr.mxu0 0.0
      %1734 = vmatpush2.msra.mxu0 0.0
      %1735 = vmatprep.subr.mxu0 0.0
      %1736 = vmatpush2.msra.mxu0 0.0
      %1737 = vmatprep.subr.mxu0 0.0
      %1738 = vmatpush2.msra.mxu0 0.0
      %1739 = vmatprep.subr.mxu0 0.0
      %1740 = vmatpush2.msra.mxu0 0.0
      %1741 = vmatprep.subr.mxu0 0.0
      %1742 = vmatpush2.msra.mxu0 0.0
      %1743 = vmatprep.subr.mxu0 0.0
      %1744 = vmatpush2.msra.mxu0 0.0
      %1745 = vmatprep.subr.mxu0 0.0
      %1746 = vmatpush2.msra.mxu0 0.0
      %1747 = vmatprep.subr.mxu0 0.0
      %1748 = vmatpush2.msra.mxu0 0.0
      %1749 = vmatprep.mubr.f32.mxu0 0.0
      %v1750 = vand.u32 %v613, 4294901760
      %v1751 = vsub.f32 %v613, %v1750
      %v1752 = vand.u32 %v1751, 4294901760
      %1753 = vmatmul.mubr.f32.gmra.mxu0 %v1752
      %v1754 = vpop.f32.mrf.mxu0
      %v1755 = vadd.f32 %v1649, %v1754
      %v1756 = vpop.f32.mrf.mxu0
      %v1757 = vadd.f32 %v1651, %v1756
      %1758 = vmatprep.mubr.f32.mxu0 0.0
      %v1759 = vand.u32 %v616, 4294901760
      %v1760 = vsub.f32 %v616, %v1759
      %v1761 = vand.u32 %v1760, 4294901760
      %1762 = vmatmul.mubr.f32.gmra.mxu0 %v1761
      %v1763 = vpop.f32.mrf.mxu0
      %v1764 = vadd.f32 %v1657, %v1763
      %v1765 = vpop.f32.mrf.mxu0
      %v1766 = vadd.f32 %v1659, %v1765
      %1767 = vmatprep.mubr.f32.mxu0 0.0
      %v1768 = vand.u32 %v619, 4294901760
      %v1769 = vsub.f32 %v619, %v1768
      %v1770 = vand.u32 %v1769, 4294901760
      %1771 = vmatmul.mubr.f32.gmra.mxu0 %v1770
      %v1772 = vpop.f32.mrf.mxu0
      %v1773 = vadd.f32 %v1665, %v1772
      %v1774 = vpop.f32.mrf.mxu0
      %v1775 = vadd.f32 %v1667, %v1774
      %1776 = vmatprep.mubr.f32.mxu0 0.0
      %v1777 = vand.u32 %v622, 4294901760
      %v1778 = vsub.f32 %v622, %v1777
      %v1779 = vand.u32 %v1778, 4294901760
      %1780 = vmatmul.mubr.f32.gmra.mxu0 %v1779
      %v1781 = vpop.f32.mrf.mxu0
      %v1782 = vadd.f32 %v1673, %v1781
      %v1783 = vpop.f32.mrf.mxu0
      %v1784 = vadd.f32 %v1675, %v1783
      %1785 = vdwg.mxu0
      %1786 = vmatprep.subr.mxu0 0.0
      %1787 = vmatpush1.msra.mxu0 0.0
      %1788 = vmatprep.subr.mxu0 0.0
      %1789 = vmatpush1.msra.mxu0 0.0
      %1790 = vmatprep.subr.mxu0 0.0
      %1791 = vmatpush1.msra.mxu0 0.0
      %1792 = vmatprep.subr.mxu0 0.0
      %1793 = vmatpush1.msra.mxu0 0.0
      %1794 = vmatprep.subr.mxu0 0.0
      %1795 = vmatpush1.msra.mxu0 0.0
      %1796 = vmatprep.subr.mxu0 0.0
      %1797 = vmatpush1.msra.mxu0 0.0
      %1798 = vmatprep.subr.mxu0 0.0
      %1799 = vmatpush1.msra.mxu0 0.0
      %1800 = vmatprep.subr.mxu0 0.0
      %1801 = vmatpush1.msra.mxu0 0.0
      %1802 = vmatprep.subr.mxu0 0.0
      %1803 = vmatpush1.msra.mxu0 0.0
      %1804 = vmatprep.subr.mxu0 0.0
      %1805 = vmatpush1.msra.mxu0 0.0
      %1806 = vmatprep.subr.mxu0 0.0
      %1807 = vmatpush1.msra.mxu0 0.0
      %1808 = vmatprep.subr.mxu0 0.0
      %1809 = vmatpush1.msra.mxu0 0.0
      %v1810 = vand.u32 %v582, 4294901760
      %v1811 = vsub.f32 %v582, %v1810
      %v1812 = vand.u32 %v1811, 4294901760
      %1813 = vmatprep.subr.mxu0 %v1812
      %v1814 = vand.u32 %v581, 4294901760
      %v1815 = vsub.f32 %v581, %v1814
      %v1816 = vand.u32 %v1815, 4294901760
      %1817 = vmatpush1.msra.mxu0 %v1816
      %v1818 = vand.u32 %v578, 4294901760
      %v1819 = vsub.f32 %v578, %v1818
      %v1820 = vand.u32 %v1819, 4294901760
      %1821 = vmatprep.subr.mxu0 %v1820
      %v1822 = vand.u32 %v577, 4294901760
      %v1823 = vsub.f32 %v577, %v1822
      %v1824 = vand.u32 %v1823, 4294901760
      %1825 = vmatpush1.msra.mxu0 %v1824
      %v1826 = vand.u32 %v574, 4294901760
      %v1827 = vsub.f32 %v574, %v1826
      %v1828 = vand.u32 %v1827, 4294901760
      %1829 = vmatprep.subr.mxu0 %v1828
      %v1830 = vand.u32 %v573, 4294901760
      %v1831 = vsub.f32 %v573, %v1830
      %v1832 = vand.u32 %v1831, 4294901760
      %1833 = vmatpush1.msra.mxu0 %v1832
      %v1834 = vand.u32 %v570, 4294901760
      %v1835 = vsub.f32 %v570, %v1834
      %v1836 = vand.u32 %v1835, 4294901760
      %1837 = vmatprep.subr.mxu0 %v1836
      %v1838 = vand.u32 %v569, 4294901760
      %v1839 = vsub.f32 %v569, %v1838
      %v1840 = vand.u32 %v1839, 4294901760
      %1841 = vmatpush1.msra.mxu0 %v1840
      %1842 = vmatprep.subr.mxu0 0.0
      %1843 = vmatpush2.msra.mxu0 0.0
      %1844 = vmatprep.subr.mxu0 0.0
      %1845 = vmatpush2.msra.mxu0 0.0
      %1846 = vmatprep.subr.mxu0 0.0
      %1847 = vmatpush2.msra.mxu0 0.0
      %1848 = vmatprep.subr.mxu0 0.0
      %1849 = vmatpush2.msra.mxu0 0.0
      %1850 = vmatprep.subr.mxu0 0.0
      %1851 = vmatpush2.msra.mxu0 0.0
      %1852 = vmatprep.subr.mxu0 0.0
      %1853 = vmatpush2.msra.mxu0 0.0
      %1854 = vmatprep.subr.mxu0 0.0
      %1855 = vmatpush2.msra.mxu0 0.0
      %1856 = vmatprep.subr.mxu0 0.0
      %1857 = vmatpush2.msra.mxu0 0.0
      %1858 = vmatprep.subr.mxu0 0.0
      %1859 = vmatpush2.msra.mxu0 0.0
      %1860 = vmatprep.subr.mxu0 0.0
      %1861 = vmatpush2.msra.mxu0 0.0
      %1862 = vmatprep.subr.mxu0 0.0
      %1863 = vmatpush2.msra.mxu0 0.0
      %1864 = vmatprep.subr.mxu0 0.0
      %1865 = vmatpush2.msra.mxu0 0.0
      %1866 = vmatprep.subr.mxu0 0.0
      %1867 = vmatpush2.msra.mxu0 0.0
      %1868 = vmatprep.subr.mxu0 0.0
      %1869 = vmatpush2.msra.mxu0 0.0
      %1870 = vmatprep.subr.mxu0 0.0
      %1871 = vmatpush2.msra.mxu0 0.0
      %1872 = vmatprep.subr.mxu0 0.0
      %1873 = vmatpush2.msra.mxu0 0.0
      %1874 = vmatprep.mubr.f32.mxu0 0.0
      %v1875 = vand.u32 %v613, 4294901760
      %1876 = vmatmul.mubr.f32.gmra.mxu0 %v1875
      %v1877 = vpop.f32.mrf.mxu0
      %v1878 = vadd.f32 %v1755, %v1877
      %v1879 = vpop.f32.mrf.mxu0
      %v1880 = vadd.f32 %v1757, %v1879
      %1881 = vmatprep.mubr.f32.mxu0 0.0
      %v1882 = vand.u32 %v616, 4294901760
      %1883 = vmatmul.mubr.f32.gmra.mxu0 %v1882
      %v1884 = vpop.f32.mrf.mxu0
      %v1885 = vadd.f32 %v1764, %v1884
      %v1886 = vpop.f32.mrf.mxu0
      %v1887 = vadd.f32 %v1766, %v1886
      %1888 = vmatprep.mubr.f32.mxu0 0.0
      %v1889 = vand.u32 %v619, 4294901760
      %1890 = vmatmul.mubr.f32.gmra.mxu0 %v1889
      %v1891 = vpop.f32.mrf.mxu0
      %v1892 = vadd.f32 %v1773, %v1891
      %v1893 = vpop.f32.mrf.mxu0
      %v1894 = vadd.f32 %v1775, %v1893
      %1895 = vmatprep.mubr.f32.mxu0 0.0
      %v1896 = vand.u32 %v622, 4294901760
      %1897 = vmatmul.mubr.f32.gmra.mxu0 %v1896
      %v1898 = vpop.f32.mrf.mxu0
      %v1899 = vadd.f32 %v1782, %v1898
      %v1900 = vpop.f32.mrf.mxu0
      %v1901 = vadd.f32 %v1784, %v1900
      %1902 = vdwg.mxu0
      %1903 = vmatprep.subr.mxu0 0.0
      %1904 = vmatpush1.msra.mxu0 0.0
      %1905 = vmatprep.subr.mxu0 0.0
      %1906 = vmatpush1.msra.mxu0 0.0
      %1907 = vmatprep.subr.mxu0 0.0
      %1908 = vmatpush1.msra.mxu0 0.0
      %1909 = vmatprep.subr.mxu0 0.0
      %1910 = vmatpush1.msra.mxu0 0.0
      %1911 = vmatprep.subr.mxu0 0.0
      %1912 = vmatpush1.msra.mxu0 0.0
      %1913 = vmatprep.subr.mxu0 0.0
      %1914 = vmatpush1.msra.mxu0 0.0
      %1915 = vmatprep.subr.mxu0 0.0
      %1916 = vmatpush1.msra.mxu0 0.0
      %1917 = vmatprep.subr.mxu0 0.0
      %1918 = vmatpush1.msra.mxu0 0.0
      %1919 = vmatprep.subr.mxu0 0.0
      %1920 = vmatpush1.msra.mxu0 0.0
      %1921 = vmatprep.subr.mxu0 0.0
      %1922 = vmatpush1.msra.mxu0 0.0
      %1923 = vmatprep.subr.mxu0 0.0
      %1924 = vmatpush1.msra.mxu0 0.0
      %1925 = vmatprep.subr.mxu0 0.0
      %1926 = vmatpush1.msra.mxu0 0.0
      %v1927 = vand.u32 %v582, 4294901760
      %1928 = vmatprep.subr.mxu0 %v1927
      %v1929 = vand.u32 %v581, 4294901760
      %1930 = vmatpush1.msra.mxu0 %v1929
      %v1931 = vand.u32 %v578, 4294901760
      %1932 = vmatprep.subr.mxu0 %v1931
      %v1933 = vand.u32 %v577, 4294901760
      %1934 = vmatpush1.msra.mxu0 %v1933
      %v1935 = vand.u32 %v574, 4294901760
      %1936 = vmatprep.subr.mxu0 %v1935
      %v1937 = vand.u32 %v573, 4294901760
      %1938 = vmatpush1.msra.mxu0 %v1937
      %v1939 = vand.u32 %v570, 4294901760
      %1940 = vmatprep.subr.mxu0 %v1939
      %v1941 = vand.u32 %v569, 4294901760
      %1942 = vmatpush1.msra.mxu0 %v1941
      %1943 = vmatprep.subr.mxu0 0.0
      %1944 = vmatpush2.msra.mxu0 0.0
      %1945 = vmatprep.subr.mxu0 0.0
      %1946 = vmatpush2.msra.mxu0 0.0
      %1947 = vmatprep.subr.mxu0 0.0
      %1948 = vmatpush2.msra.mxu0 0.0
      %1949 = vmatprep.subr.mxu0 0.0
      %1950 = vmatpush2.msra.mxu0 0.0
      %1951 = vmatprep.subr.mxu0 0.0
      %1952 = vmatpush2.msra.mxu0 0.0
      %1953 = vmatprep.subr.mxu0 0.0
      %1954 = vmatpush2.msra.mxu0 0.0
      %1955 = vmatprep.subr.mxu0 0.0
      %1956 = vmatpush2.msra.mxu0 0.0
      %1957 = vmatprep.subr.mxu0 0.0
      %1958 = vmatpush2.msra.mxu0 0.0
      %1959 = vmatprep.subr.mxu0 0.0
      %1960 = vmatpush2.msra.mxu0 0.0
      %1961 = vmatprep.subr.mxu0 0.0
      %1962 = vmatpush2.msra.mxu0 0.0
      %1963 = vmatprep.subr.mxu0 0.0
      %1964 = vmatpush2.msra.mxu0 0.0
      %1965 = vmatprep.subr.mxu0 0.0
      %1966 = vmatpush2.msra.mxu0 0.0
      %1967 = vmatprep.subr.mxu0 0.0
      %1968 = vmatpush2.msra.mxu0 0.0
      %1969 = vmatprep.subr.mxu0 0.0
      %1970 = vmatpush2.msra.mxu0 0.0
      %1971 = vmatprep.subr.mxu0 0.0
      %1972 = vmatpush2.msra.mxu0 0.0
      %1973 = vmatprep.subr.mxu0 0.0
      %1974 = vmatpush2.msra.mxu0 0.0
      %1975 = vmatprep.mubr.f32.mxu0 0.0
      %v1976 = vand.u32 %v613, 4294901760
      %1977 = vmatmul.mubr.f32.gmra.mxu0 %v1976
      %v1978 = vpop.f32.mrf.mxu0
      %v1979 = vadd.f32 %v1878, %v1978
      %v1980 = vpop.f32.mrf.mxu0
      %v1981 = vadd.f32 %v1880, %v1980
      %1982 = vmatprep.mubr.f32.mxu0 0.0
      %v1983 = vand.u32 %v616, 4294901760
      %1984 = vmatmul.mubr.f32.gmra.mxu0 %v1983
      %v1985 = vpop.f32.mrf.mxu0
      %v1986 = vadd.f32 %v1885, %v1985
      %v1987 = vpop.f32.mrf.mxu0
      %v1988 = vadd.f32 %v1887, %v1987
      %1989 = vmatprep.mubr.f32.mxu0 0.0
      %v1990 = vand.u32 %v619, 4294901760
      %1991 = vmatmul.mubr.f32.gmra.mxu0 %v1990
      %v1992 = vpop.f32.mrf.mxu0
      %v1993 = vadd.f32 %v1892, %v1992
      %v1994 = vpop.f32.mrf.mxu0
      %v1995 = vadd.f32 %v1894, %v1994
      %1996 = vmatprep.mubr.f32.mxu0 0.0
      %v1997 = vand.u32 %v622, 4294901760
      %1998 = vmatmul.mubr.f32.gmra.mxu0 %v1997
      %v1999 = vpop.f32.mrf.mxu0
      %v2000 = vadd.f32 %v1899, %v1999
      %v2001 = vpop.f32.mrf.mxu0
      %v2002 = vadd.f32 %v1901, %v2001
      %2003 = vdwg.mxu0
      %v2004 = vmax.f32 %v1289, 0.0
      %v2005 = vmax.f32 %v1291, 0.0
      %v2006 = vmax.f32 %v1979, 0.0
      %v2007 = vmax.f32 %v1981, 0.0
      %v2008 = vmax.f32 %v1296, 0.0
      %v2009 = vmax.f32 %v1298, 0.0
      %v2010 = vmax.f32 %v1986, 0.0
      %v2011 = vmax.f32 %v1988, 0.0
      %v2012 = vmax.f32 %v1303, 0.0
      %v2013 = vmax.f32 %v1305, 0.0
      %v2014 = vmax.f32 %v1993, 0.0
      %v2015 = vmax.f32 %v1995, 0.0
      %v2016 = vmax.f32 %v1310, 0.0
      %v2017 = vmax.f32 %v1312, 0.0
      %v2018 = vmax.f32 %v2000, 0.0
      %v2019 = vmax.f32 %v2002, 0.0
      %v2020 = vld [vmem:[%s4] sm:$0xff]
      %v2021 = vld [vmem:[%s4 + $0x8] sm:$0xff]
      %v2022 = vld [vmem:[%s4 + $0x10] sm:$0xff]
      %v2023 = vld [vmem:[%s4 + $0x18] sm:$0xff]
      %s2024 = scalar_lea.vmem %s6, 32
      %v2025 = vld [vmem:[%s2024] sm:$0xff]
      %v2026 = vld [vmem:[%s2024 + $0x8] sm:$0xff]
      %v2027 = vld [vmem:[%s2024 + $0x10] sm:$0xff]
      %v2028 = vld [vmem:[%s2024 + $0x18] sm:$0xff]
      %2030 = vset.pattern.permute.xlu0 0
      %2031 = vperm.xlu0 %2030, %v2025
      %v2032 = vpop.permute.xlu0 %2031
      %2035 = vset.pattern.permute.xlu0 0
      %2036 = vperm.xlu0 %2035, %v2026
      %v2037 = vpop.permute.xlu0 %2036
      %2040 = vset.pattern.permute.xlu0 0
      %2041 = vperm.xlu0 %2040, %v2027
      %v2042 = vpop.permute.xlu0 %2041
      %2045 = vset.pattern.permute.xlu0 0
      %2046 = vperm.xlu0 %2045, %v2028
      %v2047 = vpop.permute.xlu0 %2046
      %v2050 = vsel %vm611, %v2020, 0
      %v2053 = vsel %vm611, %v2021, 0
      %v2056 = vsel %vm611, %v2022, 0
      %v2059 = vsel %vm611, %v2023, 0
      %2061 = vmatprep.subr.mxu0 0.0
      %2062 = vmatpush1.msra.mxu0 0.0
      %2063 = vmatprep.subr.mxu0 0.0
      %2064 = vmatpush1.msra.mxu0 0.0
      %2065 = vmatprep.subr.mxu0 0.0
      %2066 = vmatpush1.msra.mxu0 0.0
      %2067 = vmatprep.subr.mxu0 0.0
      %2068 = vmatpush1.msra.mxu0 0.0
      %2069 = vmatprep.subr.mxu0 0.0
      %2070 = vmatpush1.msra.mxu0 0.0
      %2071 = vmatprep.subr.mxu0 0.0
      %2072 = vmatpush1.msra.mxu0 0.0
      %2073 = vmatprep.subr.mxu0 0.0
      %2074 = vmatpush1.msra.mxu0 0.0
      %2075 = vmatprep.subr.mxu0 0.0
      %2076 = vmatpush1.msra.mxu0 0.0
      %2077 = vmatprep.subr.mxu0 0.0
      %2078 = vmatpush1.msra.mxu0 0.0
      %2079 = vmatprep.subr.mxu0 0.0
      %2080 = vmatpush1.msra.mxu0 0.0
      %2081 = vmatprep.subr.mxu0 0.0
      %2082 = vmatpush1.msra.mxu0 0.0
      %2083 = vmatprep.subr.mxu0 0.0
      %2084 = vmatpush1.msra.mxu0 0.0
      %v2085 = vand.u32 %v2017, 4294901760
      %2086 = vmatprep.subr.mxu0 %v2085
      %v2087 = vand.u32 %v2016, 4294901760
      %2088 = vmatpush1.msra.mxu0 %v2087
      %v2089 = vand.u32 %v2013, 4294901760
      %2090 = vmatprep.subr.mxu0 %v2089
      %v2091 = vand.u32 %v2012, 4294901760
      %2092 = vmatpush1.msra.mxu0 %v2091
      %v2093 = vand.u32 %v2009, 4294901760
      %2094 = vmatprep.subr.mxu0 %v2093
      %v2095 = vand.u32 %v2008, 4294901760
      %2096 = vmatpush1.msra.mxu0 %v2095
      %v2097 = vand.u32 %v2005, 4294901760
      %2098 = vmatprep.subr.mxu0 %v2097
      %v2099 = vand.u32 %v2004, 4294901760
      %2100 = vmatpush1.msra.mxu0 %v2099
      %2101 = vmatprep.subr.mxu0 0.0
      %2102 = vmatpush2.msra.mxu0 0.0
      %2103 = vmatprep.subr.mxu0 0.0
      %2104 = vmatpush2.msra.mxu0 0.0
      %2105 = vmatprep.subr.mxu0 0.0
      %2106 = vmatpush2.msra.mxu0 0.0
      %2107 = vmatprep.subr.mxu0 0.0
      %2108 = vmatpush2.msra.mxu0 0.0
      %2109 = vmatprep.subr.mxu0 0.0
      %2110 = vmatpush2.msra.mxu0 0.0
      %2111 = vmatprep.subr.mxu0 0.0
      %2112 = vmatpush2.msra.mxu0 0.0
      %2113 = vmatprep.subr.mxu0 0.0
      %2114 = vmatpush2.msra.mxu0 0.0
      %2115 = vmatprep.subr.mxu0 0.0
      %2116 = vmatpush2.msra.mxu0 0.0
      %2117 = vmatprep.subr.mxu0 0.0
      %2118 = vmatpush2.msra.mxu0 0.0
      %2119 = vmatprep.subr.mxu0 0.0
      %2120 = vmatpush2.msra.mxu0 0.0
      %2121 = vmatprep.subr.mxu0 0.0
      %2122 = vmatpush2.msra.mxu0 0.0
      %2123 = vmatprep.subr.mxu0 0.0
      %2124 = vmatpush2.msra.mxu0 0.0
      %2125 = vmatprep.subr.mxu0 0.0
      %2126 = vmatpush2.msra.mxu0 0.0
      %2127 = vmatprep.subr.mxu0 0.0
      %2128 = vmatpush2.msra.mxu0 0.0
      %2129 = vmatprep.subr.mxu0 0.0
      %2130 = vmatpush2.msra.mxu0 0.0
      %2131 = vmatprep.subr.mxu0 0.0
      %2132 = vmatpush2.msra.mxu0 0.0
      %2133 = vmatprep.mubr.f32.mxu0 0.0
      %v2134 = vand.u32 %v2050, 4294901760
      %v2135 = vsub.f32 %v2050, %v2134
      %v2136 = vand.u32 %v2135, 4294901760
      %v2137 = vsub.f32 %v2135, %v2136
      %v2138 = vand.u32 %v2137, 4294901760
      %2139 = vmatmul.mubr.f32.gmra.mxu0 %v2138
      %v2140 = vpop.f32.mrf.mxu0
      %v2141 = vadd.f32 %v2032, %v2140
      %v2142 = vpop.f32.mrf.mxu0
      %v2143 = vadd.f32 %v2032, %v2142
      %2144 = vmatprep.mubr.f32.mxu0 0.0
      %v2145 = vand.u32 %v2053, 4294901760
      %v2146 = vsub.f32 %v2053, %v2145
      %v2147 = vand.u32 %v2146, 4294901760
      %v2148 = vsub.f32 %v2146, %v2147
      %v2149 = vand.u32 %v2148, 4294901760
      %2150 = vmatmul.mubr.f32.gmra.mxu0 %v2149
      %v2151 = vpop.f32.mrf.mxu0
      %v2152 = vadd.f32 %v2037, %v2151
      %v2153 = vpop.f32.mrf.mxu0
      %v2154 = vadd.f32 %v2037, %v2153
      %2155 = vmatprep.mubr.f32.mxu0 0.0
      %v2156 = vand.u32 %v2056, 4294901760
      %v2157 = vsub.f32 %v2056, %v2156
      %v2158 = vand.u32 %v2157, 4294901760
      %v2159 = vsub.f32 %v2157, %v2158
      %v2160 = vand.u32 %v2159, 4294901760
      %2161 = vmatmul.mubr.f32.gmra.mxu0 %v2160
      %v2162 = vpop.f32.mrf.mxu0
      %v2163 = vadd.f32 %v2042, %v2162
      %v2164 = vpop.f32.mrf.mxu0
      %v2165 = vadd.f32 %v2042, %v2164
      %2166 = vmatprep.mubr.f32.mxu0 0.0
      %v2167 = vand.u32 %v2059, 4294901760
      %v2168 = vsub.f32 %v2059, %v2167
      %v2169 = vand.u32 %v2168, 4294901760
      %v2170 = vsub.f32 %v2168, %v2169
      %v2171 = vand.u32 %v2170, 4294901760
      %2172 = vmatmul.mubr.f32.gmra.mxu0 %v2171
      %v2173 = vpop.f32.mrf.mxu0
      %v2174 = vadd.f32 %v2047, %v2173
      %v2175 = vpop.f32.mrf.mxu0
      %v2176 = vadd.f32 %v2047, %v2175
      %2177 = vdwg.mxu0
      %2178 = vmatprep.subr.mxu0 0.0
      %2179 = vmatpush1.msra.mxu0 0.0
      %2180 = vmatprep.subr.mxu0 0.0
      %2181 = vmatpush1.msra.mxu0 0.0
      %2182 = vmatprep.subr.mxu0 0.0
      %2183 = vmatpush1.msra.mxu0 0.0
      %2184 = vmatprep.subr.mxu0 0.0
      %2185 = vmatpush1.msra.mxu0 0.0
      %2186 = vmatprep.subr.mxu0 0.0
      %2187 = vmatpush1.msra.mxu0 0.0
      %2188 = vmatprep.subr.mxu0 0.0
      %2189 = vmatpush1.msra.mxu0 0.0
      %2190 = vmatprep.subr.mxu0 0.0
      %2191 = vmatpush1.msra.mxu0 0.0
      %2192 = vmatprep.subr.mxu0 0.0
      %2193 = vmatpush1.msra.mxu0 0.0
      %2194 = vmatprep.subr.mxu0 0.0
      %2195 = vmatpush1.msra.mxu0 0.0
      %2196 = vmatprep.subr.mxu0 0.0
      %2197 = vmatpush1.msra.mxu0 0.0
      %2198 = vmatprep.subr.mxu0 0.0
      %2199 = vmatpush1.msra.mxu0 0.0
      %2200 = vmatprep.subr.mxu0 0.0
      %2201 = vmatpush1.msra.mxu0 0.0
      %v2202 = vand.u32 %v2017, 4294901760
      %v2203 = vsub.f32 %v2017, %v2202
      %v2204 = vand.u32 %v2203, 4294901760
      %v2205 = vsub.f32 %v2203, %v2204
      %v2206 = vand.u32 %v2205, 4294901760
      %2207 = vmatprep.subr.mxu0 %v2206
      %v2208 = vand.u32 %v2016, 4294901760
      %v2209 = vsub.f32 %v2016, %v2208
      %v2210 = vand.u32 %v2209, 4294901760
      %v2211 = vsub.f32 %v2209, %v2210
      %v2212 = vand.u32 %v2211, 4294901760
      %2213 = vmatpush1.msra.mxu0 %v2212
      %v2214 = vand.u32 %v2013, 4294901760
      %v2215 = vsub.f32 %v2013, %v2214
      %v2216 = vand.u32 %v2215, 4294901760
      %v2217 = vsub.f32 %v2215, %v2216
      %v2218 = vand.u32 %v2217, 4294901760
      %2219 = vmatprep.subr.mxu0 %v2218
      %v2220 = vand.u32 %v2012, 4294901760
      %v2221 = vsub.f32 %v2012, %v2220
      %v2222 = vand.u32 %v2221, 4294901760
      %v2223 = vsub.f32 %v2221, %v2222
      %v2224 = vand.u32 %v2223, 4294901760
      %2225 = vmatpush1.msra.mxu0 %v2224
      %v2226 = vand.u32 %v2009, 4294901760
      %v2227 = vsub.f32 %v2009, %v2226
      %v2228 = vand.u32 %v2227, 4294901760
      %v2229 = vsub.f32 %v2227, %v2228
      %v2230 = vand.u32 %v2229, 4294901760
      %2231 = vmatprep.subr.mxu0 %v2230
      %v2232 = vand.u32 %v2008, 4294901760
      %v2233 = vsub.f32 %v2008, %v2232
      %v2234 = vand.u32 %v2233, 4294901760
      %v2235 = vsub.f32 %v2233, %v2234
      %v2236 = vand.u32 %v2235, 4294901760
      %2237 = vmatpush1.msra.mxu0 %v2236
      %v2238 = vand.u32 %v2005, 4294901760
      %v2239 = vsub.f32 %v2005, %v2238
      %v2240 = vand.u32 %v2239, 4294901760
      %v2241 = vsub.f32 %v2239, %v2240
      %v2242 = vand.u32 %v2241, 4294901760
      %2243 = vmatprep.subr.mxu0 %v2242
      %v2244 = vand.u32 %v2004, 4294901760
      %v2245 = vsub.f32 %v2004, %v2244
      %v2246 = vand.u32 %v2245, 4294901760
      %v2247 = vsub.f32 %v2245, %v2246
      %v2248 = vand.u32 %v2247, 4294901760
      %2249 = vmatpush1.msra.mxu0 %v2248
      %2250 = vmatprep.subr.mxu0 0.0
      %2251 = vmatpush2.msra.mxu0 0.0
      %2252 = vmatprep.subr.mxu0 0.0
      %2253 = vmatpush2.msra.mxu0 0.0
      %2254 = vmatprep.subr.mxu0 0.0
      %2255 = vmatpush2.msra.mxu0 0.0
      %2256 = vmatprep.subr.mxu0 0.0
      %2257 = vmatpush2.msra.mxu0 0.0
      %2258 = vmatprep.subr.mxu0 0.0
      %2259 = vmatpush2.msra.mxu0 0.0
      %2260 = vmatprep.subr.mxu0 0.0
      %2261 = vmatpush2.msra.mxu0 0.0
      %2262 = vmatprep.subr.mxu0 0.0
      %2263 = vmatpush2.msra.mxu0 0.0
      %2264 = vmatprep.subr.mxu0 0.0
      %2265 = vmatpush2.msra.mxu0 0.0
      %2266 = vmatprep.subr.mxu0 0.0
      %2267 = vmatpush2.msra.mxu0 0.0
      %2268 = vmatprep.subr.mxu0 0.0
      %2269 = vmatpush2.msra.mxu0 0.0
      %2270 = vmatprep.subr.mxu0 0.0
      %2271 = vmatpush2.msra.mxu0 0.0
      %2272 = vmatprep.subr.mxu0 0.0
      %2273 = vmatpush2.msra.mxu0 0.0
      %2274 = vmatprep.subr.mxu0 0.0
      %2275 = vmatpush2.msra.mxu0 0.0
      %2276 = vmatprep.subr.mxu0 0.0
      %2277 = vmatpush2.msra.mxu0 0.0
      %2278 = vmatprep.subr.mxu0 0.0
      %2279 = vmatpush2.msra.mxu0 0.0
      %2280 = vmatprep.subr.mxu0 0.0
      %2281 = vmatpush2.msra.mxu0 0.0
      %2282 = vmatprep.mubr.f32.mxu0 0.0
      %v2283 = vand.u32 %v2050, 4294901760
      %2284 = vmatmul.mubr.f32.gmra.mxu0 %v2283
      %v2285 = vpop.f32.mrf.mxu0
      %v2286 = vadd.f32 %v2141, %v2285
      %v2287 = vpop.f32.mrf.mxu0
      %v2288 = vadd.f32 %v2143, %v2287
      %2289 = vmatprep.mubr.f32.mxu0 0.0
      %v2290 = vand.u32 %v2053, 4294901760
      %2291 = vmatmul.mubr.f32.gmra.mxu0 %v2290
      %v2292 = vpop.f32.mrf.mxu0
      %v2293 = vadd.f32 %v2152, %v2292
      %v2294 = vpop.f32.mrf.mxu0
      %v2295 = vadd.f32 %v2154, %v2294
      %2296 = vmatprep.mubr.f32.mxu0 0.0
      %v2297 = vand.u32 %v2056, 4294901760
      %2298 = vmatmul.mubr.f32.gmra.mxu0 %v2297
      %v2299 = vpop.f32.mrf.mxu0
      %v2300 = vadd.f32 %v2163, %v2299
      %v2301 = vpop.f32.mrf.mxu0
      %v2302 = vadd.f32 %v2165, %v2301
      %2303 = vmatprep.mubr.f32.mxu0 0.0
      %v2304 = vand.u32 %v2059, 4294901760
      %2305 = vmatmul.mubr.f32.gmra.mxu0 %v2304
      %v2306 = vpop.f32.mrf.mxu0
      %v2307 = vadd.f32 %v2174, %v2306
      %v2308 = vpop.f32.mrf.mxu0
      %v2309 = vadd.f32 %v2176, %v2308
      %2310 = vdwg.mxu0
      %2311 = vmatprep.subr.mxu0 0.0
      %2312 = vmatpush1.msra.mxu0 0.0
      %2313 = vmatprep.subr.mxu0 0.0
      %2314 = vmatpush1.msra.mxu0 0.0
      %2315 = vmatprep.subr.mxu0 0.0
      %2316 = vmatpush1.msra.mxu0 0.0
      %2317 = vmatprep.subr.mxu0 0.0
      %2318 = vmatpush1.msra.mxu0 0.0
      %2319 = vmatprep.subr.mxu0 0.0
      %2320 = vmatpush1.msra.mxu0 0.0
      %2321 = vmatprep.subr.mxu0 0.0
      %2322 = vmatpush1.msra.mxu0 0.0
      %2323 = vmatprep.subr.mxu0 0.0
      %2324 = vmatpush1.msra.mxu0 0.0
      %2325 = vmatprep.subr.mxu0 0.0
      %2326 = vmatpush1.msra.mxu0 0.0
      %2327 = vmatprep.subr.mxu0 0.0
      %2328 = vmatpush1.msra.mxu0 0.0
      %2329 = vmatprep.subr.mxu0 0.0
      %2330 = vmatpush1.msra.mxu0 0.0
      %2331 = vmatprep.subr.mxu0 0.0
      %2332 = vmatpush1.msra.mxu0 0.0
      %2333 = vmatprep.subr.mxu0 0.0
      %2334 = vmatpush1.msra.mxu0 0.0
      %v2335 = vand.u32 %v2017, 4294901760
      %v2336 = vsub.f32 %v2017, %v2335
      %2337 = vmatprep.subr.mxu0 %v2336
      %v2338 = vand.u32 %v2016, 4294901760
      %v2339 = vsub.f32 %v2016, %v2338
      %2340 = vmatpush1.msra.mxu0 %v2339
      %v2341 = vand.u32 %v2013, 4294901760
      %v2342 = vsub.f32 %v2013, %v2341
      %2343 = vmatprep.subr.mxu0 %v2342
      %v2344 = vand.u32 %v2012, 4294901760
      %v2345 = vsub.f32 %v2012, %v2344
      %2346 = vmatpush1.msra.mxu0 %v2345
      %v2347 = vand.u32 %v2009, 4294901760
      %v2348 = vsub.f32 %v2009, %v2347
      %2349 = vmatprep.subr.mxu0 %v2348
      %v2350 = vand.u32 %v2008, 4294901760
      %v2351 = vsub.f32 %v2008, %v2350
      %2352 = vmatpush1.msra.mxu0 %v2351
      %v2353 = vand.u32 %v2005, 4294901760
      %v2354 = vsub.f32 %v2005, %v2353
      %2355 = vmatprep.subr.mxu0 %v2354
      %v2356 = vand.u32 %v2004, 4294901760
      %v2357 = vsub.f32 %v2004, %v2356
      %2358 = vmatpush1.msra.mxu0 %v2357
      %2359 = vmatprep.subr.mxu0 0.0
      %2360 = vmatpush2.msra.mxu0 0.0
      %2361 = vmatprep.subr.mxu0 0.0
      %2362 = vmatpush2.msra.mxu0 0.0
      %2363 = vmatprep.subr.mxu0 0.0
      %2364 = vmatpush2.msra.mxu0 0.0
      %2365 = vmatprep.subr.mxu0 0.0
      %2366 = vmatpush2.msra.mxu0 0.0
      %2367 = vmatprep.subr.mxu0 0.0
      %2368 = vmatpush2.msra.mxu0 0.0
      %2369 = vmatprep.subr.mxu0 0.0
      %2370 = vmatpush2.msra.mxu0 0.0
      %2371 = vmatprep.subr.mxu0 0.0
      %2372 = vmatpush2.msra.mxu0 0.0
      %2373 = vmatprep.subr.mxu0 0.0
      %2374 = vmatpush2.msra.mxu0 0.0
      %2375 = vmatprep.subr.mxu0 0.0
      %2376 = vmatpush2.msra.mxu0 0.0
      %2377 = vmatprep.subr.mxu0 0.0
      %2378 = vmatpush2.msra.mxu0 0.0
      %2379 = vmatprep.subr.mxu0 0.0
      %2380 = vmatpush2.msra.mxu0 0.0
      %2381 = vmatprep.subr.mxu0 0.0
      %2382 = vmatpush2.msra.mxu0 0.0
      %2383 = vmatprep.subr.mxu0 0.0
      %2384 = vmatpush2.msra.mxu0 0.0
      %2385 = vmatprep.subr.mxu0 0.0
      %2386 = vmatpush2.msra.mxu0 0.0
      %2387 = vmatprep.subr.mxu0 0.0
      %2388 = vmatpush2.msra.mxu0 0.0
      %2389 = vmatprep.subr.mxu0 0.0
      %2390 = vmatpush2.msra.mxu0 0.0
      %2391 = vmatprep.mubr.f32.mxu0 0.0
      %v2392 = vand.u32 %v2050, 4294901760
      %v2393 = vsub.f32 %v2050, %v2392
      %2394 = vmatmul.mubr.f32.gmra.mxu0 %v2393
      %v2395 = vpop.f32.mrf.mxu0
      %v2396 = vadd.f32 %v2286, %v2395
      %v2397 = vpop.f32.mrf.mxu0
      %v2398 = vadd.f32 %v2288, %v2397
      %2399 = vmatprep.mubr.f32.mxu0 0.0
      %v2400 = vand.u32 %v2053, 4294901760
      %v2401 = vsub.f32 %v2053, %v2400
      %2402 = vmatmul.mubr.f32.gmra.mxu0 %v2401
      %v2403 = vpop.f32.mrf.mxu0
      %v2404 = vadd.f32 %v2293, %v2403
      %v2405 = vpop.f32.mrf.mxu0
      %v2406 = vadd.f32 %v2295, %v2405
      %2407 = vmatprep.mubr.f32.mxu0 0.0
      %v2408 = vand.u32 %v2056, 4294901760
      %v2409 = vsub.f32 %v2056, %v2408
      %2410 = vmatmul.mubr.f32.gmra.mxu0 %v2409
      %v2411 = vpop.f32.mrf.mxu0
      %v2412 = vadd.f32 %v2300, %v2411
      %v2413 = vpop.f32.mrf.mxu0
      %v2414 = vadd.f32 %v2302, %v2413
      %2415 = vmatprep.mubr.f32.mxu0 0.0
      %v2416 = vand.u32 %v2059, 4294901760
      %v2417 = vsub.f32 %v2059, %v2416
      %2418 = vmatmul.mubr.f32.gmra.mxu0 %v2417
      %v2419 = vpop.f32.mrf.mxu0
      %v2420 = vadd.f32 %v2307, %v2419
      %v2421 = vpop.f32.mrf.mxu0
      %v2422 = vadd.f32 %v2309, %v2421
      %2423 = vdwg.mxu0
      %2424 = vmatprep.subr.mxu0 0.0
      %2425 = vmatpush1.msra.mxu0 0.0
      %2426 = vmatprep.subr.mxu0 0.0
      %2427 = vmatpush1.msra.mxu0 0.0
      %2428 = vmatprep.subr.mxu0 0.0
      %2429 = vmatpush1.msra.mxu0 0.0
      %2430 = vmatprep.subr.mxu0 0.0
      %2431 = vmatpush1.msra.mxu0 0.0
      %2432 = vmatprep.subr.mxu0 0.0
      %2433 = vmatpush1.msra.mxu0 0.0
      %2434 = vmatprep.subr.mxu0 0.0
      %2435 = vmatpush1.msra.mxu0 0.0
      %2436 = vmatprep.subr.mxu0 0.0
      %2437 = vmatpush1.msra.mxu0 0.0
      %2438 = vmatprep.subr.mxu0 0.0
      %2439 = vmatpush1.msra.mxu0 0.0
      %2440 = vmatprep.subr.mxu0 0.0
      %2441 = vmatpush1.msra.mxu0 0.0
      %2442 = vmatprep.subr.mxu0 0.0
      %2443 = vmatpush1.msra.mxu0 0.0
      %2444 = vmatprep.subr.mxu0 0.0
      %2445 = vmatpush1.msra.mxu0 0.0
      %2446 = vmatprep.subr.mxu0 0.0
      %2447 = vmatpush1.msra.mxu0 0.0
      %v2448 = vand.u32 %v2017, 4294901760
      %2449 = vmatprep.subr.mxu0 %v2448
      %v2450 = vand.u32 %v2016, 4294901760
      %2451 = vmatpush1.msra.mxu0 %v2450
      %v2452 = vand.u32 %v2013, 4294901760
      %2453 = vmatprep.subr.mxu0 %v2452
      %v2454 = vand.u32 %v2012, 4294901760
      %2455 = vmatpush1.msra.mxu0 %v2454
      %v2456 = vand.u32 %v2009, 4294901760
      %2457 = vmatprep.subr.mxu0 %v2456
      %v2458 = vand.u32 %v2008, 4294901760
      %2459 = vmatpush1.msra.mxu0 %v2458
      %v2460 = vand.u32 %v2005, 4294901760
      %2461 = vmatprep.subr.mxu0 %v2460
      %v2462 = vand.u32 %v2004, 4294901760
      %2463 = vmatpush1.msra.mxu0 %v2462
      %2464 = vmatprep.subr.mxu0 0.0
      %2465 = vmatpush2.msra.mxu0 0.0
      %2466 = vmatprep.subr.mxu0 0.0
      %2467 = vmatpush2.msra.mxu0 0.0
      %2468 = vmatprep.subr.mxu0 0.0
      %2469 = vmatpush2.msra.mxu0 0.0
      %2470 = vmatprep.subr.mxu0 0.0
      %2471 = vmatpush2.msra.mxu0 0.0
      %2472 = vmatprep.subr.mxu0 0.0
      %2473 = vmatpush2.msra.mxu0 0.0
      %2474 = vmatprep.subr.mxu0 0.0
      %2475 = vmatpush2.msra.mxu0 0.0
      %2476 = vmatprep.subr.mxu0 0.0
      %2477 = vmatpush2.msra.mxu0 0.0
      %2478 = vmatprep.subr.mxu0 0.0
      %2479 = vmatpush2.msra.mxu0 0.0
      %2480 = vmatprep.subr.mxu0 0.0
      %2481 = vmatpush2.msra.mxu0 0.0
      %2482 = vmatprep.subr.mxu0 0.0
      %2483 = vmatpush2.msra.mxu0 0.0
      %2484 = vmatprep.subr.mxu0 0.0
      %2485 = vmatpush2.msra.mxu0 0.0
      %2486 = vmatprep.subr.mxu0 0.0
      %2487 = vmatpush2.msra.mxu0 0.0
      %2488 = vmatprep.subr.mxu0 0.0
      %2489 = vmatpush2.msra.mxu0 0.0
      %2490 = vmatprep.subr.mxu0 0.0
      %2491 = vmatpush2.msra.mxu0 0.0
      %2492 = vmatprep.subr.mxu0 0.0
      %2493 = vmatpush2.msra.mxu0 0.0
      %2494 = vmatprep.subr.mxu0 0.0
      %2495 = vmatpush2.msra.mxu0 0.0
      %2496 = vmatprep.mubr.f32.mxu0 0.0
      %v2497 = vand.u32 %v2050, 4294901760
      %v2498 = vsub.f32 %v2050, %v2497
      %v2499 = vand.u32 %v2498, 4294901760
      %2500 = vmatmul.mubr.f32.gmra.mxu0 %v2499
      %v2501 = vpop.f32.mrf.mxu0
      %v2502 = vadd.f32 %v2396, %v2501
      %v2503 = vpop.f32.mrf.mxu0
      %v2504 = vadd.f32 %v2398, %v2503
      %2505 = vmatprep.mubr.f32.mxu0 0.0
      %v2506 = vand.u32 %v2053, 4294901760
      %v2507 = vsub.f32 %v2053, %v2506
      %v2508 = vand.u32 %v2507, 4294901760
      %2509 = vmatmul.mubr.f32.gmra.mxu0 %v2508
      %v2510 = vpop.f32.mrf.mxu0
      %v2511 = vadd.f32 %v2404, %v2510
      %v2512 = vpop.f32.mrf.mxu0
      %v2513 = vadd.f32 %v2406, %v2512
      %2514 = vmatprep.mubr.f32.mxu0 0.0
      %v2515 = vand.u32 %v2056, 4294901760
      %v2516 = vsub.f32 %v2056, %v2515
      %v2517 = vand.u32 %v2516, 4294901760
      %2518 = vmatmul.mubr.f32.gmra.mxu0 %v2517
      %v2519 = vpop.f32.mrf.mxu0
      %v2520 = vadd.f32 %v2412, %v2519
      %v2521 = vpop.f32.mrf.mxu0
      %v2522 = vadd.f32 %v2414, %v2521
      %2523 = vmatprep.mubr.f32.mxu0 0.0
      %v2524 = vand.u32 %v2059, 4294901760
      %v2525 = vsub.f32 %v2059, %v2524
      %v2526 = vand.u32 %v2525, 4294901760
      %2527 = vmatmul.mubr.f32.gmra.mxu0 %v2526
      %v2528 = vpop.f32.mrf.mxu0
      %v2529 = vadd.f32 %v2420, %v2528
      %v2530 = vpop.f32.mrf.mxu0
      %v2531 = vadd.f32 %v2422, %v2530
      %2532 = vdwg.mxu0
      %2533 = vmatprep.subr.mxu0 0.0
      %2534 = vmatpush1.msra.mxu0 0.0
      %2535 = vmatprep.subr.mxu0 0.0
      %2536 = vmatpush1.msra.mxu0 0.0
      %2537 = vmatprep.subr.mxu0 0.0
      %2538 = vmatpush1.msra.mxu0 0.0
      %2539 = vmatprep.subr.mxu0 0.0
      %2540 = vmatpush1.msra.mxu0 0.0
      %2541 = vmatprep.subr.mxu0 0.0
      %2542 = vmatpush1.msra.mxu0 0.0
      %2543 = vmatprep.subr.mxu0 0.0
      %2544 = vmatpush1.msra.mxu0 0.0
      %2545 = vmatprep.subr.mxu0 0.0
      %2546 = vmatpush1.msra.mxu0 0.0
      %2547 = vmatprep.subr.mxu0 0.0
      %2548 = vmatpush1.msra.mxu0 0.0
      %2549 = vmatprep.subr.mxu0 0.0
      %2550 = vmatpush1.msra.mxu0 0.0
      %2551 = vmatprep.subr.mxu0 0.0
      %2552 = vmatpush1.msra.mxu0 0.0
      %2553 = vmatprep.subr.mxu0 0.0
      %2554 = vmatpush1.msra.mxu0 0.0
      %2555 = vmatprep.subr.mxu0 0.0
      %2556 = vmatpush1.msra.mxu0 0.0
      %v2557 = vand.u32 %v2017, 4294901760
      %v2558 = vsub.f32 %v2017, %v2557
      %v2559 = vand.u32 %v2558, 4294901760
      %2560 = vmatprep.subr.mxu0 %v2559
      %v2561 = vand.u32 %v2016, 4294901760
      %v2562 = vsub.f32 %v2016, %v2561
      %v2563 = vand.u32 %v2562, 4294901760
      %2564 = vmatpush1.msra.mxu0 %v2563
      %v2565 = vand.u32 %v2013, 4294901760
      %v2566 = vsub.f32 %v2013, %v2565
      %v2567 = vand.u32 %v2566, 4294901760
      %2568 = vmatprep.subr.mxu0 %v2567
      %v2569 = vand.u32 %v2012, 4294901760
      %v2570 = vsub.f32 %v2012, %v2569
      %v2571 = vand.u32 %v2570, 4294901760
      %2572 = vmatpush1.msra.mxu0 %v2571
      %v2573 = vand.u32 %v2009, 4294901760
      %v2574 = vsub.f32 %v2009, %v2573
      %v2575 = vand.u32 %v2574, 4294901760
      %2576 = vmatprep.subr.mxu0 %v2575
      %v2577 = vand.u32 %v2008, 4294901760
      %v2578 = vsub.f32 %v2008, %v2577
      %v2579 = vand.u32 %v2578, 4294901760
      %2580 = vmatpush1.msra.mxu0 %v2579
      %v2581 = vand.u32 %v2005, 4294901760
      %v2582 = vsub.f32 %v2005, %v2581
      %v2583 = vand.u32 %v2582, 4294901760
      %2584 = vmatprep.subr.mxu0 %v2583
      %v2585 = vand.u32 %v2004, 4294901760
      %v2586 = vsub.f32 %v2004, %v2585
      %v2587 = vand.u32 %v2586, 4294901760
      %2588 = vmatpush1.msra.mxu0 %v2587
      %2589 = vmatprep.subr.mxu0 0.0
      %2590 = vmatpush2.msra.mxu0 0.0
      %2591 = vmatprep.subr.mxu0 0.0
      %2592 = vmatpush2.msra.mxu0 0.0
      %2593 = vmatprep.subr.mxu0 0.0
      %2594 = vmatpush2.msra.mxu0 0.0
      %2595 = vmatprep.subr.mxu0 0.0
      %2596 = vmatpush2.msra.mxu0 0.0
      %2597 = vmatprep.subr.mxu0 0.0
      %2598 = vmatpush2.msra.mxu0 0.0
      %2599 = vmatprep.subr.mxu0 0.0
      %2600 = vmatpush2.msra.mxu0 0.0
      %2601 = vmatprep.subr.mxu0 0.0
      %2602 = vmatpush2.msra.mxu0 0.0
      %2603 = vmatprep.subr.mxu0 0.0
      %2604 = vmatpush2.msra.mxu0 0.0
      %2605 = vmatprep.subr.mxu0 0.0
      %2606 = vmatpush2.msra.mxu0 0.0
      %2607 = vmatprep.subr.mxu0 0.0
      %2608 = vmatpush2.msra.mxu0 0.0
      %2609 = vmatprep.subr.mxu0 0.0
      %2610 = vmatpush2.msra.mxu0 0.0
      %2611 = vmatprep.subr.mxu0 0.0
      %2612 = vmatpush2.msra.mxu0 0.0
      %2613 = vmatprep.subr.mxu0 0.0
      %2614 = vmatpush2.msra.mxu0 0.0
      %2615 = vmatprep.subr.mxu0 0.0
      %2616 = vmatpush2.msra.mxu0 0.0
      %2617 = vmatprep.subr.mxu0 0.0
      %2618 = vmatpush2.msra.mxu0 0.0
      %2619 = vmatprep.subr.mxu0 0.0
      %2620 = vmatpush2.msra.mxu0 0.0
      %2621 = vmatprep.mubr.f32.mxu0 0.0
      %v2622 = vand.u32 %v2050, 4294901760
      %2623 = vmatmul.mubr.f32.gmra.mxu0 %v2622
      %v2624 = vpop.f32.mrf.mxu0
      %v2625 = vadd.f32 %v2502, %v2624
      %v2626 = vpop.f32.mrf.mxu0
      %v2627 = vadd.f32 %v2504, %v2626
      %2628 = vmatprep.mubr.f32.mxu0 0.0
      %v2629 = vand.u32 %v2053, 4294901760
      %2630 = vmatmul.mubr.f32.gmra.mxu0 %v2629
      %v2631 = vpop.f32.mrf.mxu0
      %v2632 = vadd.f32 %v2511, %v2631
      %v2633 = vpop.f32.mrf.mxu0
      %v2634 = vadd.f32 %v2513, %v2633
      %2635 = vmatprep.mubr.f32.mxu0 0.0
      %v2636 = vand.u32 %v2056, 4294901760
      %2637 = vmatmul.mubr.f32.gmra.mxu0 %v2636
      %v2638 = vpop.f32.mrf.mxu0
      %v2639 = vadd.f32 %v2520, %v2638
      %v2640 = vpop.f32.mrf.mxu0
      %v2641 = vadd.f32 %v2522, %v2640
      %2642 = vmatprep.mubr.f32.mxu0 0.0
      %v2643 = vand.u32 %v2059, 4294901760
      %2644 = vmatmul.mubr.f32.gmra.mxu0 %v2643
      %v2645 = vpop.f32.mrf.mxu0
      %v2646 = vadd.f32 %v2529, %v2645
      %v2647 = vpop.f32.mrf.mxu0
      %v2648 = vadd.f32 %v2531, %v2647
      %2649 = vdwg.mxu0
      %2650 = vmatprep.subr.mxu0 0.0
      %2651 = vmatpush1.msra.mxu0 0.0
      %2652 = vmatprep.subr.mxu0 0.0
      %2653 = vmatpush1.msra.mxu0 0.0
      %2654 = vmatprep.subr.mxu0 0.0
      %2655 = vmatpush1.msra.mxu0 0.0
      %2656 = vmatprep.subr.mxu0 0.0
      %2657 = vmatpush1.msra.mxu0 0.0
      %2658 = vmatprep.subr.mxu0 0.0
      %2659 = vmatpush1.msra.mxu0 0.0
      %2660 = vmatprep.subr.mxu0 0.0
      %2661 = vmatpush1.msra.mxu0 0.0
      %2662 = vmatprep.subr.mxu0 0.0
      %2663 = vmatpush1.msra.mxu0 0.0
      %2664 = vmatprep.subr.mxu0 0.0
      %2665 = vmatpush1.msra.mxu0 0.0
      %2666 = vmatprep.subr.mxu0 0.0
      %2667 = vmatpush1.msra.mxu0 0.0
      %2668 = vmatprep.subr.mxu0 0.0
      %2669 = vmatpush1.msra.mxu0 0.0
      %2670 = vmatprep.subr.mxu0 0.0
      %2671 = vmatpush1.msra.mxu0 0.0
      %2672 = vmatprep.subr.mxu0 0.0
      %2673 = vmatpush1.msra.mxu0 0.0
      %v2674 = vand.u32 %v2017, 4294901760
      %2675 = vmatprep.subr.mxu0 %v2674
      %v2676 = vand.u32 %v2016, 4294901760
      %2677 = vmatpush1.msra.mxu0 %v2676
      %v2678 = vand.u32 %v2013, 4294901760
      %2679 = vmatprep.subr.mxu0 %v2678
      %v2680 = vand.u32 %v2012, 4294901760
      %2681 = vmatpush1.msra.mxu0 %v2680
      %v2682 = vand.u32 %v2009, 4294901760
      %2683 = vmatprep.subr.mxu0 %v2682
      %v2684 = vand.u32 %v2008, 4294901760
      %2685 = vmatpush1.msra.mxu0 %v2684
      %v2686 = vand.u32 %v2005, 4294901760
      %2687 = vmatprep.subr.mxu0 %v2686
      %v2688 = vand.u32 %v2004, 4294901760
      %2689 = vmatpush1.msra.mxu0 %v2688
      %2690 = vmatprep.subr.mxu0 0.0
      %2691 = vmatpush2.msra.mxu0 0.0
      %2692 = vmatprep.subr.mxu0 0.0
      %2693 = vmatpush2.msra.mxu0 0.0
      %2694 = vmatprep.subr.mxu0 0.0
      %2695 = vmatpush2.msra.mxu0 0.0
      %2696 = vmatprep.subr.mxu0 0.0
      %2697 = vmatpush2.msra.mxu0 0.0
      %2698 = vmatprep.subr.mxu0 0.0
      %2699 = vmatpush2.msra.mxu0 0.0
      %2700 = vmatprep.subr.mxu0 0.0
      %2701 = vmatpush2.msra.mxu0 0.0
      %2702 = vmatprep.subr.mxu0 0.0
      %2703 = vmatpush2.msra.mxu0 0.0
      %2704 = vmatprep.subr.mxu0 0.0
      %2705 = vmatpush2.msra.mxu0 0.0
      %2706 = vmatprep.subr.mxu0 0.0
      %2707 = vmatpush2.msra.mxu0 0.0
      %2708 = vmatprep.subr.mxu0 0.0
      %2709 = vmatpush2.msra.mxu0 0.0
      %2710 = vmatprep.subr.mxu0 0.0
      %2711 = vmatpush2.msra.mxu0 0.0
      %2712 = vmatprep.subr.mxu0 0.0
      %2713 = vmatpush2.msra.mxu0 0.0
      %2714 = vmatprep.subr.mxu0 0.0
      %2715 = vmatpush2.msra.mxu0 0.0
      %2716 = vmatprep.subr.mxu0 0.0
      %2717 = vmatpush2.msra.mxu0 0.0
      %2718 = vmatprep.subr.mxu0 0.0
      %2719 = vmatpush2.msra.mxu0 0.0
      %2720 = vmatprep.subr.mxu0 0.0
      %2721 = vmatpush2.msra.mxu0 0.0
      %2722 = vmatprep.mubr.f32.mxu0 0.0
      %v2723 = vand.u32 %v2050, 4294901760
      %2724 = vmatmul.mubr.f32.gmra.mxu0 %v2723
      %v2725 = vpop.f32.mrf.mxu0
      %v2726 = vadd.f32 %v2625, %v2725
      %v2727 = vpop.f32.mrf.mxu0
      %v2728 = vadd.f32 %v2627, %v2727
      %2729 = vmatprep.mubr.f32.mxu0 0.0
      %v2730 = vand.u32 %v2053, 4294901760
      %2731 = vmatmul.mubr.f32.gmra.mxu0 %v2730
      %v2732 = vpop.f32.mrf.mxu0
      %v2733 = vadd.f32 %v2632, %v2732
      %v2734 = vpop.f32.mrf.mxu0
      %v2735 = vadd.f32 %v2634, %v2734
      %2736 = vmatprep.mubr.f32.mxu0 0.0
      %v2737 = vand.u32 %v2056, 4294901760
      %2738 = vmatmul.mubr.f32.gmra.mxu0 %v2737
      %v2739 = vpop.f32.mrf.mxu0
      %v2740 = vadd.f32 %v2639, %v2739
      %v2741 = vpop.f32.mrf.mxu0
      %v2742 = vadd.f32 %v2641, %v2741
      %2743 = vmatprep.mubr.f32.mxu0 0.0
      %v2744 = vand.u32 %v2059, 4294901760
      %2745 = vmatmul.mubr.f32.gmra.mxu0 %v2744
      %v2746 = vpop.f32.mrf.mxu0
      %v2747 = vadd.f32 %v2646, %v2746
      %v2748 = vpop.f32.mrf.mxu0
      %v2749 = vadd.f32 %v2648, %v2748
      %2750 = vdwg.mxu0
      %2751 = vmatprep.subr.mxu0 0.0
      %2752 = vmatpush1.msra.mxu0 0.0
      %2753 = vmatprep.subr.mxu0 0.0
      %2754 = vmatpush1.msra.mxu0 0.0
      %2755 = vmatprep.subr.mxu0 0.0
      %2756 = vmatpush1.msra.mxu0 0.0
      %2757 = vmatprep.subr.mxu0 0.0
      %2758 = vmatpush1.msra.mxu0 0.0
      %2759 = vmatprep.subr.mxu0 0.0
      %2760 = vmatpush1.msra.mxu0 0.0
      %2761 = vmatprep.subr.mxu0 0.0
      %2762 = vmatpush1.msra.mxu0 0.0
      %2763 = vmatprep.subr.mxu0 0.0
      %2764 = vmatpush1.msra.mxu0 0.0
      %2765 = vmatprep.subr.mxu0 0.0
      %2766 = vmatpush1.msra.mxu0 0.0
      %2767 = vmatprep.subr.mxu0 0.0
      %2768 = vmatpush1.msra.mxu0 0.0
      %2769 = vmatprep.subr.mxu0 0.0
      %2770 = vmatpush1.msra.mxu0 0.0
      %2771 = vmatprep.subr.mxu0 0.0
      %2772 = vmatpush1.msra.mxu0 0.0
      %2773 = vmatprep.subr.mxu0 0.0
      %2774 = vmatpush1.msra.mxu0 0.0
      %v2775 = vand.u32 %v2019, 4294901760
      %2776 = vmatprep.subr.mxu0 %v2775
      %v2777 = vand.u32 %v2018, 4294901760
      %2778 = vmatpush1.msra.mxu0 %v2777
      %v2779 = vand.u32 %v2015, 4294901760
      %2780 = vmatprep.subr.mxu0 %v2779
      %v2781 = vand.u32 %v2014, 4294901760
      %2782 = vmatpush1.msra.mxu0 %v2781
      %v2783 = vand.u32 %v2011, 4294901760
      %2784 = vmatprep.subr.mxu0 %v2783
      %v2785 = vand.u32 %v2010, 4294901760
      %2786 = vmatpush1.msra.mxu0 %v2785
      %v2787 = vand.u32 %v2007, 4294901760
      %2788 = vmatprep.subr.mxu0 %v2787
      %v2789 = vand.u32 %v2006, 4294901760
      %2790 = vmatpush1.msra.mxu0 %v2789
      %2791 = vmatprep.subr.mxu0 0.0
      %2792 = vmatpush2.msra.mxu0 0.0
      %2793 = vmatprep.subr.mxu0 0.0
      %2794 = vmatpush2.msra.mxu0 0.0
      %2795 = vmatprep.subr.mxu0 0.0
      %2796 = vmatpush2.msra.mxu0 0.0
      %2797 = vmatprep.subr.mxu0 0.0
      %2798 = vmatpush2.msra.mxu0 0.0
      %2799 = vmatprep.subr.mxu0 0.0
      %2800 = vmatpush2.msra.mxu0 0.0
      %2801 = vmatprep.subr.mxu0 0.0
      %2802 = vmatpush2.msra.mxu0 0.0
      %2803 = vmatprep.subr.mxu0 0.0
      %2804 = vmatpush2.msra.mxu0 0.0
      %2805 = vmatprep.subr.mxu0 0.0
      %2806 = vmatpush2.msra.mxu0 0.0
      %2807 = vmatprep.subr.mxu0 0.0
      %2808 = vmatpush2.msra.mxu0 0.0
      %2809 = vmatprep.subr.mxu0 0.0
      %2810 = vmatpush2.msra.mxu0 0.0
      %2811 = vmatprep.subr.mxu0 0.0
      %2812 = vmatpush2.msra.mxu0 0.0
      %2813 = vmatprep.subr.mxu0 0.0
      %2814 = vmatpush2.msra.mxu0 0.0
      %2815 = vmatprep.subr.mxu0 0.0
      %2816 = vmatpush2.msra.mxu0 0.0
      %2817 = vmatprep.subr.mxu0 0.0
      %2818 = vmatpush2.msra.mxu0 0.0
      %2819 = vmatprep.subr.mxu0 0.0
      %2820 = vmatpush2.msra.mxu0 0.0
      %2821 = vmatprep.subr.mxu0 0.0
      %2822 = vmatpush2.msra.mxu0 0.0
      %2823 = vmatprep.mubr.f32.mxu0 0.0
      %v2824 = vand.u32 %v2050, 4294901760
      %v2825 = vsub.f32 %v2050, %v2824
      %v2826 = vand.u32 %v2825, 4294901760
      %v2827 = vsub.f32 %v2825, %v2826
      %v2828 = vand.u32 %v2827, 4294901760
      %2829 = vmatmul.mubr.f32.gmra.mxu0 %v2828
      %v2830 = vpop.f32.mrf.mxu0
      %v2831 = vadd.f32 %v2032, %v2830
      %v2832 = vpop.f32.mrf.mxu0
      %v2833 = vadd.f32 %v2032, %v2832
      %2834 = vmatprep.mubr.f32.mxu0 0.0
      %v2835 = vand.u32 %v2053, 4294901760
      %v2836 = vsub.f32 %v2053, %v2835
      %v2837 = vand.u32 %v2836, 4294901760
      %v2838 = vsub.f32 %v2836, %v2837
      %v2839 = vand.u32 %v2838, 4294901760
      %2840 = vmatmul.mubr.f32.gmra.mxu0 %v2839
      %v2841 = vpop.f32.mrf.mxu0
      %v2842 = vadd.f32 %v2037, %v2841
      %v2843 = vpop.f32.mrf.mxu0
      %v2844 = vadd.f32 %v2037, %v2843
      %2845 = vmatprep.mubr.f32.mxu0 0.0
      %v2846 = vand.u32 %v2056, 4294901760
      %v2847 = vsub.f32 %v2056, %v2846
      %v2848 = vand.u32 %v2847, 4294901760
      %v2849 = vsub.f32 %v2847, %v2848
      %v2850 = vand.u32 %v2849, 4294901760
      %2851 = vmatmul.mubr.f32.gmra.mxu0 %v2850
      %v2852 = vpop.f32.mrf.mxu0
      %v2853 = vadd.f32 %v2042, %v2852
      %v2854 = vpop.f32.mrf.mxu0
      %v2855 = vadd.f32 %v2042, %v2854
      %2856 = vmatprep.mubr.f32.mxu0 0.0
      %v2857 = vand.u32 %v2059, 4294901760
      %v2858 = vsub.f32 %v2059, %v2857
      %v2859 = vand.u32 %v2858, 4294901760
      %v2860 = vsub.f32 %v2858, %v2859
      %v2861 = vand.u32 %v2860, 4294901760
      %2862 = vmatmul.mubr.f32.gmra.mxu0 %v2861
      %v2863 = vpop.f32.mrf.mxu0
      %v2864 = vadd.f32 %v2047, %v2863
      %v2865 = vpop.f32.mrf.mxu0
      %v2866 = vadd.f32 %v2047, %v2865
      %2867 = vdwg.mxu0
      %2868 = vmatprep.subr.mxu0 0.0
      %2869 = vmatpush1.msra.mxu0 0.0
      %2870 = vmatprep.subr.mxu0 0.0
      %2871 = vmatpush1.msra.mxu0 0.0
      %2872 = vmatprep.subr.mxu0 0.0
      %2873 = vmatpush1.msra.mxu0 0.0
      %2874 = vmatprep.subr.mxu0 0.0
      %2875 = vmatpush1.msra.mxu0 0.0
      %2876 = vmatprep.subr.mxu0 0.0
      %2877 = vmatpush1.msra.mxu0 0.0
      %2878 = vmatprep.subr.mxu0 0.0
      %2879 = vmatpush1.msra.mxu0 0.0
      %2880 = vmatprep.subr.mxu0 0.0
      %2881 = vmatpush1.msra.mxu0 0.0
      %2882 = vmatprep.subr.mxu0 0.0
      %2883 = vmatpush1.msra.mxu0 0.0
      %2884 = vmatprep.subr.mxu0 0.0
      %2885 = vmatpush1.msra.mxu0 0.0
      %2886 = vmatprep.subr.mxu0 0.0
      %2887 = vmatpush1.msra.mxu0 0.0
      %2888 = vmatprep.subr.mxu0 0.0
      %2889 = vmatpush1.msra.mxu0 0.0
      %2890 = vmatprep.subr.mxu0 0.0
      %2891 = vmatpush1.msra.mxu0 0.0
      %v2892 = vand.u32 %v2019, 4294901760
      %v2893 = vsub.f32 %v2019, %v2892
      %v2894 = vand.u32 %v2893, 4294901760
      %v2895 = vsub.f32 %v2893, %v2894
      %v2896 = vand.u32 %v2895, 4294901760
      %2897 = vmatprep.subr.mxu0 %v2896
      %v2898 = vand.u32 %v2018, 4294901760
      %v2899 = vsub.f32 %v2018, %v2898
      %v2900 = vand.u32 %v2899, 4294901760
      %v2901 = vsub.f32 %v2899, %v2900
      %v2902 = vand.u32 %v2901, 4294901760
      %2903 = vmatpush1.msra.mxu0 %v2902
      %v2904 = vand.u32 %v2015, 4294901760
      %v2905 = vsub.f32 %v2015, %v2904
      %v2906 = vand.u32 %v2905, 4294901760
      %v2907 = vsub.f32 %v2905, %v2906
      %v2908 = vand.u32 %v2907, 4294901760
      %2909 = vmatprep.subr.mxu0 %v2908
      %v2910 = vand.u32 %v2014, 4294901760
      %v2911 = vsub.f32 %v2014, %v2910
      %v2912 = vand.u32 %v2911, 4294901760
      %v2913 = vsub.f32 %v2911, %v2912
      %v2914 = vand.u32 %v2913, 4294901760
      %2915 = vmatpush1.msra.mxu0 %v2914
      %v2916 = vand.u32 %v2011, 4294901760
      %v2917 = vsub.f32 %v2011, %v2916
      %v2918 = vand.u32 %v2917, 4294901760
      %v2919 = vsub.f32 %v2917, %v2918
      %v2920 = vand.u32 %v2919, 4294901760
      %2921 = vmatprep.subr.mxu0 %v2920
      %v2922 = vand.u32 %v2010, 4294901760
      %v2923 = vsub.f32 %v2010, %v2922
      %v2924 = vand.u32 %v2923, 4294901760
      %v2925 = vsub.f32 %v2923, %v2924
      %v2926 = vand.u32 %v2925, 4294901760
      %2927 = vmatpush1.msra.mxu0 %v2926
      %v2928 = vand.u32 %v2007, 4294901760
      %v2929 = vsub.f32 %v2007, %v2928
      %v2930 = vand.u32 %v2929, 4294901760
      %v2931 = vsub.f32 %v2929, %v2930
      %v2932 = vand.u32 %v2931, 4294901760
      %2933 = vmatprep.subr.mxu0 %v2932
      %v2934 = vand.u32 %v2006, 4294901760
      %v2935 = vsub.f32 %v2006, %v2934
      %v2936 = vand.u32 %v2935, 4294901760
      %v2937 = vsub.f32 %v2935, %v2936
      %v2938 = vand.u32 %v2937, 4294901760
      %2939 = vmatpush1.msra.mxu0 %v2938
      %2940 = vmatprep.subr.mxu0 0.0
      %2941 = vmatpush2.msra.mxu0 0.0
      %2942 = vmatprep.subr.mxu0 0.0
      %2943 = vmatpush2.msra.mxu0 0.0
      %2944 = vmatprep.subr.mxu0 0.0
      %2945 = vmatpush2.msra.mxu0 0.0
      %2946 = vmatprep.subr.mxu0 0.0
      %2947 = vmatpush2.msra.mxu0 0.0
      %2948 = vmatprep.subr.mxu0 0.0
      %2949 = vmatpush2.msra.mxu0 0.0
      %2950 = vmatprep.subr.mxu0 0.0
      %2951 = vmatpush2.msra.mxu0 0.0
      %2952 = vmatprep.subr.mxu0 0.0
      %2953 = vmatpush2.msra.mxu0 0.0
      %2954 = vmatprep.subr.mxu0 0.0
      %2955 = vmatpush2.msra.mxu0 0.0
      %2956 = vmatprep.subr.mxu0 0.0
      %2957 = vmatpush2.msra.mxu0 0.0
      %2958 = vmatprep.subr.mxu0 0.0
      %2959 = vmatpush2.msra.mxu0 0.0
      %2960 = vmatprep.subr.mxu0 0.0
      %2961 = vmatpush2.msra.mxu0 0.0
      %2962 = vmatprep.subr.mxu0 0.0
      %2963 = vmatpush2.msra.mxu0 0.0
      %2964 = vmatprep.subr.mxu0 0.0
      %2965 = vmatpush2.msra.mxu0 0.0
      %2966 = vmatprep.subr.mxu0 0.0
      %2967 = vmatpush2.msra.mxu0 0.0
      %2968 = vmatprep.subr.mxu0 0.0
      %2969 = vmatpush2.msra.mxu0 0.0
      %2970 = vmatprep.subr.mxu0 0.0
      %2971 = vmatpush2.msra.mxu0 0.0
      %2972 = vmatprep.mubr.f32.mxu0 0.0
      %v2973 = vand.u32 %v2050, 4294901760
      %2974 = vmatmul.mubr.f32.gmra.mxu0 %v2973
      %v2975 = vpop.f32.mrf.mxu0
      %v2976 = vadd.f32 %v2831, %v2975
      %v2977 = vpop.f32.mrf.mxu0
      %v2978 = vadd.f32 %v2833, %v2977
      %2979 = vmatprep.mubr.f32.mxu0 0.0
      %v2980 = vand.u32 %v2053, 4294901760
      %2981 = vmatmul.mubr.f32.gmra.mxu0 %v2980
      %v2982 = vpop.f32.mrf.mxu0
      %v2983 = vadd.f32 %v2842, %v2982
      %v2984 = vpop.f32.mrf.mxu0
      %v2985 = vadd.f32 %v2844, %v2984
      %2986 = vmatprep.mubr.f32.mxu0 0.0
      %v2987 = vand.u32 %v2056, 4294901760
      %2988 = vmatmul.mubr.f32.gmra.mxu0 %v2987
      %v2989 = vpop.f32.mrf.mxu0
      %v2990 = vadd.f32 %v2853, %v2989
      %v2991 = vpop.f32.mrf.mxu0
      %v2992 = vadd.f32 %v2855, %v2991
      %2993 = vmatprep.mubr.f32.mxu0 0.0
      %v2994 = vand.u32 %v2059, 4294901760
      %2995 = vmatmul.mubr.f32.gmra.mxu0 %v2994
      %v2996 = vpop.f32.mrf.mxu0
      %v2997 = vadd.f32 %v2864, %v2996
      %v2998 = vpop.f32.mrf.mxu0
      %v2999 = vadd.f32 %v2866, %v2998
      %3000 = vdwg.mxu0
      %3001 = vmatprep.subr.mxu0 0.0
      %3002 = vmatpush1.msra.mxu0 0.0
      %3003 = vmatprep.subr.mxu0 0.0
      %3004 = vmatpush1.msra.mxu0 0.0
      %3005 = vmatprep.subr.mxu0 0.0
      %3006 = vmatpush1.msra.mxu0 0.0
      %3007 = vmatprep.subr.mxu0 0.0
      %3008 = vmatpush1.msra.mxu0 0.0
      %3009 = vmatprep.subr.mxu0 0.0
      %3010 = vmatpush1.msra.mxu0 0.0
      %3011 = vmatprep.subr.mxu0 0.0
      %3012 = vmatpush1.msra.mxu0 0.0
      %3013 = vmatprep.subr.mxu0 0.0
      %3014 = vmatpush1.msra.mxu0 0.0
      %3015 = vmatprep.subr.mxu0 0.0
      %3016 = vmatpush1.msra.mxu0 0.0
      %3017 = vmatprep.subr.mxu0 0.0
      %3018 = vmatpush1.msra.mxu0 0.0
      %3019 = vmatprep.subr.mxu0 0.0
      %3020 = vmatpush1.msra.mxu0 0.0
      %3021 = vmatprep.subr.mxu0 0.0
      %3022 = vmatpush1.msra.mxu0 0.0
      %3023 = vmatprep.subr.mxu0 0.0
      %3024 = vmatpush1.msra.mxu0 0.0
      %v3025 = vand.u32 %v2019, 4294901760
      %v3026 = vsub.f32 %v2019, %v3025
      %3027 = vmatprep.subr.mxu0 %v3026
      %v3028 = vand.u32 %v2018, 4294901760
      %v3029 = vsub.f32 %v2018, %v3028
      %3030 = vmatpush1.msra.mxu0 %v3029
      %v3031 = vand.u32 %v2015, 4294901760
      %v3032 = vsub.f32 %v2015, %v3031
      %3033 = vmatprep.subr.mxu0 %v3032
      %v3034 = vand.u32 %v2014, 4294901760
      %v3035 = vsub.f32 %v2014, %v3034
      %3036 = vmatpush1.msra.mxu0 %v3035
      %v3037 = vand.u32 %v2011, 4294901760
      %v3038 = vsub.f32 %v2011, %v3037
      %3039 = vmatprep.subr.mxu0 %v3038
      %v3040 = vand.u32 %v2010, 4294901760
      %v3041 = vsub.f32 %v2010, %v3040
      %3042 = vmatpush1.msra.mxu0 %v3041
      %v3043 = vand.u32 %v2007, 4294901760
      %v3044 = vsub.f32 %v2007, %v3043
      %3045 = vmatprep.subr.mxu0 %v3044
      %v3046 = vand.u32 %v2006, 4294901760
      %v3047 = vsub.f32 %v2006, %v3046
      %3048 = vmatpush1.msra.mxu0 %v3047
      %3049 = vmatprep.subr.mxu0 0.0
      %3050 = vmatpush2.msra.mxu0 0.0
      %3051 = vmatprep.subr.mxu0 0.0
      %3052 = vmatpush2.msra.mxu0 0.0
      %3053 = vmatprep.subr.mxu0 0.0
      %3054 = vmatpush2.msra.mxu0 0.0
      %3055 = vmatprep.subr.mxu0 0.0
      %3056 = vmatpush2.msra.mxu0 0.0
      %3057 = vmatprep.subr.mxu0 0.0
      %3058 = vmatpush2.msra.mxu0 0.0
      %3059 = vmatprep.subr.mxu0 0.0
      %3060 = vmatpush2.msra.mxu0 0.0
      %3061 = vmatprep.subr.mxu0 0.0
      %3062 = vmatpush2.msra.mxu0 0.0
      %3063 = vmatprep.subr.mxu0 0.0
      %3064 = vmatpush2.msra.mxu0 0.0
      %3065 = vmatprep.subr.mxu0 0.0
      %3066 = vmatpush2.msra.mxu0 0.0
      %3067 = vmatprep.subr.mxu0 0.0
      %3068 = vmatpush2.msra.mxu0 0.0
      %3069 = vmatprep.subr.mxu0 0.0
      %3070 = vmatpush2.msra.mxu0 0.0
      %3071 = vmatprep.subr.mxu0 0.0
      %3072 = vmatpush2.msra.mxu0 0.0
      %3073 = vmatprep.subr.mxu0 0.0
      %3074 = vmatpush2.msra.mxu0 0.0
      %3075 = vmatprep.subr.mxu0 0.0
      %3076 = vmatpush2.msra.mxu0 0.0
      %3077 = vmatprep.subr.mxu0 0.0
      %3078 = vmatpush2.msra.mxu0 0.0
      %3079 = vmatprep.subr.mxu0 0.0
      %3080 = vmatpush2.msra.mxu0 0.0
      %3081 = vmatprep.mubr.f32.mxu0 0.0
      %v3082 = vand.u32 %v2050, 4294901760
      %v3083 = vsub.f32 %v2050, %v3082
      %3084 = vmatmul.mubr.f32.gmra.mxu0 %v3083
      %v3085 = vpop.f32.mrf.mxu0
      %v3086 = vadd.f32 %v2976, %v3085
      %v3087 = vpop.f32.mrf.mxu0
      %v3088 = vadd.f32 %v2978, %v3087
      %3089 = vmatprep.mubr.f32.mxu0 0.0
      %v3090 = vand.u32 %v2053, 4294901760
      %v3091 = vsub.f32 %v2053, %v3090
      %3092 = vmatmul.mubr.f32.gmra.mxu0 %v3091
      %v3093 = vpop.f32.mrf.mxu0
      %v3094 = vadd.f32 %v2983, %v3093
      %v3095 = vpop.f32.mrf.mxu0
      %v3096 = vadd.f32 %v2985, %v3095
      %3097 = vmatprep.mubr.f32.mxu0 0.0
      %v3098 = vand.u32 %v2056, 4294901760
      %v3099 = vsub.f32 %v2056, %v3098
      %3100 = vmatmul.mubr.f32.gmra.mxu0 %v3099
      %v3101 = vpop.f32.mrf.mxu0
      %v3102 = vadd.f32 %v2990, %v3101
      %v3103 = vpop.f32.mrf.mxu0
      %v3104 = vadd.f32 %v2992, %v3103
      %3105 = vmatprep.mubr.f32.mxu0 0.0
      %v3106 = vand.u32 %v2059, 4294901760
      %v3107 = vsub.f32 %v2059, %v3106
      %3108 = vmatmul.mubr.f32.gmra.mxu0 %v3107
      %v3109 = vpop.f32.mrf.mxu0
      %v3110 = vadd.f32 %v2997, %v3109
      %v3111 = vpop.f32.mrf.mxu0
      %v3112 = vadd.f32 %v2999, %v3111
      %3113 = vdwg.mxu0
      %3114 = vmatprep.subr.mxu0 0.0
      %3115 = vmatpush1.msra.mxu0 0.0
      %3116 = vmatprep.subr.mxu0 0.0
      %3117 = vmatpush1.msra.mxu0 0.0
      %3118 = vmatprep.subr.mxu0 0.0
      %3119 = vmatpush1.msra.mxu0 0.0
      %3120 = vmatprep.subr.mxu0 0.0
      %3121 = vmatpush1.msra.mxu0 0.0
      %3122 = vmatprep.subr.mxu0 0.0
      %3123 = vmatpush1.msra.mxu0 0.0
      %3124 = vmatprep.subr.mxu0 0.0
      %3125 = vmatpush1.msra.mxu0 0.0
      %3126 = vmatprep.subr.mxu0 0.0
      %3127 = vmatpush1.msra.mxu0 0.0
      %3128 = vmatprep.subr.mxu0 0.0
      %3129 = vmatpush1.msra.mxu0 0.0
      %3130 = vmatprep.subr.mxu0 0.0
      %3131 = vmatpush1.msra.mxu0 0.0
      %3132 = vmatprep.subr.mxu0 0.0
      %3133 = vmatpush1.msra.mxu0 0.0
      %3134 = vmatprep.subr.mxu0 0.0
      %3135 = vmatpush1.msra.mxu0 0.0
      %3136 = vmatprep.subr.mxu0 0.0
      %3137 = vmatpush1.msra.mxu0 0.0
      %v3138 = vand.u32 %v2019, 4294901760
      %3139 = vmatprep.subr.mxu0 %v3138
      %v3140 = vand.u32 %v2018, 4294901760
      %3141 = vmatpush1.msra.mxu0 %v3140
      %v3142 = vand.u32 %v2015, 4294901760
      %3143 = vmatprep.subr.mxu0 %v3142
      %v3144 = vand.u32 %v2014, 4294901760
      %3145 = vmatpush1.msra.mxu0 %v3144
      %v3146 = vand.u32 %v2011, 4294901760
      %3147 = vmatprep.subr.mxu0 %v3146
      %v3148 = vand.u32 %v2010, 4294901760
      %3149 = vmatpush1.msra.mxu0 %v3148
      %v3150 = vand.u32 %v2007, 4294901760
      %3151 = vmatprep.subr.mxu0 %v3150
      %v3152 = vand.u32 %v2006, 4294901760
      %3153 = vmatpush1.msra.mxu0 %v3152
      %3154 = vmatprep.subr.mxu0 0.0
      %3155 = vmatpush2.msra.mxu0 0.0
      %3156 = vmatprep.subr.mxu0 0.0
      %3157 = vmatpush2.msra.mxu0 0.0
      %3158 = vmatprep.subr.mxu0 0.0
      %3159 = vmatpush2.msra.mxu0 0.0
      %3160 = vmatprep.subr.mxu0 0.0
      %3161 = vmatpush2.msra.mxu0 0.0
      %3162 = vmatprep.subr.mxu0 0.0
      %3163 = vmatpush2.msra.mxu0 0.0
      %3164 = vmatprep.subr.mxu0 0.0
      %3165 = vmatpush2.msra.mxu0 0.0
      %3166 = vmatprep.subr.mxu0 0.0
      %3167 = vmatpush2.msra.mxu0 0.0
      %3168 = vmatprep.subr.mxu0 0.0
      %3169 = vmatpush2.msra.mxu0 0.0
      %3170 = vmatprep.subr.mxu0 0.0
      %3171 = vmatpush2.msra.mxu0 0.0
      %3172 = vmatprep.subr.mxu0 0.0
      %3173 = vmatpush2.msra.mxu0 0.0
      %3174 = vmatprep.subr.mxu0 0.0
      %3175 = vmatpush2.msra.mxu0 0.0
      %3176 = vmatprep.subr.mxu0 0.0
      %3177 = vmatpush2.msra.mxu0 0.0
      %3178 = vmatprep.subr.mxu0 0.0
      %3179 = vmatpush2.msra.mxu0 0.0
      %3180 = vmatprep.subr.mxu0 0.0
      %3181 = vmatpush2.msra.mxu0 0.0
      %3182 = vmatprep.subr.mxu0 0.0
      %3183 = vmatpush2.msra.mxu0 0.0
      %3184 = vmatprep.subr.mxu0 0.0
      %3185 = vmatpush2.msra.mxu0 0.0
      %3186 = vmatprep.mubr.f32.mxu0 0.0
      %v3187 = vand.u32 %v2050, 4294901760
      %v3188 = vsub.f32 %v2050, %v3187
      %v3189 = vand.u32 %v3188, 4294901760
      %3190 = vmatmul.mubr.f32.gmra.mxu0 %v3189
      %v3191 = vpop.f32.mrf.mxu0
      %v3192 = vadd.f32 %v3086, %v3191
      %v3193 = vpop.f32.mrf.mxu0
      %v3194 = vadd.f32 %v3088, %v3193
      %3195 = vmatprep.mubr.f32.mxu0 0.0
      %v3196 = vand.u32 %v2053, 4294901760
      %v3197 = vsub.f32 %v2053, %v3196
      %v3198 = vand.u32 %v3197, 4294901760
      %3199 = vmatmul.mubr.f32.gmra.mxu0 %v3198
      %v3200 = vpop.f32.mrf.mxu0
      %v3201 = vadd.f32 %v3094, %v3200
      %v3202 = vpop.f32.mrf.mxu0
      %v3203 = vadd.f32 %v3096, %v3202
      %3204 = vmatprep.mubr.f32.mxu0 0.0
      %v3205 = vand.u32 %v2056, 4294901760
      %v3206 = vsub.f32 %v2056, %v3205
      %v3207 = vand.u32 %v3206, 4294901760
      %3208 = vmatmul.mubr.f32.gmra.mxu0 %v3207
      %v3209 = vpop.f32.mrf.mxu0
      %v3210 = vadd.f32 %v3102, %v3209
      %v3211 = vpop.f32.mrf.mxu0
      %v3212 = vadd.f32 %v3104, %v3211
      %3213 = vmatprep.mubr.f32.mxu0 0.0
      %v3214 = vand.u32 %v2059, 4294901760
      %v3215 = vsub.f32 %v2059, %v3214
      %v3216 = vand.u32 %v3215, 4294901760
      %3217 = vmatmul.mubr.f32.gmra.mxu0 %v3216
      %v3218 = vpop.f32.mrf.mxu0
      %v3219 = vadd.f32 %v3110, %v3218
      %v3220 = vpop.f32.mrf.mxu0
      %v3221 = vadd.f32 %v3112, %v3220
      %3222 = vdwg.mxu0
      %3223 = vmatprep.subr.mxu0 0.0
      %3224 = vmatpush1.msra.mxu0 0.0
      %3225 = vmatprep.subr.mxu0 0.0
      %3226 = vmatpush1.msra.mxu0 0.0
      %3227 = vmatprep.subr.mxu0 0.0
      %3228 = vmatpush1.msra.mxu0 0.0
      %3229 = vmatprep.subr.mxu0 0.0
      %3230 = vmatpush1.msra.mxu0 0.0
      %3231 = vmatprep.subr.mxu0 0.0
      %3232 = vmatpush1.msra.mxu0 0.0
      %3233 = vmatprep.subr.mxu0 0.0
      %3234 = vmatpush1.msra.mxu0 0.0
      %3235 = vmatprep.subr.mxu0 0.0
      %3236 = vmatpush1.msra.mxu0 0.0
      %3237 = vmatprep.subr.mxu0 0.0
      %3238 = vmatpush1.msra.mxu0 0.0
      %3239 = vmatprep.subr.mxu0 0.0
      %3240 = vmatpush1.msra.mxu0 0.0
      %3241 = vmatprep.subr.mxu0 0.0
      %3242 = vmatpush1.msra.mxu0 0.0
      %3243 = vmatprep.subr.mxu0 0.0
      %3244 = vmatpush1.msra.mxu0 0.0
      %3245 = vmatprep.subr.mxu0 0.0
      %3246 = vmatpush1.msra.mxu0 0.0
      %v3247 = vand.u32 %v2019, 4294901760
      %v3248 = vsub.f32 %v2019, %v3247
      %v3249 = vand.u32 %v3248, 4294901760
      %3250 = vmatprep.subr.mxu0 %v3249
      %v3251 = vand.u32 %v2018, 4294901760
      %v3252 = vsub.f32 %v2018, %v3251
      %v3253 = vand.u32 %v3252, 4294901760
      %3254 = vmatpush1.msra.mxu0 %v3253
      %v3255 = vand.u32 %v2015, 4294901760
      %v3256 = vsub.f32 %v2015, %v3255
      %v3257 = vand.u32 %v3256, 4294901760
      %3258 = vmatprep.subr.mxu0 %v3257
      %v3259 = vand.u32 %v2014, 4294901760
      %v3260 = vsub.f32 %v2014, %v3259
      %v3261 = vand.u32 %v3260, 4294901760
      %3262 = vmatpush1.msra.mxu0 %v3261
      %v3263 = vand.u32 %v2011, 4294901760
      %v3264 = vsub.f32 %v2011, %v3263
      %v3265 = vand.u32 %v3264, 4294901760
      %3266 = vmatprep.subr.mxu0 %v3265
      %v3267 = vand.u32 %v2010, 4294901760
      %v3268 = vsub.f32 %v2010, %v3267
      %v3269 = vand.u32 %v3268, 4294901760
      %3270 = vmatpush1.msra.mxu0 %v3269
      %v3271 = vand.u32 %v2007, 4294901760
      %v3272 = vsub.f32 %v2007, %v3271
      %v3273 = vand.u32 %v3272, 4294901760
      %3274 = vmatprep.subr.mxu0 %v3273
      %v3275 = vand.u32 %v2006, 4294901760
      %v3276 = vsub.f32 %v2006, %v3275
      %v3277 = vand.u32 %v3276, 4294901760
      %3278 = vmatpush1.msra.mxu0 %v3277
      %3279 = vmatprep.subr.mxu0 0.0
      %3280 = vmatpush2.msra.mxu0 0.0
      %3281 = vmatprep.subr.mxu0 0.0
      %3282 = vmatpush2.msra.mxu0 0.0
      %3283 = vmatprep.subr.mxu0 0.0
      %3284 = vmatpush2.msra.mxu0 0.0
      %3285 = vmatprep.subr.mxu0 0.0
      %3286 = vmatpush2.msra.mxu0 0.0
      %3287 = vmatprep.subr.mxu0 0.0
      %3288 = vmatpush2.msra.mxu0 0.0
      %3289 = vmatprep.subr.mxu0 0.0
      %3290 = vmatpush2.msra.mxu0 0.0
      %3291 = vmatprep.subr.mxu0 0.0
      %3292 = vmatpush2.msra.mxu0 0.0
      %3293 = vmatprep.subr.mxu0 0.0
      %3294 = vmatpush2.msra.mxu0 0.0
      %3295 = vmatprep.subr.mxu0 0.0
      %3296 = vmatpush2.msra.mxu0 0.0
      %3297 = vmatprep.subr.mxu0 0.0
      %3298 = vmatpush2.msra.mxu0 0.0
      %3299 = vmatprep.subr.mxu0 0.0
      %3300 = vmatpush2.msra.mxu0 0.0
      %3301 = vmatprep.subr.mxu0 0.0
      %3302 = vmatpush2.msra.mxu0 0.0
      %3303 = vmatprep.subr.mxu0 0.0
      %3304 = vmatpush2.msra.mxu0 0.0
      %3305 = vmatprep.subr.mxu0 0.0
      %3306 = vmatpush2.msra.mxu0 0.0
      %3307 = vmatprep.subr.mxu0 0.0
      %3308 = vmatpush2.msra.mxu0 0.0
      %3309 = vmatprep.subr.mxu0 0.0
      %3310 = vmatpush2.msra.mxu0 0.0
      %3311 = vmatprep.mubr.f32.mxu0 0.0
      %v3312 = vand.u32 %v2050, 4294901760
      %3313 = vmatmul.mubr.f32.gmra.mxu0 %v3312
      %v3314 = vpop.f32.mrf.mxu0
      %v3315 = vadd.f32 %v3192, %v3314
      %v3316 = vpop.f32.mrf.mxu0
      %v3317 = vadd.f32 %v3194, %v3316
      %3318 = vmatprep.mubr.f32.mxu0 0.0
      %v3319 = vand.u32 %v2053, 4294901760
      %3320 = vmatmul.mubr.f32.gmra.mxu0 %v3319
      %v3321 = vpop.f32.mrf.mxu0
      %v3322 = vadd.f32 %v3201, %v3321
      %v3323 = vpop.f32.mrf.mxu0
      %v3324 = vadd.f32 %v3203, %v3323
      %3325 = vmatprep.mubr.f32.mxu0 0.0
      %v3326 = vand.u32 %v2056, 4294901760
      %3327 = vmatmul.mubr.f32.gmra.mxu0 %v3326
      %v3328 = vpop.f32.mrf.mxu0
      %v3329 = vadd.f32 %v3210, %v3328
      %v3330 = vpop.f32.mrf.mxu0
      %v3331 = vadd.f32 %v3212, %v3330
      %3332 = vmatprep.mubr.f32.mxu0 0.0
      %v3333 = vand.u32 %v2059, 4294901760
      %3334 = vmatmul.mubr.f32.gmra.mxu0 %v3333
      %v3335 = vpop.f32.mrf.mxu0
      %v3336 = vadd.f32 %v3219, %v3335
      %v3337 = vpop.f32.mrf.mxu0
      %v3338 = vadd.f32 %v3221, %v3337
      %3339 = vdwg.mxu0
      %3340 = vmatprep.subr.mxu0 0.0
      %3341 = vmatpush1.msra.mxu0 0.0
      %3342 = vmatprep.subr.mxu0 0.0
      %3343 = vmatpush1.msra.mxu0 0.0
      %3344 = vmatprep.subr.mxu0 0.0
      %3345 = vmatpush1.msra.mxu0 0.0
      %3346 = vmatprep.subr.mxu0 0.0
      %3347 = vmatpush1.msra.mxu0 0.0
      %3348 = vmatprep.subr.mxu0 0.0
      %3349 = vmatpush1.msra.mxu0 0.0
      %3350 = vmatprep.subr.mxu0 0.0
      %3351 = vmatpush1.msra.mxu0 0.0
      %3352 = vmatprep.subr.mxu0 0.0
      %3353 = vmatpush1.msra.mxu0 0.0
      %3354 = vmatprep.subr.mxu0 0.0
      %3355 = vmatpush1.msra.mxu0 0.0
      %3356 = vmatprep.subr.mxu0 0.0
      %3357 = vmatpush1.msra.mxu0 0.0
      %3358 = vmatprep.subr.mxu0 0.0
      %3359 = vmatpush1.msra.mxu0 0.0
      %3360 = vmatprep.subr.mxu0 0.0
      %3361 = vmatpush1.msra.mxu0 0.0
      %3362 = vmatprep.subr.mxu0 0.0
      %3363 = vmatpush1.msra.mxu0 0.0
      %v3364 = vand.u32 %v2019, 4294901760
      %3365 = vmatprep.subr.mxu0 %v3364
      %v3366 = vand.u32 %v2018, 4294901760
      %3367 = vmatpush1.msra.mxu0 %v3366
      %v3368 = vand.u32 %v2015, 4294901760
      %3369 = vmatprep.subr.mxu0 %v3368
      %v3370 = vand.u32 %v2014, 4294901760
      %3371 = vmatpush1.msra.mxu0 %v3370
      %v3372 = vand.u32 %v2011, 4294901760
      %3373 = vmatprep.subr.mxu0 %v3372
      %v3374 = vand.u32 %v2010, 4294901760
      %3375 = vmatpush1.msra.mxu0 %v3374
      %v3376 = vand.u32 %v2007, 4294901760
      %3377 = vmatprep.subr.mxu0 %v3376
      %v3378 = vand.u32 %v2006, 4294901760
      %3379 = vmatpush1.msra.mxu0 %v3378
      %3380 = vmatprep.subr.mxu0 0.0
      %3381 = vmatpush2.msra.mxu0 0.0
      %3382 = vmatprep.subr.mxu0 0.0
      %3383 = vmatpush2.msra.mxu0 0.0
      %3384 = vmatprep.subr.mxu0 0.0
      %3385 = vmatpush2.msra.mxu0 0.0
      %3386 = vmatprep.subr.mxu0 0.0
      %3387 = vmatpush2.msra.mxu0 0.0
      %3388 = vmatprep.subr.mxu0 0.0
      %3389 = vmatpush2.msra.mxu0 0.0
      %3390 = vmatprep.subr.mxu0 0.0
      %3391 = vmatpush2.msra.mxu0 0.0
      %3392 = vmatprep.subr.mxu0 0.0
      %3393 = vmatpush2.msra.mxu0 0.0
      %3394 = vmatprep.subr.mxu0 0.0
      %3395 = vmatpush2.msra.mxu0 0.0
      %3396 = vmatprep.subr.mxu0 0.0
      %3397 = vmatpush2.msra.mxu0 0.0
      %3398 = vmatprep.subr.mxu0 0.0
      %3399 = vmatpush2.msra.mxu0 0.0
      %3400 = vmatprep.subr.mxu0 0.0
      %3401 = vmatpush2.msra.mxu0 0.0
      %3402 = vmatprep.subr.mxu0 0.0
      %3403 = vmatpush2.msra.mxu0 0.0
      %3404 = vmatprep.subr.mxu0 0.0
      %3405 = vmatpush2.msra.mxu0 0.0
      %3406 = vmatprep.subr.mxu0 0.0
      %3407 = vmatpush2.msra.mxu0 0.0
      %3408 = vmatprep.subr.mxu0 0.0
      %3409 = vmatpush2.msra.mxu0 0.0
      %3410 = vmatprep.subr.mxu0 0.0
      %3411 = vmatpush2.msra.mxu0 0.0
      %3412 = vmatprep.mubr.f32.mxu0 0.0
      %v3413 = vand.u32 %v2050, 4294901760
      %3414 = vmatmul.mubr.f32.gmra.mxu0 %v3413
      %v3415 = vpop.f32.mrf.mxu0
      %v3416 = vadd.f32 %v3315, %v3415
      %v3417 = vpop.f32.mrf.mxu0
      %v3418 = vadd.f32 %v3317, %v3417
      %3419 = vmatprep.mubr.f32.mxu0 0.0
      %v3420 = vand.u32 %v2053, 4294901760
      %3421 = vmatmul.mubr.f32.gmra.mxu0 %v3420
      %v3422 = vpop.f32.mrf.mxu0
      %v3423 = vadd.f32 %v3322, %v3422
      %v3424 = vpop.f32.mrf.mxu0
      %v3425 = vadd.f32 %v3324, %v3424
      %3426 = vmatprep.mubr.f32.mxu0 0.0
      %v3427 = vand.u32 %v2056, 4294901760
      %3428 = vmatmul.mubr.f32.gmra.mxu0 %v3427
      %v3429 = vpop.f32.mrf.mxu0
      %v3430 = vadd.f32 %v3329, %v3429
      %v3431 = vpop.f32.mrf.mxu0
      %v3432 = vadd.f32 %v3331, %v3431
      %3433 = vmatprep.mubr.f32.mxu0 0.0
      %v3434 = vand.u32 %v2059, 4294901760
      %3435 = vmatmul.mubr.f32.gmra.mxu0 %v3434
      %v3436 = vpop.f32.mrf.mxu0
      %v3437 = vadd.f32 %v3336, %v3436
      %v3438 = vpop.f32.mrf.mxu0
      %v3439 = vadd.f32 %v3338, %v3438
      %3440 = vdwg.mxu0
      %v3441 = vmax.f32 %v2726, 0.0
      %v3442 = vmax.f32 %v2728, 0.0
      %v3443 = vmax.f32 %v3416, 0.0
      %v3444 = vmax.f32 %v3418, 0.0
      %v3445 = vmax.f32 %v2733, 0.0
      %v3446 = vmax.f32 %v2735, 0.0
      %v3447 = vmax.f32 %v3423, 0.0
      %v3448 = vmax.f32 %v3425, 0.0
      %v3449 = vmax.f32 %v2740, 0.0
      %v3450 = vmax.f32 %v2742, 0.0
      %v3451 = vmax.f32 %v3430, 0.0
      %v3452 = vmax.f32 %v3432, 0.0
      %v3453 = vmax.f32 %v2747, 0.0
      %v3454 = vmax.f32 %v2749, 0.0
      %v3455 = vmax.f32 %v3437, 0.0
      %v3456 = vmax.f32 %v3439, 0.0
      %s3457 = scalar_lea.vmem %s4, 32
      %v3458 = vld [vmem:[%s3457] sm:$0xff]
      %v3459 = vld [vmem:[%s3457 + $0x8] sm:$0xff]
      %v3460 = vld [vmem:[%s3457 + $0x10] sm:$0xff]
      %v3461 = vld [vmem:[%s3457 + $0x18] sm:$0xff]
      %s3462 = scalar_lea.vmem %s6, 64
      %v3463 = vld [vmem:[%s3462] sm:$0xff]
      %v3464 = vld [vmem:[%s3462 + $0x8] sm:$0xff]
      %v3465 = vld [vmem:[%s3462 + $0x10] sm:$0xff]
      %v3466 = vld [vmem:[%s3462 + $0x18] sm:$0xff]
      %3468 = vset.pattern.permute.xlu0 0
      %3469 = vperm.xlu0 %3468, %v3463
      %v3470 = vpop.permute.xlu0 %3469
      %3473 = vset.pattern.permute.xlu0 0
      %3474 = vperm.xlu0 %3473, %v3464
      %v3475 = vpop.permute.xlu0 %3474
      %3478 = vset.pattern.permute.xlu0 0
      %3479 = vperm.xlu0 %3478, %v3465
      %v3480 = vpop.permute.xlu0 %3479
      %3483 = vset.pattern.permute.xlu0 0
      %3484 = vperm.xlu0 %3483, %v3466
      %v3485 = vpop.permute.xlu0 %3484
      %v3488 = vsel %vm611, %v3458, 0
      %v3491 = vsel %vm611, %v3459, 0
      %v3494 = vsel %vm611, %v3460, 0
      %v3497 = vsel %vm611, %v3461, 0
      %3499 = vmatprep.subr.mxu0 0.0
      %3500 = vmatpush1.msra.mxu0 0.0
      %3501 = vmatprep.subr.mxu0 0.0
      %3502 = vmatpush1.msra.mxu0 0.0
      %3503 = vmatprep.subr.mxu0 0.0
      %3504 = vmatpush1.msra.mxu0 0.0
      %3505 = vmatprep.subr.mxu0 0.0
      %3506 = vmatpush1.msra.mxu0 0.0
      %3507 = vmatprep.subr.mxu0 0.0
      %3508 = vmatpush1.msra.mxu0 0.0
      %3509 = vmatprep.subr.mxu0 0.0
      %3510 = vmatpush1.msra.mxu0 0.0
      %3511 = vmatprep.subr.mxu0 0.0
      %3512 = vmatpush1.msra.mxu0 0.0
      %3513 = vmatprep.subr.mxu0 0.0
      %3514 = vmatpush1.msra.mxu0 0.0
      %3515 = vmatprep.subr.mxu0 0.0
      %3516 = vmatpush1.msra.mxu0 0.0
      %3517 = vmatprep.subr.mxu0 0.0
      %3518 = vmatpush1.msra.mxu0 0.0
      %3519 = vmatprep.subr.mxu0 0.0
      %3520 = vmatpush1.msra.mxu0 0.0
      %3521 = vmatprep.subr.mxu0 0.0
      %3522 = vmatpush1.msra.mxu0 0.0
      %v3523 = vand.u32 %v3454, 4294901760
      %3524 = vmatprep.subr.mxu0 %v3523
      %v3525 = vand.u32 %v3453, 4294901760
      %3526 = vmatpush1.msra.mxu0 %v3525
      %v3527 = vand.u32 %v3450, 4294901760
      %3528 = vmatprep.subr.mxu0 %v3527
      %v3529 = vand.u32 %v3449, 4294901760
      %3530 = vmatpush1.msra.mxu0 %v3529
      %v3531 = vand.u32 %v3446, 4294901760
      %3532 = vmatprep.subr.mxu0 %v3531
      %v3533 = vand.u32 %v3445, 4294901760
      %3534 = vmatpush1.msra.mxu0 %v3533
      %v3535 = vand.u32 %v3442, 4294901760
      %3536 = vmatprep.subr.mxu0 %v3535
      %v3537 = vand.u32 %v3441, 4294901760
      %3538 = vmatpush1.msra.mxu0 %v3537
      %3539 = vmatprep.subr.mxu0 0.0
      %3540 = vmatpush2.msra.mxu0 0.0
      %3541 = vmatprep.subr.mxu0 0.0
      %3542 = vmatpush2.msra.mxu0 0.0
      %3543 = vmatprep.subr.mxu0 0.0
      %3544 = vmatpush2.msra.mxu0 0.0
      %3545 = vmatprep.subr.mxu0 0.0
      %3546 = vmatpush2.msra.mxu0 0.0
      %3547 = vmatprep.subr.mxu0 0.0
      %3548 = vmatpush2.msra.mxu0 0.0
      %3549 = vmatprep.subr.mxu0 0.0
      %3550 = vmatpush2.msra.mxu0 0.0
      %3551 = vmatprep.subr.mxu0 0.0
      %3552 = vmatpush2.msra.mxu0 0.0
      %3553 = vmatprep.subr.mxu0 0.0
      %3554 = vmatpush2.msra.mxu0 0.0
      %3555 = vmatprep.subr.mxu0 0.0
      %3556 = vmatpush2.msra.mxu0 0.0
      %3557 = vmatprep.subr.mxu0 0.0
      %3558 = vmatpush2.msra.mxu0 0.0
      %3559 = vmatprep.subr.mxu0 0.0
      %3560 = vmatpush2.msra.mxu0 0.0
      %3561 = vmatprep.subr.mxu0 0.0
      %3562 = vmatpush2.msra.mxu0 0.0
      %3563 = vmatprep.subr.mxu0 0.0
      %3564 = vmatpush2.msra.mxu0 0.0
      %3565 = vmatprep.subr.mxu0 0.0
      %3566 = vmatpush2.msra.mxu0 0.0
      %3567 = vmatprep.subr.mxu0 0.0
      %3568 = vmatpush2.msra.mxu0 0.0
      %3569 = vmatprep.subr.mxu0 0.0
      %3570 = vmatpush2.msra.mxu0 0.0
      %3571 = vmatprep.mubr.f32.mxu0 0.0
      %v3572 = vand.u32 %v3488, 4294901760
      %v3573 = vsub.f32 %v3488, %v3572
      %v3574 = vand.u32 %v3573, 4294901760
      %v3575 = vsub.f32 %v3573, %v3574
      %v3576 = vand.u32 %v3575, 4294901760
      %3577 = vmatmul.mubr.f32.gmra.mxu0 %v3576
      %v3578 = vpop.f32.mrf.mxu0
      %v3579 = vadd.f32 %v3470, %v3578
      %v3580 = vpop.f32.mrf.mxu0
      %v3581 = vadd.f32 %v3470, %v3580
      %3582 = vmatprep.mubr.f32.mxu0 0.0
      %v3583 = vand.u32 %v3491, 4294901760
      %v3584 = vsub.f32 %v3491, %v3583
      %v3585 = vand.u32 %v3584, 4294901760
      %v3586 = vsub.f32 %v3584, %v3585
      %v3587 = vand.u32 %v3586, 4294901760
      %3588 = vmatmul.mubr.f32.gmra.mxu0 %v3587
      %v3589 = vpop.f32.mrf.mxu0
      %v3590 = vadd.f32 %v3475, %v3589
      %v3591 = vpop.f32.mrf.mxu0
      %v3592 = vadd.f32 %v3475, %v3591
      %3593 = vmatprep.mubr.f32.mxu0 0.0
      %v3594 = vand.u32 %v3494, 4294901760
      %v3595 = vsub.f32 %v3494, %v3594
      %v3596 = vand.u32 %v3595, 4294901760
      %v3597 = vsub.f32 %v3595, %v3596
      %v3598 = vand.u32 %v3597, 4294901760
      %3599 = vmatmul.mubr.f32.gmra.mxu0 %v3598
      %v3600 = vpop.f32.mrf.mxu0
      %v3601 = vadd.f32 %v3480, %v3600
      %v3602 = vpop.f32.mrf.mxu0
      %v3603 = vadd.f32 %v3480, %v3602
      %3604 = vmatprep.mubr.f32.mxu0 0.0
      %v3605 = vand.u32 %v3497, 4294901760
      %v3606 = vsub.f32 %v3497, %v3605
      %v3607 = vand.u32 %v3606, 4294901760
      %v3608 = vsub.f32 %v3606, %v3607
      %v3609 = vand.u32 %v3608, 4294901760
      %3610 = vmatmul.mubr.f32.gmra.mxu0 %v3609
      %v3611 = vpop.f32.mrf.mxu0
      %v3612 = vadd.f32 %v3485, %v3611
      %v3613 = vpop.f32.mrf.mxu0
      %v3614 = vadd.f32 %v3485, %v3613
      %3615 = vdwg.mxu0
      %3616 = vmatprep.subr.mxu0 0.0
      %3617 = vmatpush1.msra.mxu0 0.0
      %3618 = vmatprep.subr.mxu0 0.0
      %3619 = vmatpush1.msra.mxu0 0.0
      %3620 = vmatprep.subr.mxu0 0.0
      %3621 = vmatpush1.msra.mxu0 0.0
      %3622 = vmatprep.subr.mxu0 0.0
      %3623 = vmatpush1.msra.mxu0 0.0
      %3624 = vmatprep.subr.mxu0 0.0
      %3625 = vmatpush1.msra.mxu0 0.0
      %3626 = vmatprep.subr.mxu0 0.0
      %3627 = vmatpush1.msra.mxu0 0.0
      %3628 = vmatprep.subr.mxu0 0.0
      %3629 = vmatpush1.msra.mxu0 0.0
      %3630 = vmatprep.subr.mxu0 0.0
      %3631 = vmatpush1.msra.mxu0 0.0
      %3632 = vmatprep.subr.mxu0 0.0
      %3633 = vmatpush1.msra.mxu0 0.0
      %3634 = vmatprep.subr.mxu0 0.0
      %3635 = vmatpush1.msra.mxu0 0.0
      %3636 = vmatprep.subr.mxu0 0.0
      %3637 = vmatpush1.msra.mxu0 0.0
      %3638 = vmatprep.subr.mxu0 0.0
      %3639 = vmatpush1.msra.mxu0 0.0
      %v3640 = vand.u32 %v3454, 4294901760
      %v3641 = vsub.f32 %v3454, %v3640
      %v3642 = vand.u32 %v3641, 4294901760
      %v3643 = vsub.f32 %v3641, %v3642
      %v3644 = vand.u32 %v3643, 4294901760
      %3645 = vmatprep.subr.mxu0 %v3644
      %v3646 = vand.u32 %v3453, 4294901760
      %v3647 = vsub.f32 %v3453, %v3646
      %v3648 = vand.u32 %v3647, 4294901760
      %v3649 = vsub.f32 %v3647, %v3648
      %v3650 = vand.u32 %v3649, 4294901760
      %3651 = vmatpush1.msra.mxu0 %v3650
      %v3652 = vand.u32 %v3450, 4294901760
      %v3653 = vsub.f32 %v3450, %v3652
      %v3654 = vand.u32 %v3653, 4294901760
      %v3655 = vsub.f32 %v3653, %v3654
      %v3656 = vand.u32 %v3655, 4294901760
      %3657 = vmatprep.subr.mxu0 %v3656
      %v3658 = vand.u32 %v3449, 4294901760
      %v3659 = vsub.f32 %v3449, %v3658
      %v3660 = vand.u32 %v3659, 4294901760
      %v3661 = vsub.f32 %v3659, %v3660
      %v3662 = vand.u32 %v3661, 4294901760
      %3663 = vmatpush1.msra.mxu0 %v3662
      %v3664 = vand.u32 %v3446, 4294901760
      %v3665 = vsub.f32 %v3446, %v3664
      %v3666 = vand.u32 %v3665, 4294901760
      %v3667 = vsub.f32 %v3665, %v3666
      %v3668 = vand.u32 %v3667, 4294901760
      %3669 = vmatprep.subr.mxu0 %v3668
      %v3670 = vand.u32 %v3445, 4294901760
      %v3671 = vsub.f32 %v3445, %v3670
      %v3672 = vand.u32 %v3671, 4294901760
      %v3673 = vsub.f32 %v3671, %v3672
      %v3674 = vand.u32 %v3673, 4294901760
      %3675 = vmatpush1.msra.mxu0 %v3674
      %v3676 = vand.u32 %v3442, 4294901760
      %v3677 = vsub.f32 %v3442, %v3676
      %v3678 = vand.u32 %v3677, 4294901760
      %v3679 = vsub.f32 %v3677, %v3678
      %v3680 = vand.u32 %v3679, 4294901760
      %3681 = vmatprep.subr.mxu0 %v3680
      %v3682 = vand.u32 %v3441, 4294901760
      %v3683 = vsub.f32 %v3441, %v3682
      %v3684 = vand.u32 %v3683, 4294901760
      %v3685 = vsub.f32 %v3683, %v3684
      %v3686 = vand.u32 %v3685, 4294901760
      %3687 = vmatpush1.msra.mxu0 %v3686
      %3688 = vmatprep.subr.mxu0 0.0
      %3689 = vmatpush2.msra.mxu0 0.0
      %3690 = vmatprep.subr.mxu0 0.0
      %3691 = vmatpush2.msra.mxu0 0.0
      %3692 = vmatprep.subr.mxu0 0.0
      %3693 = vmatpush2.msra.mxu0 0.0
      %3694 = vmatprep.subr.mxu0 0.0
      %3695 = vmatpush2.msra.mxu0 0.0
      %3696 = vmatprep.subr.mxu0 0.0
      %3697 = vmatpush2.msra.mxu0 0.0
      %3698 = vmatprep.subr.mxu0 0.0
      %3699 = vmatpush2.msra.mxu0 0.0
      %3700 = vmatprep.subr.mxu0 0.0
      %3701 = vmatpush2.msra.mxu0 0.0
      %3702 = vmatprep.subr.mxu0 0.0
      %3703 = vmatpush2.msra.mxu0 0.0
      %3704 = vmatprep.subr.mxu0 0.0
      %3705 = vmatpush2.msra.mxu0 0.0
      %3706 = vmatprep.subr.mxu0 0.0
      %3707 = vmatpush2.msra.mxu0 0.0
      %3708 = vmatprep.subr.mxu0 0.0
      %3709 = vmatpush2.msra.mxu0 0.0
      %3710 = vmatprep.subr.mxu0 0.0
      %3711 = vmatpush2.msra.mxu0 0.0
      %3712 = vmatprep.subr.mxu0 0.0
      %3713 = vmatpush2.msra.mxu0 0.0
      %3714 = vmatprep.subr.mxu0 0.0
      %3715 = vmatpush2.msra.mxu0 0.0
      %3716 = vmatprep.subr.mxu0 0.0
      %3717 = vmatpush2.msra.mxu0 0.0
      %3718 = vmatprep.subr.mxu0 0.0
      %3719 = vmatpush2.msra.mxu0 0.0
      %3720 = vmatprep.mubr.f32.mxu0 0.0
      %v3721 = vand.u32 %v3488, 4294901760
      %3722 = vmatmul.mubr.f32.gmra.mxu0 %v3721
      %v3723 = vpop.f32.mrf.mxu0
      %v3724 = vadd.f32 %v3579, %v3723
      %v3725 = vpop.f32.mrf.mxu0
      %v3726 = vadd.f32 %v3581, %v3725
      %3727 = vmatprep.mubr.f32.mxu0 0.0
      %v3728 = vand.u32 %v3491, 4294901760
      %3729 = vmatmul.mubr.f32.gmra.mxu0 %v3728
      %v3730 = vpop.f32.mrf.mxu0
      %v3731 = vadd.f32 %v3590, %v3730
      %v3732 = vpop.f32.mrf.mxu0
      %v3733 = vadd.f32 %v3592, %v3732
      %3734 = vmatprep.mubr.f32.mxu0 0.0
      %v3735 = vand.u32 %v3494, 4294901760
      %3736 = vmatmul.mubr.f32.gmra.mxu0 %v3735
      %v3737 = vpop.f32.mrf.mxu0
      %v3738 = vadd.f32 %v3601, %v3737
      %v3739 = vpop.f32.mrf.mxu0
      %v3740 = vadd.f32 %v3603, %v3739
      %3741 = vmatprep.mubr.f32.mxu0 0.0
      %v3742 = vand.u32 %v3497, 4294901760
      %3743 = vmatmul.mubr.f32.gmra.mxu0 %v3742
      %v3744 = vpop.f32.mrf.mxu0
      %v3745 = vadd.f32 %v3612, %v3744
      %v3746 = vpop.f32.mrf.mxu0
      %v3747 = vadd.f32 %v3614, %v3746
      %3748 = vdwg.mxu0
      %3749 = vmatprep.subr.mxu0 0.0
      %3750 = vmatpush1.msra.mxu0 0.0
      %3751 = vmatprep.subr.mxu0 0.0
      %3752 = vmatpush1.msra.mxu0 0.0
      %3753 = vmatprep.subr.mxu0 0.0
      %3754 = vmatpush1.msra.mxu0 0.0
      %3755 = vmatprep.subr.mxu0 0.0
      %3756 = vmatpush1.msra.mxu0 0.0
      %3757 = vmatprep.subr.mxu0 0.0
      %3758 = vmatpush1.msra.mxu0 0.0
      %3759 = vmatprep.subr.mxu0 0.0
      %3760 = vmatpush1.msra.mxu0 0.0
      %3761 = vmatprep.subr.mxu0 0.0
      %3762 = vmatpush1.msra.mxu0 0.0
      %3763 = vmatprep.subr.mxu0 0.0
      %3764 = vmatpush1.msra.mxu0 0.0
      %3765 = vmatprep.subr.mxu0 0.0
      %3766 = vmatpush1.msra.mxu0 0.0
      %3767 = vmatprep.subr.mxu0 0.0
      %3768 = vmatpush1.msra.mxu0 0.0
      %3769 = vmatprep.subr.mxu0 0.0
      %3770 = vmatpush1.msra.mxu0 0.0
      %3771 = vmatprep.subr.mxu0 0.0
      %3772 = vmatpush1.msra.mxu0 0.0
      %v3773 = vand.u32 %v3454, 4294901760
      %v3774 = vsub.f32 %v3454, %v3773
      %3775 = vmatprep.subr.mxu0 %v3774
      %v3776 = vand.u32 %v3453, 4294901760
      %v3777 = vsub.f32 %v3453, %v3776
      %3778 = vmatpush1.msra.mxu0 %v3777
      %v3779 = vand.u32 %v3450, 4294901760
      %v3780 = vsub.f32 %v3450, %v3779
      %3781 = vmatprep.subr.mxu0 %v3780
      %v3782 = vand.u32 %v3449, 4294901760
      %v3783 = vsub.f32 %v3449, %v3782
      %3784 = vmatpush1.msra.mxu0 %v3783
      %v3785 = vand.u32 %v3446, 4294901760
      %v3786 = vsub.f32 %v3446, %v3785
      %3787 = vmatprep.subr.mxu0 %v3786
      %v3788 = vand.u32 %v3445, 4294901760
      %v3789 = vsub.f32 %v3445, %v3788
      %3790 = vmatpush1.msra.mxu0 %v3789
      %v3791 = vand.u32 %v3442, 4294901760
      %v3792 = vsub.f32 %v3442, %v3791
      %3793 = vmatprep.subr.mxu0 %v3792
      %v3794 = vand.u32 %v3441, 4294901760
      %v3795 = vsub.f32 %v3441, %v3794
      %3796 = vmatpush1.msra.mxu0 %v3795
      %3797 = vmatprep.subr.mxu0 0.0
      %3798 = vmatpush2.msra.mxu0 0.0
      %3799 = vmatprep.subr.mxu0 0.0
      %3800 = vmatpush2.msra.mxu0 0.0
      %3801 = vmatprep.subr.mxu0 0.0
      %3802 = vmatpush2.msra.mxu0 0.0
      %3803 = vmatprep.subr.mxu0 0.0
      %3804 = vmatpush2.msra.mxu0 0.0
      %3805 = vmatprep.subr.mxu0 0.0
      %3806 = vmatpush2.msra.mxu0 0.0
      %3807 = vmatprep.subr.mxu0 0.0
      %3808 = vmatpush2.msra.mxu0 0.0
      %3809 = vmatprep.subr.mxu0 0.0
      %3810 = vmatpush2.msra.mxu0 0.0
      %3811 = vmatprep.subr.mxu0 0.0
      %3812 = vmatpush2.msra.mxu0 0.0
      %3813 = vmatprep.subr.mxu0 0.0
      %3814 = vmatpush2.msra.mxu0 0.0
      %3815 = vmatprep.subr.mxu0 0.0
      %3816 = vmatpush2.msra.mxu0 0.0
      %3817 = vmatprep.subr.mxu0 0.0
      %3818 = vmatpush2.msra.mxu0 0.0
      %3819 = vmatprep.subr.mxu0 0.0
      %3820 = vmatpush2.msra.mxu0 0.0
      %3821 = vmatprep.subr.mxu0 0.0
      %3822 = vmatpush2.msra.mxu0 0.0
      %3823 = vmatprep.subr.mxu0 0.0
      %3824 = vmatpush2.msra.mxu0 0.0
      %3825 = vmatprep.subr.mxu0 0.0
      %3826 = vmatpush2.msra.mxu0 0.0
      %3827 = vmatprep.subr.mxu0 0.0
      %3828 = vmatpush2.msra.mxu0 0.0
      %3829 = vmatprep.mubr.f32.mxu0 0.0
      %v3830 = vand.u32 %v3488, 4294901760
      %v3831 = vsub.f32 %v3488, %v3830
      %3832 = vmatmul.mubr.f32.gmra.mxu0 %v3831
      %v3833 = vpop.f32.mrf.mxu0
      %v3834 = vadd.f32 %v3724, %v3833
      %v3835 = vpop.f32.mrf.mxu0
      %v3836 = vadd.f32 %v3726, %v3835
      %3837 = vmatprep.mubr.f32.mxu0 0.0
      %v3838 = vand.u32 %v3491, 4294901760
      %v3839 = vsub.f32 %v3491, %v3838
      %3840 = vmatmul.mubr.f32.gmra.mxu0 %v3839
      %v3841 = vpop.f32.mrf.mxu0
      %v3842 = vadd.f32 %v3731, %v3841
      %v3843 = vpop.f32.mrf.mxu0
      %v3844 = vadd.f32 %v3733, %v3843
      %3845 = vmatprep.mubr.f32.mxu0 0.0
      %v3846 = vand.u32 %v3494, 4294901760
      %v3847 = vsub.f32 %v3494, %v3846
      %3848 = vmatmul.mubr.f32.gmra.mxu0 %v3847
      %v3849 = vpop.f32.mrf.mxu0
      %v3850 = vadd.f32 %v3738, %v3849
      %v3851 = vpop.f32.mrf.mxu0
      %v3852 = vadd.f32 %v3740, %v3851
      %3853 = vmatprep.mubr.f32.mxu0 0.0
      %v3854 = vand.u32 %v3497, 4294901760
      %v3855 = vsub.f32 %v3497, %v3854
      %3856 = vmatmul.mubr.f32.gmra.mxu0 %v3855
      %v3857 = vpop.f32.mrf.mxu0
      %v3858 = vadd.f32 %v3745, %v3857
      %v3859 = vpop.f32.mrf.mxu0
      %v3860 = vadd.f32 %v3747, %v3859
      %3861 = vdwg.mxu0
      %3862 = vmatprep.subr.mxu0 0.0
      %3863 = vmatpush1.msra.mxu0 0.0
      %3864 = vmatprep.subr.mxu0 0.0
      %3865 = vmatpush1.msra.mxu0 0.0
      %3866 = vmatprep.subr.mxu0 0.0
      %3867 = vmatpush1.msra.mxu0 0.0
      %3868 = vmatprep.subr.mxu0 0.0
      %3869 = vmatpush1.msra.mxu0 0.0
      %3870 = vmatprep.subr.mxu0 0.0
      %3871 = vmatpush1.msra.mxu0 0.0
      %3872 = vmatprep.subr.mxu0 0.0
      %3873 = vmatpush1.msra.mxu0 0.0
      %3874 = vmatprep.subr.mxu0 0.0
      %3875 = vmatpush1.msra.mxu0 0.0
      %3876 = vmatprep.subr.mxu0 0.0
      %3877 = vmatpush1.msra.mxu0 0.0
      %3878 = vmatprep.subr.mxu0 0.0
      %3879 = vmatpush1.msra.mxu0 0.0
      %3880 = vmatprep.subr.mxu0 0.0
      %3881 = vmatpush1.msra.mxu0 0.0
      %3882 = vmatprep.subr.mxu0 0.0
      %3883 = vmatpush1.msra.mxu0 0.0
      %3884 = vmatprep.subr.mxu0 0.0
      %3885 = vmatpush1.msra.mxu0 0.0
      %v3886 = vand.u32 %v3454, 4294901760
      %3887 = vmatprep.subr.mxu0 %v3886
      %v3888 = vand.u32 %v3453, 4294901760
      %3889 = vmatpush1.msra.mxu0 %v3888
      %v3890 = vand.u32 %v3450, 4294901760
      %3891 = vmatprep.subr.mxu0 %v3890
      %v3892 = vand.u32 %v3449, 4294901760
      %3893 = vmatpush1.msra.mxu0 %v3892
      %v3894 = vand.u32 %v3446, 4294901760
      %3895 = vmatprep.subr.mxu0 %v3894
      %v3896 = vand.u32 %v3445, 4294901760
      %3897 = vmatpush1.msra.mxu0 %v3896
      %v3898 = vand.u32 %v3442, 4294901760
      %3899 = vmatprep.subr.mxu0 %v3898
      %v3900 = vand.u32 %v3441, 4294901760
      %3901 = vmatpush1.msra.mxu0 %v3900
      %3902 = vmatprep.subr.mxu0 0.0
      %3903 = vmatpush2.msra.mxu0 0.0
      %3904 = vmatprep.subr.mxu0 0.0
      %3905 = vmatpush2.msra.mxu0 0.0
      %3906 = vmatprep.subr.mxu0 0.0
      %3907 = vmatpush2.msra.mxu0 0.0
      %3908 = vmatprep.subr.mxu0 0.0
      %3909 = vmatpush2.msra.mxu0 0.0
      %3910 = vmatprep.subr.mxu0 0.0
      %3911 = vmatpush2.msra.mxu0 0.0
      %3912 = vmatprep.subr.mxu0 0.0
      %3913 = vmatpush2.msra.mxu0 0.0
      %3914 = vmatprep.subr.mxu0 0.0
      %3915 = vmatpush2.msra.mxu0 0.0
      %3916 = vmatprep.subr.mxu0 0.0
      %3917 = vmatpush2.msra.mxu0 0.0
      %3918 = vmatprep.subr.mxu0 0.0
      %3919 = vmatpush2.msra.mxu0 0.0
      %3920 = vmatprep.subr.mxu0 0.0
      %3921 = vmatpush2.msra.mxu0 0.0
      %3922 = vmatprep.subr.mxu0 0.0
      %3923 = vmatpush2.msra.mxu0 0.0
      %3924 = vmatprep.subr.mxu0 0.0
      %3925 = vmatpush2.msra.mxu0 0.0
      %3926 = vmatprep.subr.mxu0 0.0
      %3927 = vmatpush2.msra.mxu0 0.0
      %3928 = vmatprep.subr.mxu0 0.0
      %3929 = vmatpush2.msra.mxu0 0.0
      %3930 = vmatprep.subr.mxu0 0.0
      %3931 = vmatpush2.msra.mxu0 0.0
      %3932 = vmatprep.subr.mxu0 0.0
      %3933 = vmatpush2.msra.mxu0 0.0
      %3934 = vmatprep.mubr.f32.mxu0 0.0
      %v3935 = vand.u32 %v3488, 4294901760
      %v3936 = vsub.f32 %v3488, %v3935
      %v3937 = vand.u32 %v3936, 4294901760
      %3938 = vmatmul.mubr.f32.gmra.mxu0 %v3937
      %v3939 = vpop.f32.mrf.mxu0
      %v3940 = vadd.f32 %v3834, %v3939
      %v3941 = vpop.f32.mrf.mxu0
      %v3942 = vadd.f32 %v3836, %v3941
      %3943 = vmatprep.mubr.f32.mxu0 0.0
      %v3944 = vand.u32 %v3491, 4294901760
      %v3945 = vsub.f32 %v3491, %v3944
      %v3946 = vand.u32 %v3945, 4294901760
      %3947 = vmatmul.mubr.f32.gmra.mxu0 %v3946
      %v3948 = vpop.f32.mrf.mxu0
      %v3949 = vadd.f32 %v3842, %v3948
      %v3950 = vpop.f32.mrf.mxu0
      %v3951 = vadd.f32 %v3844, %v3950
      %3952 = vmatprep.mubr.f32.mxu0 0.0
      %v3953 = vand.u32 %v3494, 4294901760
      %v3954 = vsub.f32 %v3494, %v3953
      %v3955 = vand.u32 %v3954, 4294901760
      %3956 = vmatmul.mubr.f32.gmra.mxu0 %v3955
      %v3957 = vpop.f32.mrf.mxu0
      %v3958 = vadd.f32 %v3850, %v3957
      %v3959 = vpop.f32.mrf.mxu0
      %v3960 = vadd.f32 %v3852, %v3959
      %3961 = vmatprep.mubr.f32.mxu0 0.0
      %v3962 = vand.u32 %v3497, 4294901760
      %v3963 = vsub.f32 %v3497, %v3962
      %v3964 = vand.u32 %v3963, 4294901760
      %3965 = vmatmul.mubr.f32.gmra.mxu0 %v3964
      %v3966 = vpop.f32.mrf.mxu0
      %v3967 = vadd.f32 %v3858, %v3966
      %v3968 = vpop.f32.mrf.mxu0
      %v3969 = vadd.f32 %v3860, %v3968
      %3970 = vdwg.mxu0
      %3971 = vmatprep.subr.mxu0 0.0
      %3972 = vmatpush1.msra.mxu0 0.0
      %3973 = vmatprep.subr.mxu0 0.0
      %3974 = vmatpush1.msra.mxu0 0.0
      %3975 = vmatprep.subr.mxu0 0.0
      %3976 = vmatpush1.msra.mxu0 0.0
      %3977 = vmatprep.subr.mxu0 0.0
      %3978 = vmatpush1.msra.mxu0 0.0
      %3979 = vmatprep.subr.mxu0 0.0
      %3980 = vmatpush1.msra.mxu0 0.0
      %3981 = vmatprep.subr.mxu0 0.0
      %3982 = vmatpush1.msra.mxu0 0.0
      %3983 = vmatprep.subr.mxu0 0.0
      %3984 = vmatpush1.msra.mxu0 0.0
      %3985 = vmatprep.subr.mxu0 0.0
      %3986 = vmatpush1.msra.mxu0 0.0
      %3987 = vmatprep.subr.mxu0 0.0
      %3988 = vmatpush1.msra.mxu0 0.0
      %3989 = vmatprep.subr.mxu0 0.0
      %3990 = vmatpush1.msra.mxu0 0.0
      %3991 = vmatprep.subr.mxu0 0.0
      %3992 = vmatpush1.msra.mxu0 0.0
      %3993 = vmatprep.subr.mxu0 0.0
      %3994 = vmatpush1.msra.mxu0 0.0
      %v3995 = vand.u32 %v3454, 4294901760
      %v3996 = vsub.f32 %v3454, %v3995
      %v3997 = vand.u32 %v3996, 4294901760
      %3998 = vmatprep.subr.mxu0 %v3997
      %v3999 = vand.u32 %v3453, 4294901760
      %v4000 = vsub.f32 %v3453, %v3999
      %v4001 = vand.u32 %v4000, 4294901760
      %4002 = vmatpush1.msra.mxu0 %v4001
      %v4003 = vand.u32 %v3450, 4294901760
      %v4004 = vsub.f32 %v3450, %v4003
      %v4005 = vand.u32 %v4004, 4294901760
      %4006 = vmatprep.subr.mxu0 %v4005
      %v4007 = vand.u32 %v3449, 4294901760
      %v4008 = vsub.f32 %v3449, %v4007
      %v4009 = vand.u32 %v4008, 4294901760
      %4010 = vmatpush1.msra.mxu0 %v4009
      %v4011 = vand.u32 %v3446, 4294901760
      %v4012 = vsub.f32 %v3446, %v4011
      %v4013 = vand.u32 %v4012, 4294901760
      %4014 = vmatprep.subr.mxu0 %v4013
      %v4015 = vand.u32 %v3445, 4294901760
      %v4016 = vsub.f32 %v3445, %v4015
      %v4017 = vand.u32 %v4016, 4294901760
      %4018 = vmatpush1.msra.mxu0 %v4017
      %v4019 = vand.u32 %v3442, 4294901760
      %v4020 = vsub.f32 %v3442, %v4019
      %v4021 = vand.u32 %v4020, 4294901760
      %4022 = vmatprep.subr.mxu0 %v4021
      %v4023 = vand.u32 %v3441, 4294901760
      %v4024 = vsub.f32 %v3441, %v4023
      %v4025 = vand.u32 %v4024, 4294901760
      %4026 = vmatpush1.msra.mxu0 %v4025
      %4027 = vmatprep.subr.mxu0 0.0
      %4028 = vmatpush2.msra.mxu0 0.0
      %4029 = vmatprep.subr.mxu0 0.0
      %4030 = vmatpush2.msra.mxu0 0.0
      %4031 = vmatprep.subr.mxu0 0.0
      %4032 = vmatpush2.msra.mxu0 0.0
      %4033 = vmatprep.subr.mxu0 0.0
      %4034 = vmatpush2.msra.mxu0 0.0
      %4035 = vmatprep.subr.mxu0 0.0
      %4036 = vmatpush2.msra.mxu0 0.0
      %4037 = vmatprep.subr.mxu0 0.0
      %4038 = vmatpush2.msra.mxu0 0.0
      %4039 = vmatprep.subr.mxu0 0.0
      %4040 = vmatpush2.msra.mxu0 0.0
      %4041 = vmatprep.subr.mxu0 0.0
      %4042 = vmatpush2.msra.mxu0 0.0
      %4043 = vmatprep.subr.mxu0 0.0
      %4044 = vmatpush2.msra.mxu0 0.0
      %4045 = vmatprep.subr.mxu0 0.0
      %4046 = vmatpush2.msra.mxu0 0.0
      %4047 = vmatprep.subr.mxu0 0.0
      %4048 = vmatpush2.msra.mxu0 0.0
      %4049 = vmatprep.subr.mxu0 0.0
      %4050 = vmatpush2.msra.mxu0 0.0
      %4051 = vmatprep.subr.mxu0 0.0
      %4052 = vmatpush2.msra.mxu0 0.0
      %4053 = vmatprep.subr.mxu0 0.0
      %4054 = vmatpush2.msra.mxu0 0.0
      %4055 = vmatprep.subr.mxu0 0.0
      %4056 = vmatpush2.msra.mxu0 0.0
      %4057 = vmatprep.subr.mxu0 0.0
      %4058 = vmatpush2.msra.mxu0 0.0
      %4059 = vmatprep.mubr.f32.mxu0 0.0
      %v4060 = vand.u32 %v3488, 4294901760
      %4061 = vmatmul.mubr.f32.gmra.mxu0 %v4060
      %v4062 = vpop.f32.mrf.mxu0
      %v4063 = vadd.f32 %v3940, %v4062
      %v4064 = vpop.f32.mrf.mxu0
      %v4065 = vadd.f32 %v3942, %v4064
      %4066 = vmatprep.mubr.f32.mxu0 0.0
      %v4067 = vand.u32 %v3491, 4294901760
      %4068 = vmatmul.mubr.f32.gmra.mxu0 %v4067
      %v4069 = vpop.f32.mrf.mxu0
      %v4070 = vadd.f32 %v3949, %v4069
      %v4071 = vpop.f32.mrf.mxu0
      %v4072 = vadd.f32 %v3951, %v4071
      %4073 = vmatprep.mubr.f32.mxu0 0.0
      %v4074 = vand.u32 %v3494, 4294901760
      %4075 = vmatmul.mubr.f32.gmra.mxu0 %v4074
      %v4076 = vpop.f32.mrf.mxu0
      %v4077 = vadd.f32 %v3958, %v4076
      %v4078 = vpop.f32.mrf.mxu0
      %v4079 = vadd.f32 %v3960, %v4078
      %4080 = vmatprep.mubr.f32.mxu0 0.0
      %v4081 = vand.u32 %v3497, 4294901760
      %4082 = vmatmul.mubr.f32.gmra.mxu0 %v4081
      %v4083 = vpop.f32.mrf.mxu0
      %v4084 = vadd.f32 %v3967, %v4083
      %v4085 = vpop.f32.mrf.mxu0
      %v4086 = vadd.f32 %v3969, %v4085
      %4087 = vdwg.mxu0
      %4088 = vmatprep.subr.mxu0 0.0
      %4089 = vmatpush1.msra.mxu0 0.0
      %4090 = vmatprep.subr.mxu0 0.0
      %4091 = vmatpush1.msra.mxu0 0.0
      %4092 = vmatprep.subr.mxu0 0.0
      %4093 = vmatpush1.msra.mxu0 0.0
      %4094 = vmatprep.subr.mxu0 0.0
      %4095 = vmatpush1.msra.mxu0 0.0
      %4096 = vmatprep.subr.mxu0 0.0
      %4097 = vmatpush1.msra.mxu0 0.0
      %4098 = vmatprep.subr.mxu0 0.0
      %4099 = vmatpush1.msra.mxu0 0.0
      %4100 = vmatprep.subr.mxu0 0.0
      %4101 = vmatpush1.msra.mxu0 0.0
      %4102 = vmatprep.subr.mxu0 0.0
      %4103 = vmatpush1.msra.mxu0 0.0
      %4104 = vmatprep.subr.mxu0 0.0
      %4105 = vmatpush1.msra.mxu0 0.0
      %4106 = vmatprep.subr.mxu0 0.0
      %4107 = vmatpush1.msra.mxu0 0.0
      %4108 = vmatprep.subr.mxu0 0.0
      %4109 = vmatpush1.msra.mxu0 0.0
      %4110 = vmatprep.subr.mxu0 0.0
      %4111 = vmatpush1.msra.mxu0 0.0
      %v4112 = vand.u32 %v3454, 4294901760
      %4113 = vmatprep.subr.mxu0 %v4112
      %v4114 = vand.u32 %v3453, 4294901760
      %4115 = vmatpush1.msra.mxu0 %v4114
      %v4116 = vand.u32 %v3450, 4294901760
      %4117 = vmatprep.subr.mxu0 %v4116
      %v4118 = vand.u32 %v3449, 4294901760
      %4119 = vmatpush1.msra.mxu0 %v4118
      %v4120 = vand.u32 %v3446, 4294901760
      %4121 = vmatprep.subr.mxu0 %v4120
      %v4122 = vand.u32 %v3445, 4294901760
      %4123 = vmatpush1.msra.mxu0 %v4122
      %v4124 = vand.u32 %v3442, 4294901760
      %4125 = vmatprep.subr.mxu0 %v4124
      %v4126 = vand.u32 %v3441, 4294901760
      %4127 = vmatpush1.msra.mxu0 %v4126
      %4128 = vmatprep.subr.mxu0 0.0
      %4129 = vmatpush2.msra.mxu0 0.0
      %4130 = vmatprep.subr.mxu0 0.0
      %4131 = vmatpush2.msra.mxu0 0.0
      %4132 = vmatprep.subr.mxu0 0.0
      %4133 = vmatpush2.msra.mxu0 0.0
      %4134 = vmatprep.subr.mxu0 0.0
      %4135 = vmatpush2.msra.mxu0 0.0
      %4136 = vmatprep.subr.mxu0 0.0
      %4137 = vmatpush2.msra.mxu0 0.0
      %4138 = vmatprep.subr.mxu0 0.0
      %4139 = vmatpush2.msra.mxu0 0.0
      %4140 = vmatprep.subr.mxu0 0.0
      %4141 = vmatpush2.msra.mxu0 0.0
      %4142 = vmatprep.subr.mxu0 0.0
      %4143 = vmatpush2.msra.mxu0 0.0
      %4144 = vmatprep.subr.mxu0 0.0
      %4145 = vmatpush2.msra.mxu0 0.0
      %4146 = vmatprep.subr.mxu0 0.0
      %4147 = vmatpush2.msra.mxu0 0.0
      %4148 = vmatprep.subr.mxu0 0.0
      %4149 = vmatpush2.msra.mxu0 0.0
      %4150 = vmatprep.subr.mxu0 0.0
      %4151 = vmatpush2.msra.mxu0 0.0
      %4152 = vmatprep.subr.mxu0 0.0
      %4153 = vmatpush2.msra.mxu0 0.0
      %4154 = vmatprep.subr.mxu0 0.0
      %4155 = vmatpush2.msra.mxu0 0.0
      %4156 = vmatprep.subr.mxu0 0.0
      %4157 = vmatpush2.msra.mxu0 0.0
      %4158 = vmatprep.subr.mxu0 0.0
      %4159 = vmatpush2.msra.mxu0 0.0
      %4160 = vmatprep.mubr.f32.mxu0 0.0
      %v4161 = vand.u32 %v3488, 4294901760
      %4162 = vmatmul.mubr.f32.gmra.mxu0 %v4161
      %v4163 = vpop.f32.mrf.mxu0
      %v4164 = vadd.f32 %v4063, %v4163
      %v4165 = vpop.f32.mrf.mxu0
      %v4166 = vadd.f32 %v4065, %v4165
      %4167 = vmatprep.mubr.f32.mxu0 0.0
      %v4168 = vand.u32 %v3491, 4294901760
      %4169 = vmatmul.mubr.f32.gmra.mxu0 %v4168
      %v4170 = vpop.f32.mrf.mxu0
      %v4171 = vadd.f32 %v4070, %v4170
      %v4172 = vpop.f32.mrf.mxu0
      %v4173 = vadd.f32 %v4072, %v4172
      %4174 = vmatprep.mubr.f32.mxu0 0.0
      %v4175 = vand.u32 %v3494, 4294901760
      %4176 = vmatmul.mubr.f32.gmra.mxu0 %v4175
      %v4177 = vpop.f32.mrf.mxu0
      %v4178 = vadd.f32 %v4077, %v4177
      %v4179 = vpop.f32.mrf.mxu0
      %v4180 = vadd.f32 %v4079, %v4179
      %4181 = vmatprep.mubr.f32.mxu0 0.0
      %v4182 = vand.u32 %v3497, 4294901760
      %4183 = vmatmul.mubr.f32.gmra.mxu0 %v4182
      %v4184 = vpop.f32.mrf.mxu0
      %v4185 = vadd.f32 %v4084, %v4184
      %v4186 = vpop.f32.mrf.mxu0
      %v4187 = vadd.f32 %v4086, %v4186
      %4188 = vdwg.mxu0
      %4189 = vmatprep.subr.mxu0 0.0
      %4190 = vmatpush1.msra.mxu0 0.0
      %4191 = vmatprep.subr.mxu0 0.0
      %4192 = vmatpush1.msra.mxu0 0.0
      %4193 = vmatprep.subr.mxu0 0.0
      %4194 = vmatpush1.msra.mxu0 0.0
      %4195 = vmatprep.subr.mxu0 0.0
      %4196 = vmatpush1.msra.mxu0 0.0
      %4197 = vmatprep.subr.mxu0 0.0
      %4198 = vmatpush1.msra.mxu0 0.0
      %4199 = vmatprep.subr.mxu0 0.0
      %4200 = vmatpush1.msra.mxu0 0.0
      %4201 = vmatprep.subr.mxu0 0.0
      %4202 = vmatpush1.msra.mxu0 0.0
      %4203 = vmatprep.subr.mxu0 0.0
      %4204 = vmatpush1.msra.mxu0 0.0
      %4205 = vmatprep.subr.mxu0 0.0
      %4206 = vmatpush1.msra.mxu0 0.0
      %4207 = vmatprep.subr.mxu0 0.0
      %4208 = vmatpush1.msra.mxu0 0.0
      %4209 = vmatprep.subr.mxu0 0.0
      %4210 = vmatpush1.msra.mxu0 0.0
      %4211 = vmatprep.subr.mxu0 0.0
      %4212 = vmatpush1.msra.mxu0 0.0
      %v4213 = vand.u32 %v3456, 4294901760
      %4214 = vmatprep.subr.mxu0 %v4213
      %v4215 = vand.u32 %v3455, 4294901760
      %4216 = vmatpush1.msra.mxu0 %v4215
      %v4217 = vand.u32 %v3452, 4294901760
      %4218 = vmatprep.subr.mxu0 %v4217
      %v4219 = vand.u32 %v3451, 4294901760
      %4220 = vmatpush1.msra.mxu0 %v4219
      %v4221 = vand.u32 %v3448, 4294901760
      %4222 = vmatprep.subr.mxu0 %v4221
      %v4223 = vand.u32 %v3447, 4294901760
      %4224 = vmatpush1.msra.mxu0 %v4223
      %v4225 = vand.u32 %v3444, 4294901760
      %4226 = vmatprep.subr.mxu0 %v4225
      %v4227 = vand.u32 %v3443, 4294901760
      %4228 = vmatpush1.msra.mxu0 %v4227
      %4229 = vmatprep.subr.mxu0 0.0
      %4230 = vmatpush2.msra.mxu0 0.0
      %4231 = vmatprep.subr.mxu0 0.0
      %4232 = vmatpush2.msra.mxu0 0.0
      %4233 = vmatprep.subr.mxu0 0.0
      %4234 = vmatpush2.msra.mxu0 0.0
      %4235 = vmatprep.subr.mxu0 0.0
      %4236 = vmatpush2.msra.mxu0 0.0
      %4237 = vmatprep.subr.mxu0 0.0
      %4238 = vmatpush2.msra.mxu0 0.0
      %4239 = vmatprep.subr.mxu0 0.0
      %4240 = vmatpush2.msra.mxu0 0.0
      %4241 = vmatprep.subr.mxu0 0.0
      %4242 = vmatpush2.msra.mxu0 0.0
      %4243 = vmatprep.subr.mxu0 0.0
      %4244 = vmatpush2.msra.mxu0 0.0
      %4245 = vmatprep.subr.mxu0 0.0
      %4246 = vmatpush2.msra.mxu0 0.0
      %4247 = vmatprep.subr.mxu0 0.0
      %4248 = vmatpush2.msra.mxu0 0.0
      %4249 = vmatprep.subr.mxu0 0.0
      %4250 = vmatpush2.msra.mxu0 0.0
      %4251 = vmatprep.subr.mxu0 0.0
      %4252 = vmatpush2.msra.mxu0 0.0
      %4253 = vmatprep.subr.mxu0 0.0
      %4254 = vmatpush2.msra.mxu0 0.0
      %4255 = vmatprep.subr.mxu0 0.0
      %4256 = vmatpush2.msra.mxu0 0.0
      %4257 = vmatprep.subr.mxu0 0.0
      %4258 = vmatpush2.msra.mxu0 0.0
      %4259 = vmatprep.subr.mxu0 0.0
      %4260 = vmatpush2.msra.mxu0 0.0
      %4261 = vmatprep.mubr.f32.mxu0 0.0
      %v4262 = vand.u32 %v3488, 4294901760
      %v4263 = vsub.f32 %v3488, %v4262
      %v4264 = vand.u32 %v4263, 4294901760
      %v4265 = vsub.f32 %v4263, %v4264
      %v4266 = vand.u32 %v4265, 4294901760
      %4267 = vmatmul.mubr.f32.gmra.mxu0 %v4266
      %v4268 = vpop.f32.mrf.mxu0
      %v4269 = vadd.f32 %v3470, %v4268
      %v4270 = vpop.f32.mrf.mxu0
      %v4271 = vadd.f32 %v3470, %v4270
      %4272 = vmatprep.mubr.f32.mxu0 0.0
      %v4273 = vand.u32 %v3491, 4294901760
      %v4274 = vsub.f32 %v3491, %v4273
      %v4275 = vand.u32 %v4274, 4294901760
      %v4276 = vsub.f32 %v4274, %v4275
      %v4277 = vand.u32 %v4276, 4294901760
      %4278 = vmatmul.mubr.f32.gmra.mxu0 %v4277
      %v4279 = vpop.f32.mrf.mxu0
      %v4280 = vadd.f32 %v3475, %v4279
      %v4281 = vpop.f32.mrf.mxu0
      %v4282 = vadd.f32 %v3475, %v4281
      %4283 = vmatprep.mubr.f32.mxu0 0.0
      %v4284 = vand.u32 %v3494, 4294901760
      %v4285 = vsub.f32 %v3494, %v4284
      %v4286 = vand.u32 %v4285, 4294901760
      %v4287 = vsub.f32 %v4285, %v4286
      %v4288 = vand.u32 %v4287, 4294901760
      %4289 = vmatmul.mubr.f32.gmra.mxu0 %v4288
      %v4290 = vpop.f32.mrf.mxu0
      %v4291 = vadd.f32 %v3480, %v4290
      %v4292 = vpop.f32.mrf.mxu0
      %v4293 = vadd.f32 %v3480, %v4292
      %4294 = vmatprep.mubr.f32.mxu0 0.0
      %v4295 = vand.u32 %v3497, 4294901760
      %v4296 = vsub.f32 %v3497, %v4295
      %v4297 = vand.u32 %v4296, 4294901760
      %v4298 = vsub.f32 %v4296, %v4297
      %v4299 = vand.u32 %v4298, 4294901760
      %4300 = vmatmul.mubr.f32.gmra.mxu0 %v4299
      %v4301 = vpop.f32.mrf.mxu0
      %v4302 = vadd.f32 %v3485, %v4301
      %v4303 = vpop.f32.mrf.mxu0
      %v4304 = vadd.f32 %v3485, %v4303
      %4305 = vdwg.mxu0
      %4306 = vmatprep.subr.mxu0 0.0
      %4307 = vmatpush1.msra.mxu0 0.0
      %4308 = vmatprep.subr.mxu0 0.0
      %4309 = vmatpush1.msra.mxu0 0.0
      %4310 = vmatprep.subr.mxu0 0.0
      %4311 = vmatpush1.msra.mxu0 0.0
      %4312 = vmatprep.subr.mxu0 0.0
      %4313 = vmatpush1.msra.mxu0 0.0
      %4314 = vmatprep.subr.mxu0 0.0
      %4315 = vmatpush1.msra.mxu0 0.0
      %4316 = vmatprep.subr.mxu0 0.0
      %4317 = vmatpush1.msra.mxu0 0.0
      %4318 = vmatprep.subr.mxu0 0.0
      %4319 = vmatpush1.msra.mxu0 0.0
      %4320 = vmatprep.subr.mxu0 0.0
      %4321 = vmatpush1.msra.mxu0 0.0
      %4322 = vmatprep.subr.mxu0 0.0
      %4323 = vmatpush1.msra.mxu0 0.0
      %4324 = vmatprep.subr.mxu0 0.0
      %4325 = vmatpush1.msra.mxu0 0.0
      %4326 = vmatprep.subr.mxu0 0.0
      %4327 = vmatpush1.msra.mxu0 0.0
      %4328 = vmatprep.subr.mxu0 0.0
      %4329 = vmatpush1.msra.mxu0 0.0
      %v4330 = vand.u32 %v3456, 4294901760
      %v4331 = vsub.f32 %v3456, %v4330
      %v4332 = vand.u32 %v4331, 4294901760
      %v4333 = vsub.f32 %v4331, %v4332
      %v4334 = vand.u32 %v4333, 4294901760
      %4335 = vmatprep.subr.mxu0 %v4334
      %v4336 = vand.u32 %v3455, 4294901760
      %v4337 = vsub.f32 %v3455, %v4336
      %v4338 = vand.u32 %v4337, 4294901760
      %v4339 = vsub.f32 %v4337, %v4338
      %v4340 = vand.u32 %v4339, 4294901760
      %4341 = vmatpush1.msra.mxu0 %v4340
      %v4342 = vand.u32 %v3452, 4294901760
      %v4343 = vsub.f32 %v3452, %v4342
      %v4344 = vand.u32 %v4343, 4294901760
      %v4345 = vsub.f32 %v4343, %v4344
      %v4346 = vand.u32 %v4345, 4294901760
      %4347 = vmatprep.subr.mxu0 %v4346
      %v4348 = vand.u32 %v3451, 4294901760
      %v4349 = vsub.f32 %v3451, %v4348
      %v4350 = vand.u32 %v4349, 4294901760
      %v4351 = vsub.f32 %v4349, %v4350
      %v4352 = vand.u32 %v4351, 4294901760
      %4353 = vmatpush1.msra.mxu0 %v4352
      %v4354 = vand.u32 %v3448, 4294901760
      %v4355 = vsub.f32 %v3448, %v4354
      %v4356 = vand.u32 %v4355, 4294901760
      %v4357 = vsub.f32 %v4355, %v4356
      %v4358 = vand.u32 %v4357, 4294901760
      %4359 = vmatprep.subr.mxu0 %v4358
      %v4360 = vand.u32 %v3447, 4294901760
      %v4361 = vsub.f32 %v3447, %v4360
      %v4362 = vand.u32 %v4361, 4294901760
      %v4363 = vsub.f32 %v4361, %v4362
      %v4364 = vand.u32 %v4363, 4294901760
      %4365 = vmatpush1.msra.mxu0 %v4364
      %v4366 = vand.u32 %v3444, 4294901760
      %v4367 = vsub.f32 %v3444, %v4366
      %v4368 = vand.u32 %v4367, 4294901760
      %v4369 = vsub.f32 %v4367, %v4368
      %v4370 = vand.u32 %v4369, 4294901760
      %4371 = vmatprep.subr.mxu0 %v4370
      %v4372 = vand.u32 %v3443, 4294901760
      %v4373 = vsub.f32 %v3443, %v4372
      %v4374 = vand.u32 %v4373, 4294901760
      %v4375 = vsub.f32 %v4373, %v4374
      %v4376 = vand.u32 %v4375, 4294901760
      %4377 = vmatpush1.msra.mxu0 %v4376
      %4378 = vmatprep.subr.mxu0 0.0
      %4379 = vmatpush2.msra.mxu0 0.0
      %4380 = vmatprep.subr.mxu0 0.0
      %4381 = vmatpush2.msra.mxu0 0.0
      %4382 = vmatprep.subr.mxu0 0.0
      %4383 = vmatpush2.msra.mxu0 0.0
      %4384 = vmatprep.subr.mxu0 0.0
      %4385 = vmatpush2.msra.mxu0 0.0
      %4386 = vmatprep.subr.mxu0 0.0
      %4387 = vmatpush2.msra.mxu0 0.0
      %4388 = vmatprep.subr.mxu0 0.0
      %4389 = vmatpush2.msra.mxu0 0.0
      %4390 = vmatprep.subr.mxu0 0.0
      %4391 = vmatpush2.msra.mxu0 0.0
      %4392 = vmatprep.subr.mxu0 0.0
      %4393 = vmatpush2.msra.mxu0 0.0
      %4394 = vmatprep.subr.mxu0 0.0
      %4395 = vmatpush2.msra.mxu0 0.0
      %4396 = vmatprep.subr.mxu0 0.0
      %4397 = vmatpush2.msra.mxu0 0.0
      %4398 = vmatprep.subr.mxu0 0.0
      %4399 = vmatpush2.msra.mxu0 0.0
      %4400 = vmatprep.subr.mxu0 0.0
      %4401 = vmatpush2.msra.mxu0 0.0
      %4402 = vmatprep.subr.mxu0 0.0
      %4403 = vmatpush2.msra.mxu0 0.0
      %4404 = vmatprep.subr.mxu0 0.0
      %4405 = vmatpush2.msra.mxu0 0.0
      %4406 = vmatprep.subr.mxu0 0.0
      %4407 = vmatpush2.msra.mxu0 0.0
      %4408 = vmatprep.subr.mxu0 0.0
      %4409 = vmatpush2.msra.mxu0 0.0
      %4410 = vmatprep.mubr.f32.mxu0 0.0
      %v4411 = vand.u32 %v3488, 4294901760
      %4412 = vmatmul.mubr.f32.gmra.mxu0 %v4411
      %v4413 = vpop.f32.mrf.mxu0
      %v4414 = vadd.f32 %v4269, %v4413
      %v4415 = vpop.f32.mrf.mxu0
      %v4416 = vadd.f32 %v4271, %v4415
      %4417 = vmatprep.mubr.f32.mxu0 0.0
      %v4418 = vand.u32 %v3491, 4294901760
      %4419 = vmatmul.mubr.f32.gmra.mxu0 %v4418
      %v4420 = vpop.f32.mrf.mxu0
      %v4421 = vadd.f32 %v4280, %v4420
      %v4422 = vpop.f32.mrf.mxu0
      %v4423 = vadd.f32 %v4282, %v4422
      %4424 = vmatprep.mubr.f32.mxu0 0.0
      %v4425 = vand.u32 %v3494, 4294901760
      %4426 = vmatmul.mubr.f32.gmra.mxu0 %v4425
      %v4427 = vpop.f32.mrf.mxu0
      %v4428 = vadd.f32 %v4291, %v4427
      %v4429 = vpop.f32.mrf.mxu0
      %v4430 = vadd.f32 %v4293, %v4429
      %4431 = vmatprep.mubr.f32.mxu0 0.0
      %v4432 = vand.u32 %v3497, 4294901760
      %4433 = vmatmul.mubr.f32.gmra.mxu0 %v4432
      %v4434 = vpop.f32.mrf.mxu0
      %v4435 = vadd.f32 %v4302, %v4434
      %v4436 = vpop.f32.mrf.mxu0
      %v4437 = vadd.f32 %v4304, %v4436
      %4438 = vdwg.mxu0
      %4439 = vmatprep.subr.mxu0 0.0
      %4440 = vmatpush1.msra.mxu0 0.0
      %4441 = vmatprep.subr.mxu0 0.0
      %4442 = vmatpush1.msra.mxu0 0.0
      %4443 = vmatprep.subr.mxu0 0.0
      %4444 = vmatpush1.msra.mxu0 0.0
      %4445 = vmatprep.subr.mxu0 0.0
      %4446 = vmatpush1.msra.mxu0 0.0
      %4447 = vmatprep.subr.mxu0 0.0
      %4448 = vmatpush1.msra.mxu0 0.0
      %4449 = vmatprep.subr.mxu0 0.0
      %4450 = vmatpush1.msra.mxu0 0.0
      %4451 = vmatprep.subr.mxu0 0.0
      %4452 = vmatpush1.msra.mxu0 0.0
      %4453 = vmatprep.subr.mxu0 0.0
      %4454 = vmatpush1.msra.mxu0 0.0
      %4455 = vmatprep.subr.mxu0 0.0
      %4456 = vmatpush1.msra.mxu0 0.0
      %4457 = vmatprep.subr.mxu0 0.0
      %4458 = vmatpush1.msra.mxu0 0.0
      %4459 = vmatprep.subr.mxu0 0.0
      %4460 = vmatpush1.msra.mxu0 0.0
      %4461 = vmatprep.subr.mxu0 0.0
      %4462 = vmatpush1.msra.mxu0 0.0
      %v4463 = vand.u32 %v3456, 4294901760
      %v4464 = vsub.f32 %v3456, %v4463
      %4465 = vmatprep.subr.mxu0 %v4464
      %v4466 = vand.u32 %v3455, 4294901760
      %v4467 = vsub.f32 %v3455, %v4466
      %4468 = vmatpush1.msra.mxu0 %v4467
      %v4469 = vand.u32 %v3452, 4294901760
      %v4470 = vsub.f32 %v3452, %v4469
      %4471 = vmatprep.subr.mxu0 %v4470
      %v4472 = vand.u32 %v3451, 4294901760
      %v4473 = vsub.f32 %v3451, %v4472
      %4474 = vmatpush1.msra.mxu0 %v4473
      %v4475 = vand.u32 %v3448, 4294901760
      %v4476 = vsub.f32 %v3448, %v4475
      %4477 = vmatprep.subr.mxu0 %v4476
      %v4478 = vand.u32 %v3447, 4294901760
      %v4479 = vsub.f32 %v3447, %v4478
      %4480 = vmatpush1.msra.mxu0 %v4479
      %v4481 = vand.u32 %v3444, 4294901760
      %v4482 = vsub.f32 %v3444, %v4481
      %4483 = vmatprep.subr.mxu0 %v4482
      %v4484 = vand.u32 %v3443, 4294901760
      %v4485 = vsub.f32 %v3443, %v4484
      %4486 = vmatpush1.msra.mxu0 %v4485
      %4487 = vmatprep.subr.mxu0 0.0
      %4488 = vmatpush2.msra.mxu0 0.0
      %4489 = vmatprep.subr.mxu0 0.0
      %4490 = vmatpush2.msra.mxu0 0.0
      %4491 = vmatprep.subr.mxu0 0.0
      %4492 = vmatpush2.msra.mxu0 0.0
      %4493 = vmatprep.subr.mxu0 0.0
      %4494 = vmatpush2.msra.mxu0 0.0
      %4495 = vmatprep.subr.mxu0 0.0
      %4496 = vmatpush2.msra.mxu0 0.0
      %4497 = vmatprep.subr.mxu0 0.0
      %4498 = vmatpush2.msra.mxu0 0.0
      %4499 = vmatprep.subr.mxu0 0.0
      %4500 = vmatpush2.msra.mxu0 0.0
      %4501 = vmatprep.subr.mxu0 0.0
      %4502 = vmatpush2.msra.mxu0 0.0
      %4503 = vmatprep.subr.mxu0 0.0
      %4504 = vmatpush2.msra.mxu0 0.0
      %4505 = vmatprep.subr.mxu0 0.0
      %4506 = vmatpush2.msra.mxu0 0.0
      %4507 = vmatprep.subr.mxu0 0.0
      %4508 = vmatpush2.msra.mxu0 0.0
      %4509 = vmatprep.subr.mxu0 0.0
      %4510 = vmatpush2.msra.mxu0 0.0
      %4511 = vmatprep.subr.mxu0 0.0
      %4512 = vmatpush2.msra.mxu0 0.0
      %4513 = vmatprep.subr.mxu0 0.0
      %4514 = vmatpush2.msra.mxu0 0.0
      %4515 = vmatprep.subr.mxu0 0.0
      %4516 = vmatpush2.msra.mxu0 0.0
      %4517 = vmatprep.subr.mxu0 0.0
      %4518 = vmatpush2.msra.mxu0 0.0
      %4519 = vmatprep.mubr.f32.mxu0 0.0
      %v4520 = vand.u32 %v3488, 4294901760
      %v4521 = vsub.f32 %v3488, %v4520
      %4522 = vmatmul.mubr.f32.gmra.mxu0 %v4521
      %v4523 = vpop.f32.mrf.mxu0
      %v4524 = vadd.f32 %v4414, %v4523
      %v4525 = vpop.f32.mrf.mxu0
      %v4526 = vadd.f32 %v4416, %v4525
      %4527 = vmatprep.mubr.f32.mxu0 0.0
      %v4528 = vand.u32 %v3491, 4294901760
      %v4529 = vsub.f32 %v3491, %v4528
      %4530 = vmatmul.mubr.f32.gmra.mxu0 %v4529
      %v4531 = vpop.f32.mrf.mxu0
      %v4532 = vadd.f32 %v4421, %v4531
      %v4533 = vpop.f32.mrf.mxu0
      %v4534 = vadd.f32 %v4423, %v4533
      %4535 = vmatprep.mubr.f32.mxu0 0.0
      %v4536 = vand.u32 %v3494, 4294901760
      %v4537 = vsub.f32 %v3494, %v4536
      %4538 = vmatmul.mubr.f32.gmra.mxu0 %v4537
      %v4539 = vpop.f32.mrf.mxu0
      %v4540 = vadd.f32 %v4428, %v4539
      %v4541 = vpop.f32.mrf.mxu0
      %v4542 = vadd.f32 %v4430, %v4541
      %4543 = vmatprep.mubr.f32.mxu0 0.0
      %v4544 = vand.u32 %v3497, 4294901760
      %v4545 = vsub.f32 %v3497, %v4544
      %4546 = vmatmul.mubr.f32.gmra.mxu0 %v4545
      %v4547 = vpop.f32.mrf.mxu0
      %v4548 = vadd.f32 %v4435, %v4547
      %v4549 = vpop.f32.mrf.mxu0
      %v4550 = vadd.f32 %v4437, %v4549
      %4551 = vdwg.mxu0
      %4552 = vmatprep.subr.mxu0 0.0
      %4553 = vmatpush1.msra.mxu0 0.0
      %4554 = vmatprep.subr.mxu0 0.0
      %4555 = vmatpush1.msra.mxu0 0.0
      %4556 = vmatprep.subr.mxu0 0.0
      %4557 = vmatpush1.msra.mxu0 0.0
      %4558 = vmatprep.subr.mxu0 0.0
      %4559 = vmatpush1.msra.mxu0 0.0
      %4560 = vmatprep.subr.mxu0 0.0
      %4561 = vmatpush1.msra.mxu0 0.0
      %4562 = vmatprep.subr.mxu0 0.0
      %4563 = vmatpush1.msra.mxu0 0.0
      %4564 = vmatprep.subr.mxu0 0.0
      %4565 = vmatpush1.msra.mxu0 0.0
      %4566 = vmatprep.subr.mxu0 0.0
      %4567 = vmatpush1.msra.mxu0 0.0
      %4568 = vmatprep.subr.mxu0 0.0
      %4569 = vmatpush1.msra.mxu0 0.0
      %4570 = vmatprep.subr.mxu0 0.0
      %4571 = vmatpush1.msra.mxu0 0.0
      %4572 = vmatprep.subr.mxu0 0.0
      %4573 = vmatpush1.msra.mxu0 0.0
      %4574 = vmatprep.subr.mxu0 0.0
      %4575 = vmatpush1.msra.mxu0 0.0
      %v4576 = vand.u32 %v3456, 4294901760
      %4577 = vmatprep.subr.mxu0 %v4576
      %v4578 = vand.u32 %v3455, 4294901760
      %4579 = vmatpush1.msra.mxu0 %v4578
      %v4580 = vand.u32 %v3452, 4294901760
      %4581 = vmatprep.subr.mxu0 %v4580
      %v4582 = vand.u32 %v3451, 4294901760
      %4583 = vmatpush1.msra.mxu0 %v4582
      %v4584 = vand.u32 %v3448, 4294901760
      %4585 = vmatprep.subr.mxu0 %v4584
      %v4586 = vand.u32 %v3447, 4294901760
      %4587 = vmatpush1.msra.mxu0 %v4586
      %v4588 = vand.u32 %v3444, 4294901760
      %4589 = vmatprep.subr.mxu0 %v4588
      %v4590 = vand.u32 %v3443, 4294901760
      %4591 = vmatpush1.msra.mxu0 %v4590
      %4592 = vmatprep.subr.mxu0 0.0
      %4593 = vmatpush2.msra.mxu0 0.0
      %4594 = vmatprep.subr.mxu0 0.0
      %4595 = vmatpush2.msra.mxu0 0.0
      %4596 = vmatprep.subr.mxu0 0.0
      %4597 = vmatpush2.msra.mxu0 0.0
      %4598 = vmatprep.subr.mxu0 0.0
      %4599 = vmatpush2.msra.mxu0 0.0
      %4600 = vmatprep.subr.mxu0 0.0
      %4601 = vmatpush2.msra.mxu0 0.0
      %4602 = vmatprep.subr.mxu0 0.0
      %4603 = vmatpush2.msra.mxu0 0.0
      %4604 = vmatprep.subr.mxu0 0.0
      %4605 = vmatpush2.msra.mxu0 0.0
      %4606 = vmatprep.subr.mxu0 0.0
      %4607 = vmatpush2.msra.mxu0 0.0
      %4608 = vmatprep.subr.mxu0 0.0
      %4609 = vmatpush2.msra.mxu0 0.0
      %4610 = vmatprep.subr.mxu0 0.0
      %4611 = vmatpush2.msra.mxu0 0.0
      %4612 = vmatprep.subr.mxu0 0.0
      %4613 = vmatpush2.msra.mxu0 0.0
      %4614 = vmatprep.subr.mxu0 0.0
      %4615 = vmatpush2.msra.mxu0 0.0
      %4616 = vmatprep.subr.mxu0 0.0
      %4617 = vmatpush2.msra.mxu0 0.0
      %4618 = vmatprep.subr.mxu0 0.0
      %4619 = vmatpush2.msra.mxu0 0.0
      %4620 = vmatprep.subr.mxu0 0.0
      %4621 = vmatpush2.msra.mxu0 0.0
      %4622 = vmatprep.subr.mxu0 0.0
      %4623 = vmatpush2.msra.mxu0 0.0
      %4624 = vmatprep.mubr.f32.mxu0 0.0
      %v4625 = vand.u32 %v3488, 4294901760
      %v4626 = vsub.f32 %v3488, %v4625
      %v4627 = vand.u32 %v4626, 4294901760
      %4628 = vmatmul.mubr.f32.gmra.mxu0 %v4627
      %v4629 = vpop.f32.mrf.mxu0
      %v4630 = vadd.f32 %v4524, %v4629
      %v4631 = vpop.f32.mrf.mxu0
      %v4632 = vadd.f32 %v4526, %v4631
      %4633 = vmatprep.mubr.f32.mxu0 0.0
      %v4634 = vand.u32 %v3491, 4294901760
      %v4635 = vsub.f32 %v3491, %v4634
      %v4636 = vand.u32 %v4635, 4294901760
      %4637 = vmatmul.mubr.f32.gmra.mxu0 %v4636
      %v4638 = vpop.f32.mrf.mxu0
      %v4639 = vadd.f32 %v4532, %v4638
      %v4640 = vpop.f32.mrf.mxu0
      %v4641 = vadd.f32 %v4534, %v4640
      %4642 = vmatprep.mubr.f32.mxu0 0.0
      %v4643 = vand.u32 %v3494, 4294901760
      %v4644 = vsub.f32 %v3494, %v4643
      %v4645 = vand.u32 %v4644, 4294901760
      %4646 = vmatmul.mubr.f32.gmra.mxu0 %v4645
      %v4647 = vpop.f32.mrf.mxu0
      %v4648 = vadd.f32 %v4540, %v4647
      %v4649 = vpop.f32.mrf.mxu0
      %v4650 = vadd.f32 %v4542, %v4649
      %4651 = vmatprep.mubr.f32.mxu0 0.0
      %v4652 = vand.u32 %v3497, 4294901760
      %v4653 = vsub.f32 %v3497, %v4652
      %v4654 = vand.u32 %v4653, 4294901760
      %4655 = vmatmul.mubr.f32.gmra.mxu0 %v4654
      %v4656 = vpop.f32.mrf.mxu0
      %v4657 = vadd.f32 %v4548, %v4656
      %v4658 = vpop.f32.mrf.mxu0
      %v4659 = vadd.f32 %v4550, %v4658
      %4660 = vdwg.mxu0
      %4661 = vmatprep.subr.mxu0 0.0
      %4662 = vmatpush1.msra.mxu0 0.0
      %4663 = vmatprep.subr.mxu0 0.0
      %4664 = vmatpush1.msra.mxu0 0.0
      %4665 = vmatprep.subr.mxu0 0.0
      %4666 = vmatpush1.msra.mxu0 0.0
      %4667 = vmatprep.subr.mxu0 0.0
      %4668 = vmatpush1.msra.mxu0 0.0
      %4669 = vmatprep.subr.mxu0 0.0
      %4670 = vmatpush1.msra.mxu0 0.0
      %4671 = vmatprep.subr.mxu0 0.0
      %4672 = vmatpush1.msra.mxu0 0.0
      %4673 = vmatprep.subr.mxu0 0.0
      %4674 = vmatpush1.msra.mxu0 0.0
      %4675 = vmatprep.subr.mxu0 0.0
      %4676 = vmatpush1.msra.mxu0 0.0
      %4677 = vmatprep.subr.mxu0 0.0
      %4678 = vmatpush1.msra.mxu0 0.0
      %4679 = vmatprep.subr.mxu0 0.0
      %4680 = vmatpush1.msra.mxu0 0.0
      %4681 = vmatprep.subr.mxu0 0.0
      %4682 = vmatpush1.msra.mxu0 0.0
      %4683 = vmatprep.subr.mxu0 0.0
      %4684 = vmatpush1.msra.mxu0 0.0
      %v4685 = vand.u32 %v3456, 4294901760
      %v4686 = vsub.f32 %v3456, %v4685
      %v4687 = vand.u32 %v4686, 4294901760
      %4688 = vmatprep.subr.mxu0 %v4687
      %v4689 = vand.u32 %v3455, 4294901760
      %v4690 = vsub.f32 %v3455, %v4689
      %v4691 = vand.u32 %v4690, 4294901760
      %4692 = vmatpush1.msra.mxu0 %v4691
      %v4693 = vand.u32 %v3452, 4294901760
      %v4694 = vsub.f32 %v3452, %v4693
      %v4695 = vand.u32 %v4694, 4294901760
      %4696 = vmatprep.subr.mxu0 %v4695
      %v4697 = vand.u32 %v3451, 4294901760
      %v4698 = vsub.f32 %v3451, %v4697
      %v4699 = vand.u32 %v4698, 4294901760
      %4700 = vmatpush1.msra.mxu0 %v4699
      %v4701 = vand.u32 %v3448, 4294901760
      %v4702 = vsub.f32 %v3448, %v4701
      %v4703 = vand.u32 %v4702, 4294901760
      %4704 = vmatprep.subr.mxu0 %v4703
      %v4705 = vand.u32 %v3447, 4294901760
      %v4706 = vsub.f32 %v3447, %v4705
      %v4707 = vand.u32 %v4706, 4294901760
      %4708 = vmatpush1.msra.mxu0 %v4707
      %v4709 = vand.u32 %v3444, 4294901760
      %v4710 = vsub.f32 %v3444, %v4709
      %v4711 = vand.u32 %v4710, 4294901760
      %4712 = vmatprep.subr.mxu0 %v4711
      %v4713 = vand.u32 %v3443, 4294901760
      %v4714 = vsub.f32 %v3443, %v4713
      %v4715 = vand.u32 %v4714, 4294901760
      %4716 = vmatpush1.msra.mxu0 %v4715
      %4717 = vmatprep.subr.mxu0 0.0
      %4718 = vmatpush2.msra.mxu0 0.0
      %4719 = vmatprep.subr.mxu0 0.0
      %4720 = vmatpush2.msra.mxu0 0.0
      %4721 = vmatprep.subr.mxu0 0.0
      %4722 = vmatpush2.msra.mxu0 0.0
      %4723 = vmatprep.subr.mxu0 0.0
      %4724 = vmatpush2.msra.mxu0 0.0
      %4725 = vmatprep.subr.mxu0 0.0
      %4726 = vmatpush2.msra.mxu0 0.0
      %4727 = vmatprep.subr.mxu0 0.0
      %4728 = vmatpush2.msra.mxu0 0.0
      %4729 = vmatprep.subr.mxu0 0.0
      %4730 = vmatpush2.msra.mxu0 0.0
      %4731 = vmatprep.subr.mxu0 0.0
      %4732 = vmatpush2.msra.mxu0 0.0
      %4733 = vmatprep.subr.mxu0 0.0
      %4734 = vmatpush2.msra.mxu0 0.0
      %4735 = vmatprep.subr.mxu0 0.0
      %4736 = vmatpush2.msra.mxu0 0.0
      %4737 = vmatprep.subr.mxu0 0.0
      %4738 = vmatpush2.msra.mxu0 0.0
      %4739 = vmatprep.subr.mxu0 0.0
      %4740 = vmatpush2.msra.mxu0 0.0
      %4741 = vmatprep.subr.mxu0 0.0
      %4742 = vmatpush2.msra.mxu0 0.0
      %4743 = vmatprep.subr.mxu0 0.0
      %4744 = vmatpush2.msra.mxu0 0.0
      %4745 = vmatprep.subr.mxu0 0.0
      %4746 = vmatpush2.msra.mxu0 0.0
      %4747 = vmatprep.subr.mxu0 0.0
      %4748 = vmatpush2.msra.mxu0 0.0
      %4749 = vmatprep.mubr.f32.mxu0 0.0
      %v4750 = vand.u32 %v3488, 4294901760
      %4751 = vmatmul.mubr.f32.gmra.mxu0 %v4750
      %v4752 = vpop.f32.mrf.mxu0
      %v4753 = vadd.f32 %v4630, %v4752
      %v4754 = vpop.f32.mrf.mxu0
      %v4755 = vadd.f32 %v4632, %v4754
      %4756 = vmatprep.mubr.f32.mxu0 0.0
      %v4757 = vand.u32 %v3491, 4294901760
      %4758 = vmatmul.mubr.f32.gmra.mxu0 %v4757
      %v4759 = vpop.f32.mrf.mxu0
      %v4760 = vadd.f32 %v4639, %v4759
      %v4761 = vpop.f32.mrf.mxu0
      %v4762 = vadd.f32 %v4641, %v4761
      %4763 = vmatprep.mubr.f32.mxu0 0.0
      %v4764 = vand.u32 %v3494, 4294901760
      %4765 = vmatmul.mubr.f32.gmra.mxu0 %v4764
      %v4766 = vpop.f32.mrf.mxu0
      %v4767 = vadd.f32 %v4648, %v4766
      %v4768 = vpop.f32.mrf.mxu0
      %v4769 = vadd.f32 %v4650, %v4768
      %4770 = vmatprep.mubr.f32.mxu0 0.0
      %v4771 = vand.u32 %v3497, 4294901760
      %4772 = vmatmul.mubr.f32.gmra.mxu0 %v4771
      %v4773 = vpop.f32.mrf.mxu0
      %v4774 = vadd.f32 %v4657, %v4773
      %v4775 = vpop.f32.mrf.mxu0
      %v4776 = vadd.f32 %v4659, %v4775
      %4777 = vdwg.mxu0
      %4778 = vmatprep.subr.mxu0 0.0
      %4779 = vmatpush1.msra.mxu0 0.0
      %4780 = vmatprep.subr.mxu0 0.0
      %4781 = vmatpush1.msra.mxu0 0.0
      %4782 = vmatprep.subr.mxu0 0.0
      %4783 = vmatpush1.msra.mxu0 0.0
      %4784 = vmatprep.subr.mxu0 0.0
      %4785 = vmatpush1.msra.mxu0 0.0
      %4786 = vmatprep.subr.mxu0 0.0
      %4787 = vmatpush1.msra.mxu0 0.0
      %4788 = vmatprep.subr.mxu0 0.0
      %4789 = vmatpush1.msra.mxu0 0.0
      %4790 = vmatprep.subr.mxu0 0.0
      %4791 = vmatpush1.msra.mxu0 0.0
      %4792 = vmatprep.subr.mxu0 0.0
      %4793 = vmatpush1.msra.mxu0 0.0
      %4794 = vmatprep.subr.mxu0 0.0
      %4795 = vmatpush1.msra.mxu0 0.0
      %4796 = vmatprep.subr.mxu0 0.0
      %4797 = vmatpush1.msra.mxu0 0.0
      %4798 = vmatprep.subr.mxu0 0.0
      %4799 = vmatpush1.msra.mxu0 0.0
      %4800 = vmatprep.subr.mxu0 0.0
      %4801 = vmatpush1.msra.mxu0 0.0
      %v4802 = vand.u32 %v3456, 4294901760
      %4803 = vmatprep.subr.mxu0 %v4802
      %v4804 = vand.u32 %v3455, 4294901760
      %4805 = vmatpush1.msra.mxu0 %v4804
      %v4806 = vand.u32 %v3452, 4294901760
      %4807 = vmatprep.subr.mxu0 %v4806
      %v4808 = vand.u32 %v3451, 4294901760
      %4809 = vmatpush1.msra.mxu0 %v4808
      %v4810 = vand.u32 %v3448, 4294901760
      %4811 = vmatprep.subr.mxu0 %v4810
      %v4812 = vand.u32 %v3447, 4294901760
      %4813 = vmatpush1.msra.mxu0 %v4812
      %v4814 = vand.u32 %v3444, 4294901760
      %4815 = vmatprep.subr.mxu0 %v4814
      %v4816 = vand.u32 %v3443, 4294901760
      %4817 = vmatpush1.msra.mxu0 %v4816
      %4818 = vmatprep.subr.mxu0 0.0
      %4819 = vmatpush2.msra.mxu0 0.0
      %4820 = vmatprep.subr.mxu0 0.0
      %4821 = vmatpush2.msra.mxu0 0.0
      %4822 = vmatprep.subr.mxu0 0.0
      %4823 = vmatpush2.msra.mxu0 0.0
      %4824 = vmatprep.subr.mxu0 0.0
      %4825 = vmatpush2.msra.mxu0 0.0
      %4826 = vmatprep.subr.mxu0 0.0
      %4827 = vmatpush2.msra.mxu0 0.0
      %4828 = vmatprep.subr.mxu0 0.0
      %4829 = vmatpush2.msra.mxu0 0.0
      %4830 = vmatprep.subr.mxu0 0.0
      %4831 = vmatpush2.msra.mxu0 0.0
      %4832 = vmatprep.subr.mxu0 0.0
      %4833 = vmatpush2.msra.mxu0 0.0
      %4834 = vmatprep.subr.mxu0 0.0
      %4835 = vmatpush2.msra.mxu0 0.0
      %4836 = vmatprep.subr.mxu0 0.0
      %4837 = vmatpush2.msra.mxu0 0.0
      %4838 = vmatprep.subr.mxu0 0.0
      %4839 = vmatpush2.msra.mxu0 0.0
      %4840 = vmatprep.subr.mxu0 0.0
      %4841 = vmatpush2.msra.mxu0 0.0
      %4842 = vmatprep.subr.mxu0 0.0
      %4843 = vmatpush2.msra.mxu0 0.0
      %4844 = vmatprep.subr.mxu0 0.0
      %4845 = vmatpush2.msra.mxu0 0.0
      %4846 = vmatprep.subr.mxu0 0.0
      %4847 = vmatpush2.msra.mxu0 0.0
      %4848 = vmatprep.subr.mxu0 0.0
      %4849 = vmatpush2.msra.mxu0 0.0
      %4850 = vmatprep.mubr.f32.mxu0 0.0
      %v4851 = vand.u32 %v3488, 4294901760
      %4852 = vmatmul.mubr.f32.gmra.mxu0 %v4851
      %v4853 = vpop.f32.mrf.mxu0
      %v4854 = vadd.f32 %v4753, %v4853
      %v4855 = vpop.f32.mrf.mxu0
      %v4856 = vadd.f32 %v4755, %v4855
      %4857 = vmatprep.mubr.f32.mxu0 0.0
      %v4858 = vand.u32 %v3491, 4294901760
      %4859 = vmatmul.mubr.f32.gmra.mxu0 %v4858
      %v4860 = vpop.f32.mrf.mxu0
      %v4861 = vadd.f32 %v4760, %v4860
      %v4862 = vpop.f32.mrf.mxu0
      %v4863 = vadd.f32 %v4762, %v4862
      %4864 = vmatprep.mubr.f32.mxu0 0.0
      %v4865 = vand.u32 %v3494, 4294901760
      %4866 = vmatmul.mubr.f32.gmra.mxu0 %v4865
      %v4867 = vpop.f32.mrf.mxu0
      %v4868 = vadd.f32 %v4767, %v4867
      %v4869 = vpop.f32.mrf.mxu0
      %v4870 = vadd.f32 %v4769, %v4869
      %4871 = vmatprep.mubr.f32.mxu0 0.0
      %v4872 = vand.u32 %v3497, 4294901760
      %4873 = vmatmul.mubr.f32.gmra.mxu0 %v4872
      %v4874 = vpop.f32.mrf.mxu0
      %v4875 = vadd.f32 %v4774, %v4874
      %v4876 = vpop.f32.mrf.mxu0
      %v4877 = vadd.f32 %v4776, %v4876
      %4878 = vdwg.mxu0
      %v4879 = vmax.f32 %v4164, 0.0
      %v4880 = vmax.f32 %v4166, 0.0
      %v4881 = vmax.f32 %v4854, 0.0
      %v4882 = vmax.f32 %v4856, 0.0
      %v4883 = vmax.f32 %v4171, 0.0
      %v4884 = vmax.f32 %v4173, 0.0
      %v4885 = vmax.f32 %v4861, 0.0
      %v4886 = vmax.f32 %v4863, 0.0
      %v4887 = vmax.f32 %v4178, 0.0
      %v4888 = vmax.f32 %v4180, 0.0
      %v4889 = vmax.f32 %v4868, 0.0
      %v4890 = vmax.f32 %v4870, 0.0
      %v4891 = vmax.f32 %v4185, 0.0
      %v4892 = vmax.f32 %v4187, 0.0
      %v4893 = vmax.f32 %v4875, 0.0
      %v4894 = vmax.f32 %v4877, 0.0
      %v4895 = vld [vmem:[%s5] sm:$0x7]
      %v4896 = vld [vmem:[%s7] sm:$0x7]
      %4898 = vset.pattern.permute.xlu0 0
      %4899 = vperm.xlu0 %4898, %v4896
      %v4900 = vpop.permute.xlu0 %4899
      %v4903 = vsel %vm611, %v4895, 0
      %4905 = vmatprep.subr.mxu0 0.0
      %4906 = vmatpush1.msra.mxu0 0.0
      %4907 = vmatprep.subr.mxu0 0.0
      %4908 = vmatpush1.msra.mxu0 0.0
      %4909 = vmatprep.subr.mxu0 0.0
      %4910 = vmatpush1.msra.mxu0 0.0
      %4911 = vmatprep.subr.mxu0 0.0
      %4912 = vmatpush1.msra.mxu0 0.0
      %4913 = vmatprep.subr.mxu0 0.0
      %4914 = vmatpush1.msra.mxu0 0.0
      %4915 = vmatprep.subr.mxu0 0.0
      %4916 = vmatpush1.msra.mxu0 0.0
      %4917 = vmatprep.subr.mxu0 0.0
      %4918 = vmatpush1.msra.mxu0 0.0
      %4919 = vmatprep.subr.mxu0 0.0
      %4920 = vmatpush1.msra.mxu0 0.0
      %4921 = vmatprep.subr.mxu0 0.0
      %4922 = vmatpush1.msra.mxu0 0.0
      %4923 = vmatprep.subr.mxu0 0.0
      %4924 = vmatpush1.msra.mxu0 0.0
      %4925 = vmatprep.subr.mxu0 0.0
      %4926 = vmatpush1.msra.mxu0 0.0
      %4927 = vmatprep.subr.mxu0 0.0
      %4928 = vmatpush1.msra.mxu0 0.0
      %v4929 = vand.u32 %v4892, 4294901760
      %4930 = vmatprep.subr.mxu0 %v4929
      %v4931 = vand.u32 %v4891, 4294901760
      %4932 = vmatpush1.msra.mxu0 %v4931
      %v4933 = vand.u32 %v4888, 4294901760
      %4934 = vmatprep.subr.mxu0 %v4933
      %v4935 = vand.u32 %v4887, 4294901760
      %4936 = vmatpush1.msra.mxu0 %v4935
      %v4937 = vand.u32 %v4884, 4294901760
      %4938 = vmatprep.subr.mxu0 %v4937
      %v4939 = vand.u32 %v4883, 4294901760
      %4940 = vmatpush1.msra.mxu0 %v4939
      %v4941 = vand.u32 %v4880, 4294901760
      %4942 = vmatprep.subr.mxu0 %v4941
      %v4943 = vand.u32 %v4879, 4294901760
      %4944 = vmatpush1.msra.mxu0 %v4943
      %4945 = vmatprep.subr.mxu0 0.0
      %4946 = vmatpush2.msra.mxu0 0.0
      %4947 = vmatprep.subr.mxu0 0.0
      %4948 = vmatpush2.msra.mxu0 0.0
      %4949 = vmatprep.subr.mxu0 0.0
      %4950 = vmatpush2.msra.mxu0 0.0
      %4951 = vmatprep.subr.mxu0 0.0
      %4952 = vmatpush2.msra.mxu0 0.0
      %4953 = vmatprep.subr.mxu0 0.0
      %4954 = vmatpush2.msra.mxu0 0.0
      %4955 = vmatprep.subr.mxu0 0.0
      %4956 = vmatpush2.msra.mxu0 0.0
      %4957 = vmatprep.subr.mxu0 0.0
      %4958 = vmatpush2.msra.mxu0 0.0
      %4959 = vmatprep.subr.mxu0 0.0
      %4960 = vmatpush2.msra.mxu0 0.0
      %4961 = vmatprep.subr.mxu0 0.0
      %4962 = vmatpush2.msra.mxu0 0.0
      %4963 = vmatprep.subr.mxu0 0.0
      %4964 = vmatpush2.msra.mxu0 0.0
      %4965 = vmatprep.subr.mxu0 0.0
      %4966 = vmatpush2.msra.mxu0 0.0
      %4967 = vmatprep.subr.mxu0 0.0
      %4968 = vmatpush2.msra.mxu0 0.0
      %4969 = vmatprep.subr.mxu0 0.0
      %4970 = vmatpush2.msra.mxu0 0.0
      %4971 = vmatprep.subr.mxu0 0.0
      %4972 = vmatpush2.msra.mxu0 0.0
      %4973 = vmatprep.subr.mxu0 0.0
      %4974 = vmatpush2.msra.mxu0 0.0
      %4975 = vmatprep.subr.mxu0 0.0
      %4976 = vmatpush2.msra.mxu0 0.0
      %4977 = vmatprep.mubr.f32.mxu0 0.0
      %v4978 = vand.u32 %v4903, 4294901760
      %v4979 = vsub.f32 %v4903, %v4978
      %v4980 = vand.u32 %v4979, 4294901760
      %v4981 = vsub.f32 %v4979, %v4980
      %v4982 = vand.u32 %v4981, 4294901760
      %4983 = vmatmul.mubr.f32.gmra.mxu0 %v4982
      %v4984 = vpop.f32.mrf.mxu0
      %v4985 = vadd.f32 %v4900, %v4984
      %v4986 = vpop.f32.mrf.mxu0
      %v4987 = vadd.f32 %v4900, %v4986
      %4988 = vdwg.mxu0
      %4989 = vmatprep.subr.mxu0 0.0
      %4990 = vmatpush1.msra.mxu0 0.0
      %4991 = vmatprep.subr.mxu0 0.0
      %4992 = vmatpush1.msra.mxu0 0.0
      %4993 = vmatprep.subr.mxu0 0.0
      %4994 = vmatpush1.msra.mxu0 0.0
      %4995 = vmatprep.subr.mxu0 0.0
      %4996 = vmatpush1.msra.mxu0 0.0
      %4997 = vmatprep.subr.mxu0 0.0
      %4998 = vmatpush1.msra.mxu0 0.0
      %4999 = vmatprep.subr.mxu0 0.0
      %5000 = vmatpush1.msra.mxu0 0.0
      %5001 = vmatprep.subr.mxu0 0.0
      %5002 = vmatpush1.msra.mxu0 0.0
      %5003 = vmatprep.subr.mxu0 0.0
      %5004 = vmatpush1.msra.mxu0 0.0
      %5005 = vmatprep.subr.mxu0 0.0
      %5006 = vmatpush1.msra.mxu0 0.0
      %5007 = vmatprep.subr.mxu0 0.0
      %5008 = vmatpush1.msra.mxu0 0.0
      %5009 = vmatprep.subr.mxu0 0.0
      %5010 = vmatpush1.msra.mxu0 0.0
      %5011 = vmatprep.subr.mxu0 0.0
      %5012 = vmatpush1.msra.mxu0 0.0
      %v5013 = vand.u32 %v4892, 4294901760
      %v5014 = vsub.f32 %v4892, %v5013
      %v5015 = vand.u32 %v5014, 4294901760
      %v5016 = vsub.f32 %v5014, %v5015
      %v5017 = vand.u32 %v5016, 4294901760
      %5018 = vmatprep.subr.mxu0 %v5017
      %v5019 = vand.u32 %v4891, 4294901760
      %v5020 = vsub.f32 %v4891, %v5019
      %v5021 = vand.u32 %v5020, 4294901760
      %v5022 = vsub.f32 %v5020, %v5021
      %v5023 = vand.u32 %v5022, 4294901760
      %5024 = vmatpush1.msra.mxu0 %v5023
      %v5025 = vand.u32 %v4888, 4294901760
      %v5026 = vsub.f32 %v4888, %v5025
      %v5027 = vand.u32 %v5026, 4294901760
      %v5028 = vsub.f32 %v5026, %v5027
      %v5029 = vand.u32 %v5028, 4294901760
      %5030 = vmatprep.subr.mxu0 %v5029
      %v5031 = vand.u32 %v4887, 4294901760
      %v5032 = vsub.f32 %v4887, %v5031
      %v5033 = vand.u32 %v5032, 4294901760
      %v5034 = vsub.f32 %v5032, %v5033
      %v5035 = vand.u32 %v5034, 4294901760
      %5036 = vmatpush1.msra.mxu0 %v5035
      %v5037 = vand.u32 %v4884, 4294901760
      %v5038 = vsub.f32 %v4884, %v5037
      %v5039 = vand.u32 %v5038, 4294901760
      %v5040 = vsub.f32 %v5038, %v5039
      %v5041 = vand.u32 %v5040, 4294901760
      %5042 = vmatprep.subr.mxu0 %v5041
      %v5043 = vand.u32 %v4883, 4294901760
      %v5044 = vsub.f32 %v4883, %v5043
      %v5045 = vand.u32 %v5044, 4294901760
      %v5046 = vsub.f32 %v5044, %v5045
      %v5047 = vand.u32 %v5046, 4294901760
      %5048 = vmatpush1.msra.mxu0 %v5047
      %v5049 = vand.u32 %v4880, 4294901760
      %v5050 = vsub.f32 %v4880, %v5049
      %v5051 = vand.u32 %v5050, 4294901760
      %v5052 = vsub.f32 %v5050, %v5051
      %v5053 = vand.u32 %v5052, 4294901760
      %5054 = vmatprep.subr.mxu0 %v5053
      %v5055 = vand.u32 %v4879, 4294901760
      %v5056 = vsub.f32 %v4879, %v5055
      %v5057 = vand.u32 %v5056, 4294901760
      %v5058 = vsub.f32 %v5056, %v5057
      %v5059 = vand.u32 %v5058, 4294901760
      %5060 = vmatpush1.msra.mxu0 %v5059
      %5061 = vmatprep.subr.mxu0 0.0
      %5062 = vmatpush2.msra.mxu0 0.0
      %5063 = vmatprep.subr.mxu0 0.0
      %5064 = vmatpush2.msra.mxu0 0.0
      %5065 = vmatprep.subr.mxu0 0.0
      %5066 = vmatpush2.msra.mxu0 0.0
      %5067 = vmatprep.subr.mxu0 0.0
      %5068 = vmatpush2.msra.mxu0 0.0
      %5069 = vmatprep.subr.mxu0 0.0
      %5070 = vmatpush2.msra.mxu0 0.0
      %5071 = vmatprep.subr.mxu0 0.0
      %5072 = vmatpush2.msra.mxu0 0.0
      %5073 = vmatprep.subr.mxu0 0.0
      %5074 = vmatpush2.msra.mxu0 0.0
      %5075 = vmatprep.subr.mxu0 0.0
      %5076 = vmatpush2.msra.mxu0 0.0
      %5077 = vmatprep.subr.mxu0 0.0
      %5078 = vmatpush2.msra.mxu0 0.0
      %5079 = vmatprep.subr.mxu0 0.0
      %5080 = vmatpush2.msra.mxu0 0.0
      %5081 = vmatprep.subr.mxu0 0.0
      %5082 = vmatpush2.msra.mxu0 0.0
      %5083 = vmatprep.subr.mxu0 0.0
      %5084 = vmatpush2.msra.mxu0 0.0
      %5085 = vmatprep.subr.mxu0 0.0
      %5086 = vmatpush2.msra.mxu0 0.0
      %5087 = vmatprep.subr.mxu0 0.0
      %5088 = vmatpush2.msra.mxu0 0.0
      %5089 = vmatprep.subr.mxu0 0.0
      %5090 = vmatpush2.msra.mxu0 0.0
      %5091 = vmatprep.subr.mxu0 0.0
      %5092 = vmatpush2.msra.mxu0 0.0
      %5093 = vmatprep.mubr.f32.mxu0 0.0
      %v5094 = vand.u32 %v4903, 4294901760
      %5095 = vmatmul.mubr.f32.gmra.mxu0 %v5094
      %v5096 = vpop.f32.mrf.mxu0
      %v5097 = vadd.f32 %v4985, %v5096
      %v5098 = vpop.f32.mrf.mxu0
      %v5099 = vadd.f32 %v4987, %v5098
      %5100 = vdwg.mxu0
      %5101 = vmatprep.subr.mxu0 0.0
      %5102 = vmatpush1.msra.mxu0 0.0
      %5103 = vmatprep.subr.mxu0 0.0
      %5104 = vmatpush1.msra.mxu0 0.0
      %5105 = vmatprep.subr.mxu0 0.0
      %5106 = vmatpush1.msra.mxu0 0.0
      %5107 = vmatprep.subr.mxu0 0.0
      %5108 = vmatpush1.msra.mxu0 0.0
      %5109 = vmatprep.subr.mxu0 0.0
      %5110 = vmatpush1.msra.mxu0 0.0
      %5111 = vmatprep.subr.mxu0 0.0
      %5112 = vmatpush1.msra.mxu0 0.0
      %5113 = vmatprep.subr.mxu0 0.0
      %5114 = vmatpush1.msra.mxu0 0.0
      %5115 = vmatprep.subr.mxu0 0.0
      %5116 = vmatpush1.msra.mxu0 0.0
      %5117 = vmatprep.subr.mxu0 0.0
      %5118 = vmatpush1.msra.mxu0 0.0
      %5119 = vmatprep.subr.mxu0 0.0
      %5120 = vmatpush1.msra.mxu0 0.0
      %5121 = vmatprep.subr.mxu0 0.0
      %5122 = vmatpush1.msra.mxu0 0.0
      %5123 = vmatprep.subr.mxu0 0.0
      %5124 = vmatpush1.msra.mxu0 0.0
      %v5125 = vand.u32 %v4892, 4294901760
      %v5126 = vsub.f32 %v4892, %v5125
      %5127 = vmatprep.subr.mxu0 %v5126
      %v5128 = vand.u32 %v4891, 4294901760
      %v5129 = vsub.f32 %v4891, %v5128
      %5130 = vmatpush1.msra.mxu0 %v5129
      %v5131 = vand.u32 %v4888, 4294901760
      %v5132 = vsub.f32 %v4888, %v5131
      %5133 = vmatprep.subr.mxu0 %v5132
      %v5134 = vand.u32 %v4887, 4294901760
      %v5135 = vsub.f32 %v4887, %v5134
      %5136 = vmatpush1.msra.mxu0 %v5135
      %v5137 = vand.u32 %v4884, 4294901760
      %v5138 = vsub.f32 %v4884, %v5137
      %5139 = vmatprep.subr.mxu0 %v5138
      %v5140 = vand.u32 %v4883, 4294901760
      %v5141 = vsub.f32 %v4883, %v5140
      %5142 = vmatpush1.msra.mxu0 %v5141
      %v5143 = vand.u32 %v4880, 4294901760
      %v5144 = vsub.f32 %v4880, %v5143
      %5145 = vmatprep.subr.mxu0 %v5144
      %v5146 = vand.u32 %v4879, 4294901760
      %v5147 = vsub.f32 %v4879, %v5146
      %5148 = vmatpush1.msra.mxu0 %v5147
      %5149 = vmatprep.subr.mxu0 0.0
      %5150 = vmatpush2.msra.mxu0 0.0
      %5151 = vmatprep.subr.mxu0 0.0
      %5152 = vmatpush2.msra.mxu0 0.0
      %5153 = vmatprep.subr.mxu0 0.0
      %5154 = vmatpush2.msra.mxu0 0.0
      %5155 = vmatprep.subr.mxu0 0.0
      %5156 = vmatpush2.msra.mxu0 0.0
      %5157 = vmatprep.subr.mxu0 0.0
      %5158 = vmatpush2.msra.mxu0 0.0
      %5159 = vmatprep.subr.mxu0 0.0
      %5160 = vmatpush2.msra.mxu0 0.0
      %5161 = vmatprep.subr.mxu0 0.0
      %5162 = vmatpush2.msra.mxu0 0.0
      %5163 = vmatprep.subr.mxu0 0.0
      %5164 = vmatpush2.msra.mxu0 0.0
      %5165 = vmatprep.subr.mxu0 0.0
      %5166 = vmatpush2.msra.mxu0 0.0
      %5167 = vmatprep.subr.mxu0 0.0
      %5168 = vmatpush2.msra.mxu0 0.0
      %5169 = vmatprep.subr.mxu0 0.0
      %5170 = vmatpush2.msra.mxu0 0.0
      %5171 = vmatprep.subr.mxu0 0.0
      %5172 = vmatpush2.msra.mxu0 0.0
      %5173 = vmatprep.subr.mxu0 0.0
      %5174 = vmatpush2.msra.mxu0 0.0
      %5175 = vmatprep.subr.mxu0 0.0
      %5176 = vmatpush2.msra.mxu0 0.0
      %5177 = vmatprep.subr.mxu0 0.0
      %5178 = vmatpush2.msra.mxu0 0.0
      %5179 = vmatprep.subr.mxu0 0.0
      %5180 = vmatpush2.msra.mxu0 0.0
      %5181 = vmatprep.mubr.f32.mxu0 0.0
      %v5182 = vand.u32 %v4903, 4294901760
      %v5183 = vsub.f32 %v4903, %v5182
      %5184 = vmatmul.mubr.f32.gmra.mxu0 %v5183
      %v5185 = vpop.f32.mrf.mxu0
      %v5186 = vadd.f32 %v5097, %v5185
      %v5187 = vpop.f32.mrf.mxu0
      %v5188 = vadd.f32 %v5099, %v5187
      %5189 = vdwg.mxu0
      %5190 = vmatprep.subr.mxu0 0.0
      %5191 = vmatpush1.msra.mxu0 0.0
      %5192 = vmatprep.subr.mxu0 0.0
      %5193 = vmatpush1.msra.mxu0 0.0
      %5194 = vmatprep.subr.mxu0 0.0
      %5195 = vmatpush1.msra.mxu0 0.0
      %5196 = vmatprep.subr.mxu0 0.0
      %5197 = vmatpush1.msra.mxu0 0.0
      %5198 = vmatprep.subr.mxu0 0.0
      %5199 = vmatpush1.msra.mxu0 0.0
      %5200 = vmatprep.subr.mxu0 0.0
      %5201 = vmatpush1.msra.mxu0 0.0
      %5202 = vmatprep.subr.mxu0 0.0
      %5203 = vmatpush1.msra.mxu0 0.0
      %5204 = vmatprep.subr.mxu0 0.0
      %5205 = vmatpush1.msra.mxu0 0.0
      %5206 = vmatprep.subr.mxu0 0.0
      %5207 = vmatpush1.msra.mxu0 0.0
      %5208 = vmatprep.subr.mxu0 0.0
      %5209 = vmatpush1.msra.mxu0 0.0
      %5210 = vmatprep.subr.mxu0 0.0
      %5211 = vmatpush1.msra.mxu0 0.0
      %5212 = vmatprep.subr.mxu0 0.0
      %5213 = vmatpush1.msra.mxu0 0.0
      %v5214 = vand.u32 %v4892, 4294901760
      %5215 = vmatprep.subr.mxu0 %v5214
      %v5216 = vand.u32 %v4891, 4294901760
      %5217 = vmatpush1.msra.mxu0 %v5216
      %v5218 = vand.u32 %v4888, 4294901760
      %5219 = vmatprep.subr.mxu0 %v5218
      %v5220 = vand.u32 %v4887, 4294901760
      %5221 = vmatpush1.msra.mxu0 %v5220
      %v5222 = vand.u32 %v4884, 4294901760
      %5223 = vmatprep.subr.mxu0 %v5222
      %v5224 = vand.u32 %v4883, 4294901760
      %5225 = vmatpush1.msra.mxu0 %v5224
      %v5226 = vand.u32 %v4880, 4294901760
      %5227 = vmatprep.subr.mxu0 %v5226
      %v5228 = vand.u32 %v4879, 4294901760
      %5229 = vmatpush1.msra.mxu0 %v5228
      %5230 = vmatprep.subr.mxu0 0.0
      %5231 = vmatpush2.msra.mxu0 0.0
      %5232 = vmatprep.subr.mxu0 0.0
      %5233 = vmatpush2.msra.mxu0 0.0
      %5234 = vmatprep.subr.mxu0 0.0
      %5235 = vmatpush2.msra.mxu0 0.0
      %5236 = vmatprep.subr.mxu0 0.0
      %5237 = vmatpush2.msra.mxu0 0.0
      %5238 = vmatprep.subr.mxu0 0.0
      %5239 = vmatpush2.msra.mxu0 0.0
      %5240 = vmatprep.subr.mxu0 0.0
      %5241 = vmatpush2.msra.mxu0 0.0
      %5242 = vmatprep.subr.mxu0 0.0
      %5243 = vmatpush2.msra.mxu0 0.0
      %5244 = vmatprep.subr.mxu0 0.0
      %5245 = vmatpush2.msra.mxu0 0.0
      %5246 = vmatprep.subr.mxu0 0.0
      %5247 = vmatpush2.msra.mxu0 0.0
      %5248 = vmatprep.subr.mxu0 0.0
      %5249 = vmatpush2.msra.mxu0 0.0
      %5250 = vmatprep.subr.mxu0 0.0
      %5251 = vmatpush2.msra.mxu0 0.0
      %5252 = vmatprep.subr.mxu0 0.0
      %5253 = vmatpush2.msra.mxu0 0.0
      %5254 = vmatprep.subr.mxu0 0.0
      %5255 = vmatpush2.msra.mxu0 0.0
      %5256 = vmatprep.subr.mxu0 0.0
      %5257 = vmatpush2.msra.mxu0 0.0
      %5258 = vmatprep.subr.mxu0 0.0
      %5259 = vmatpush2.msra.mxu0 0.0
      %5260 = vmatprep.subr.mxu0 0.0
      %5261 = vmatpush2.msra.mxu0 0.0
      %5262 = vmatprep.mubr.f32.mxu0 0.0
      %v5263 = vand.u32 %v4903, 4294901760
      %v5264 = vsub.f32 %v4903, %v5263
      %v5265 = vand.u32 %v5264, 4294901760
      %5266 = vmatmul.mubr.f32.gmra.mxu0 %v5265
      %v5267 = vpop.f32.mrf.mxu0
      %v5268 = vadd.f32 %v5186, %v5267
      %v5269 = vpop.f32.mrf.mxu0
      %v5270 = vadd.f32 %v5188, %v5269
      %5271 = vdwg.mxu0
      %5272 = vmatprep.subr.mxu0 0.0
      %5273 = vmatpush1.msra.mxu0 0.0
      %5274 = vmatprep.subr.mxu0 0.0
      %5275 = vmatpush1.msra.mxu0 0.0
      %5276 = vmatprep.subr.mxu0 0.0
      %5277 = vmatpush1.msra.mxu0 0.0
      %5278 = vmatprep.subr.mxu0 0.0
      %5279 = vmatpush1.msra.mxu0 0.0
      %5280 = vmatprep.subr.mxu0 0.0
      %5281 = vmatpush1.msra.mxu0 0.0
      %5282 = vmatprep.subr.mxu0 0.0
      %5283 = vmatpush1.msra.mxu0 0.0
      %5284 = vmatprep.subr.mxu0 0.0
      %5285 = vmatpush1.msra.mxu0 0.0
      %5286 = vmatprep.subr.mxu0 0.0
      %5287 = vmatpush1.msra.mxu0 0.0
      %5288 = vmatprep.subr.mxu0 0.0
      %5289 = vmatpush1.msra.mxu0 0.0
      %5290 = vmatprep.subr.mxu0 0.0
      %5291 = vmatpush1.msra.mxu0 0.0
      %5292 = vmatprep.subr.mxu0 0.0
      %5293 = vmatpush1.msra.mxu0 0.0
      %5294 = vmatprep.subr.mxu0 0.0
      %5295 = vmatpush1.msra.mxu0 0.0
      %v5296 = vand.u32 %v4892, 4294901760
      %v5297 = vsub.f32 %v4892, %v5296
      %v5298 = vand.u32 %v5297, 4294901760
      %5299 = vmatprep.subr.mxu0 %v5298
      %v5300 = vand.u32 %v4891, 4294901760
      %v5301 = vsub.f32 %v4891, %v5300
      %v5302 = vand.u32 %v5301, 4294901760
      %5303 = vmatpush1.msra.mxu0 %v5302
      %v5304 = vand.u32 %v4888, 4294901760
      %v5305 = vsub.f32 %v4888, %v5304
      %v5306 = vand.u32 %v5305, 4294901760
      %5307 = vmatprep.subr.mxu0 %v5306
      %v5308 = vand.u32 %v4887, 4294901760
      %v5309 = vsub.f32 %v4887, %v5308
      %v5310 = vand.u32 %v5309, 4294901760
      %5311 = vmatpush1.msra.mxu0 %v5310
      %v5312 = vand.u32 %v4884, 4294901760
      %v5313 = vsub.f32 %v4884, %v5312
      %v5314 = vand.u32 %v5313, 4294901760
      %5315 = vmatprep.subr.mxu0 %v5314
      %v5316 = vand.u32 %v4883, 4294901760
      %v5317 = vsub.f32 %v4883, %v5316
      %v5318 = vand.u32 %v5317, 4294901760
      %5319 = vmatpush1.msra.mxu0 %v5318
      %v5320 = vand.u32 %v4880, 4294901760
      %v5321 = vsub.f32 %v4880, %v5320
      %v5322 = vand.u32 %v5321, 4294901760
      %5323 = vmatprep.subr.mxu0 %v5322
      %v5324 = vand.u32 %v4879, 4294901760
      %v5325 = vsub.f32 %v4879, %v5324
      %v5326 = vand.u32 %v5325, 4294901760
      %5327 = vmatpush1.msra.mxu0 %v5326
      %5328 = vmatprep.subr.mxu0 0.0
      %5329 = vmatpush2.msra.mxu0 0.0
      %5330 = vmatprep.subr.mxu0 0.0
      %5331 = vmatpush2.msra.mxu0 0.0
      %5332 = vmatprep.subr.mxu0 0.0
      %5333 = vmatpush2.msra.mxu0 0.0
      %5334 = vmatprep.subr.mxu0 0.0
      %5335 = vmatpush2.msra.mxu0 0.0
      %5336 = vmatprep.subr.mxu0 0.0
      %5337 = vmatpush2.msra.mxu0 0.0
      %5338 = vmatprep.subr.mxu0 0.0
      %5339 = vmatpush2.msra.mxu0 0.0
      %5340 = vmatprep.subr.mxu0 0.0
      %5341 = vmatpush2.msra.mxu0 0.0
      %5342 = vmatprep.subr.mxu0 0.0
      %5343 = vmatpush2.msra.mxu0 0.0
      %5344 = vmatprep.subr.mxu0 0.0
      %5345 = vmatpush2.msra.mxu0 0.0
      %5346 = vmatprep.subr.mxu0 0.0
      %5347 = vmatpush2.msra.mxu0 0.0
      %5348 = vmatprep.subr.mxu0 0.0
      %5349 = vmatpush2.msra.mxu0 0.0
      %5350 = vmatprep.subr.mxu0 0.0
      %5351 = vmatpush2.msra.mxu0 0.0
      %5352 = vmatprep.subr.mxu0 0.0
      %5353 = vmatpush2.msra.mxu0 0.0
      %5354 = vmatprep.subr.mxu0 0.0
      %5355 = vmatpush2.msra.mxu0 0.0
      %5356 = vmatprep.subr.mxu0 0.0
      %5357 = vmatpush2.msra.mxu0 0.0
      %5358 = vmatprep.subr.mxu0 0.0
      %5359 = vmatpush2.msra.mxu0 0.0
      %5360 = vmatprep.mubr.f32.mxu0 0.0
      %v5361 = vand.u32 %v4903, 4294901760
      %5362 = vmatmul.mubr.f32.gmra.mxu0 %v5361
      %v5363 = vpop.f32.mrf.mxu0
      %v5364 = vadd.f32 %v5268, %v5363
      %v5365 = vpop.f32.mrf.mxu0
      %v5366 = vadd.f32 %v5270, %v5365
      %5367 = vdwg.mxu0
      %5368 = vmatprep.subr.mxu0 0.0
      %5369 = vmatpush1.msra.mxu0 0.0
      %5370 = vmatprep.subr.mxu0 0.0
      %5371 = vmatpush1.msra.mxu0 0.0
      %5372 = vmatprep.subr.mxu0 0.0
      %5373 = vmatpush1.msra.mxu0 0.0
      %5374 = vmatprep.subr.mxu0 0.0
      %5375 = vmatpush1.msra.mxu0 0.0
      %5376 = vmatprep.subr.mxu0 0.0
      %5377 = vmatpush1.msra.mxu0 0.0
      %5378 = vmatprep.subr.mxu0 0.0
      %5379 = vmatpush1.msra.mxu0 0.0
      %5380 = vmatprep.subr.mxu0 0.0
      %5381 = vmatpush1.msra.mxu0 0.0
      %5382 = vmatprep.subr.mxu0 0.0
      %5383 = vmatpush1.msra.mxu0 0.0
      %5384 = vmatprep.subr.mxu0 0.0
      %5385 = vmatpush1.msra.mxu0 0.0
      %5386 = vmatprep.subr.mxu0 0.0
      %5387 = vmatpush1.msra.mxu0 0.0
      %5388 = vmatprep.subr.mxu0 0.0
      %5389 = vmatpush1.msra.mxu0 0.0
      %5390 = vmatprep.subr.mxu0 0.0
      %5391 = vmatpush1.msra.mxu0 0.0
      %v5392 = vand.u32 %v4892, 4294901760
      %5393 = vmatprep.subr.mxu0 %v5392
      %v5394 = vand.u32 %v4891, 4294901760
      %5395 = vmatpush1.msra.mxu0 %v5394
      %v5396 = vand.u32 %v4888, 4294901760
      %5397 = vmatprep.subr.mxu0 %v5396
      %v5398 = vand.u32 %v4887, 4294901760
      %5399 = vmatpush1.msra.mxu0 %v5398
      %v5400 = vand.u32 %v4884, 4294901760
      %5401 = vmatprep.subr.mxu0 %v5400
      %v5402 = vand.u32 %v4883, 4294901760
      %5403 = vmatpush1.msra.mxu0 %v5402
      %v5404 = vand.u32 %v4880, 4294901760
      %5405 = vmatprep.subr.mxu0 %v5404
      %v5406 = vand.u32 %v4879, 4294901760
      %5407 = vmatpush1.msra.mxu0 %v5406
      %5408 = vmatprep.subr.mxu0 0.0
      %5409 = vmatpush2.msra.mxu0 0.0
      %5410 = vmatprep.subr.mxu0 0.0
      %5411 = vmatpush2.msra.mxu0 0.0
      %5412 = vmatprep.subr.mxu0 0.0
      %5413 = vmatpush2.msra.mxu0 0.0
      %5414 = vmatprep.subr.mxu0 0.0
      %5415 = vmatpush2.msra.mxu0 0.0
      %5416 = vmatprep.subr.mxu0 0.0
      %5417 = vmatpush2.msra.mxu0 0.0
      %5418 = vmatprep.subr.mxu0 0.0
      %5419 = vmatpush2.msra.mxu0 0.0
      %5420 = vmatprep.subr.mxu0 0.0
      %5421 = vmatpush2.msra.mxu0 0.0
      %5422 = vmatprep.subr.mxu0 0.0
      %5423 = vmatpush2.msra.mxu0 0.0
      %5424 = vmatprep.subr.mxu0 0.0
      %5425 = vmatpush2.msra.mxu0 0.0
      %5426 = vmatprep.subr.mxu0 0.0
      %5427 = vmatpush2.msra.mxu0 0.0
      %5428 = vmatprep.subr.mxu0 0.0
      %5429 = vmatpush2.msra.mxu0 0.0
      %5430 = vmatprep.subr.mxu0 0.0
      %5431 = vmatpush2.msra.mxu0 0.0
      %5432 = vmatprep.subr.mxu0 0.0
      %5433 = vmatpush2.msra.mxu0 0.0
      %5434 = vmatprep.subr.mxu0 0.0
      %5435 = vmatpush2.msra.mxu0 0.0
      %5436 = vmatprep.subr.mxu0 0.0
      %5437 = vmatpush2.msra.mxu0 0.0
      %5438 = vmatprep.subr.mxu0 0.0
      %5439 = vmatpush2.msra.mxu0 0.0
      %5440 = vmatprep.mubr.f32.mxu0 0.0
      %v5441 = vand.u32 %v4903, 4294901760
      %5442 = vmatmul.mubr.f32.gmra.mxu0 %v5441
      %v5443 = vpop.f32.mrf.mxu0
      %v5444 = vadd.f32 %v5364, %v5443
      %v5445 = vpop.f32.mrf.mxu0
      %v5446 = vadd.f32 %v5366, %v5445
      %5447 = vdwg.mxu0
      %5448 = vmatprep.subr.mxu0 0.0
      %5449 = vmatpush1.msra.mxu0 0.0
      %5450 = vmatprep.subr.mxu0 0.0
      %5451 = vmatpush1.msra.mxu0 0.0
      %5452 = vmatprep.subr.mxu0 0.0
      %5453 = vmatpush1.msra.mxu0 0.0
      %5454 = vmatprep.subr.mxu0 0.0
      %5455 = vmatpush1.msra.mxu0 0.0
      %5456 = vmatprep.subr.mxu0 0.0
      %5457 = vmatpush1.msra.mxu0 0.0
      %5458 = vmatprep.subr.mxu0 0.0
      %5459 = vmatpush1.msra.mxu0 0.0
      %5460 = vmatprep.subr.mxu0 0.0
      %5461 = vmatpush1.msra.mxu0 0.0
      %5462 = vmatprep.subr.mxu0 0.0
      %5463 = vmatpush1.msra.mxu0 0.0
      %5464 = vmatprep.subr.mxu0 0.0
      %5465 = vmatpush1.msra.mxu0 0.0
      %5466 = vmatprep.subr.mxu0 0.0
      %5467 = vmatpush1.msra.mxu0 0.0
      %5468 = vmatprep.subr.mxu0 0.0
      %5469 = vmatpush1.msra.mxu0 0.0
      %5470 = vmatprep.subr.mxu0 0.0
      %5471 = vmatpush1.msra.mxu0 0.0
      %v5472 = vand.u32 %v4894, 4294901760
      %5473 = vmatprep.subr.mxu0 %v5472
      %v5474 = vand.u32 %v4893, 4294901760
      %5475 = vmatpush1.msra.mxu0 %v5474
      %v5476 = vand.u32 %v4890, 4294901760
      %5477 = vmatprep.subr.mxu0 %v5476
      %v5478 = vand.u32 %v4889, 4294901760
      %5479 = vmatpush1.msra.mxu0 %v5478
      %v5480 = vand.u32 %v4886, 4294901760
      %5481 = vmatprep.subr.mxu0 %v5480
      %v5482 = vand.u32 %v4885, 4294901760
      %5483 = vmatpush1.msra.mxu0 %v5482
      %v5484 = vand.u32 %v4882, 4294901760
      %5485 = vmatprep.subr.mxu0 %v5484
      %v5486 = vand.u32 %v4881, 4294901760
      %5487 = vmatpush1.msra.mxu0 %v5486
      %5488 = vmatprep.subr.mxu0 0.0
      %5489 = vmatpush2.msra.mxu0 0.0
      %5490 = vmatprep.subr.mxu0 0.0
      %5491 = vmatpush2.msra.mxu0 0.0
      %5492 = vmatprep.subr.mxu0 0.0
      %5493 = vmatpush2.msra.mxu0 0.0
      %5494 = vmatprep.subr.mxu0 0.0
      %5495 = vmatpush2.msra.mxu0 0.0
      %5496 = vmatprep.subr.mxu0 0.0
      %5497 = vmatpush2.msra.mxu0 0.0
      %5498 = vmatprep.subr.mxu0 0.0
      %5499 = vmatpush2.msra.mxu0 0.0
      %5500 = vmatprep.subr.mxu0 0.0
      %5501 = vmatpush2.msra.mxu0 0.0
      %5502 = vmatprep.subr.mxu0 0.0
      %5503 = vmatpush2.msra.mxu0 0.0
      %5504 = vmatprep.subr.mxu0 0.0
      %5505 = vmatpush2.msra.mxu0 0.0
      %5506 = vmatprep.subr.mxu0 0.0
      %5507 = vmatpush2.msra.mxu0 0.0
      %5508 = vmatprep.subr.mxu0 0.0
      %5509 = vmatpush2.msra.mxu0 0.0
      %5510 = vmatprep.subr.mxu0 0.0
      %5511 = vmatpush2.msra.mxu0 0.0
      %5512 = vmatprep.subr.mxu0 0.0
      %5513 = vmatpush2.msra.mxu0 0.0
      %5514 = vmatprep.subr.mxu0 0.0
      %5515 = vmatpush2.msra.mxu0 0.0
      %5516 = vmatprep.subr.mxu0 0.0
      %5517 = vmatpush2.msra.mxu0 0.0
      %5518 = vmatprep.subr.mxu0 0.0
      %5519 = vmatpush2.msra.mxu0 0.0
      %5520 = vmatprep.mubr.f32.mxu0 0.0
      %v5521 = vand.u32 %v4903, 4294901760
      %v5522 = vsub.f32 %v4903, %v5521
      %v5523 = vand.u32 %v5522, 4294901760
      %v5524 = vsub.f32 %v5522, %v5523
      %v5525 = vand.u32 %v5524, 4294901760
      %5526 = vmatmul.mubr.f32.gmra.mxu0 %v5525
      %v5527 = vpop.f32.mrf.mxu0
      %v5528 = vadd.f32 %v4900, %v5527
      %v5529 = vpop.f32.mrf.mxu0
      %v5530 = vadd.f32 %v4900, %v5529
      %5531 = vdwg.mxu0
      %5532 = vmatprep.subr.mxu0 0.0
      %5533 = vmatpush1.msra.mxu0 0.0
      %5534 = vmatprep.subr.mxu0 0.0
      %5535 = vmatpush1.msra.mxu0 0.0
      %5536 = vmatprep.subr.mxu0 0.0
      %5537 = vmatpush1.msra.mxu0 0.0
      %5538 = vmatprep.subr.mxu0 0.0
      %5539 = vmatpush1.msra.mxu0 0.0
      %5540 = vmatprep.subr.mxu0 0.0
      %5541 = vmatpush1.msra.mxu0 0.0
      %5542 = vmatprep.subr.mxu0 0.0
      %5543 = vmatpush1.msra.mxu0 0.0
      %5544 = vmatprep.subr.mxu0 0.0
      %5545 = vmatpush1.msra.mxu0 0.0
      %5546 = vmatprep.subr.mxu0 0.0
      %5547 = vmatpush1.msra.mxu0 0.0
      %5548 = vmatprep.subr.mxu0 0.0
      %5549 = vmatpush1.msra.mxu0 0.0
      %5550 = vmatprep.subr.mxu0 0.0
      %5551 = vmatpush1.msra.mxu0 0.0
      %5552 = vmatprep.subr.mxu0 0.0
      %5553 = vmatpush1.msra.mxu0 0.0
      %5554 = vmatprep.subr.mxu0 0.0
      %5555 = vmatpush1.msra.mxu0 0.0
      %v5556 = vand.u32 %v4894, 4294901760
      %v5557 = vsub.f32 %v4894, %v5556
      %v5558 = vand.u32 %v5557, 4294901760
      %v5559 = vsub.f32 %v5557, %v5558
      %v5560 = vand.u32 %v5559, 4294901760
      %5561 = vmatprep.subr.mxu0 %v5560
      %v5562 = vand.u32 %v4893, 4294901760
      %v5563 = vsub.f32 %v4893, %v5562
      %v5564 = vand.u32 %v5563, 4294901760
      %v5565 = vsub.f32 %v5563, %v5564
      %v5566 = vand.u32 %v5565, 4294901760
      %5567 = vmatpush1.msra.mxu0 %v5566
      %v5568 = vand.u32 %v4890, 4294901760
      %v5569 = vsub.f32 %v4890, %v5568
      %v5570 = vand.u32 %v5569, 4294901760
      %v5571 = vsub.f32 %v5569, %v5570
      %v5572 = vand.u32 %v5571, 4294901760
      %5573 = vmatprep.subr.mxu0 %v5572
      %v5574 = vand.u32 %v4889, 4294901760
      %v5575 = vsub.f32 %v4889, %v5574
      %v5576 = vand.u32 %v5575, 4294901760
      %v5577 = vsub.f32 %v5575, %v5576
      %v5578 = vand.u32 %v5577, 4294901760
      %5579 = vmatpush1.msra.mxu0 %v5578
      %v5580 = vand.u32 %v4886, 4294901760
      %v5581 = vsub.f32 %v4886, %v5580
      %v5582 = vand.u32 %v5581, 4294901760
      %v5583 = vsub.f32 %v5581, %v5582
      %v5584 = vand.u32 %v5583, 4294901760
      %5585 = vmatprep.subr.mxu0 %v5584
      %v5586 = vand.u32 %v4885, 4294901760
      %v5587 = vsub.f32 %v4885, %v5586
      %v5588 = vand.u32 %v5587, 4294901760
      %v5589 = vsub.f32 %v5587, %v5588
      %v5590 = vand.u32 %v5589, 4294901760
      %5591 = vmatpush1.msra.mxu0 %v5590
      %v5592 = vand.u32 %v4882, 4294901760
      %v5593 = vsub.f32 %v4882, %v5592
      %v5594 = vand.u32 %v5593, 4294901760
      %v5595 = vsub.f32 %v5593, %v5594
      %v5596 = vand.u32 %v5595, 4294901760
      %5597 = vmatprep.subr.mxu0 %v5596
      %v5598 = vand.u32 %v4881, 4294901760
      %v5599 = vsub.f32 %v4881, %v5598
      %v5600 = vand.u32 %v5599, 4294901760
      %v5601 = vsub.f32 %v5599, %v5600
      %v5602 = vand.u32 %v5601, 4294901760
      %5603 = vmatpush1.msra.mxu0 %v5602
      %5604 = vmatprep.subr.mxu0 0.0
      %5605 = vmatpush2.msra.mxu0 0.0
      %5606 = vmatprep.subr.mxu0 0.0
      %5607 = vmatpush2.msra.mxu0 0.0
      %5608 = vmatprep.subr.mxu0 0.0
      %5609 = vmatpush2.msra.mxu0 0.0
      %5610 = vmatprep.subr.mxu0 0.0
      %5611 = vmatpush2.msra.mxu0 0.0
      %5612 = vmatprep.subr.mxu0 0.0
      %5613 = vmatpush2.msra.mxu0 0.0
      %5614 = vmatprep.subr.mxu0 0.0
      %5615 = vmatpush2.msra.mxu0 0.0
      %5616 = vmatprep.subr.mxu0 0.0
      %5617 = vmatpush2.msra.mxu0 0.0
      %5618 = vmatprep.subr.mxu0 0.0
      %5619 = vmatpush2.msra.mxu0 0.0
      %5620 = vmatprep.subr.mxu0 0.0
      %5621 = vmatpush2.msra.mxu0 0.0
      %5622 = vmatprep.subr.mxu0 0.0
      %5623 = vmatpush2.msra.mxu0 0.0
      %5624 = vmatprep.subr.mxu0 0.0
      %5625 = vmatpush2.msra.mxu0 0.0
      %5626 = vmatprep.subr.mxu0 0.0
      %5627 = vmatpush2.msra.mxu0 0.0
      %5628 = vmatprep.subr.mxu0 0.0
      %5629 = vmatpush2.msra.mxu0 0.0
      %5630 = vmatprep.subr.mxu0 0.0
      %5631 = vmatpush2.msra.mxu0 0.0
      %5632 = vmatprep.subr.mxu0 0.0
      %5633 = vmatpush2.msra.mxu0 0.0
      %5634 = vmatprep.subr.mxu0 0.0
      %5635 = vmatpush2.msra.mxu0 0.0
      %5636 = vmatprep.mubr.f32.mxu0 0.0
      %v5637 = vand.u32 %v4903, 4294901760
      %5638 = vmatmul.mubr.f32.gmra.mxu0 %v5637
      %v5639 = vpop.f32.mrf.mxu0
      %v5640 = vadd.f32 %v5528, %v5639
      %v5641 = vpop.f32.mrf.mxu0
      %v5642 = vadd.f32 %v5530, %v5641
      %5643 = vdwg.mxu0
      %5644 = vmatprep.subr.mxu0 0.0
      %5645 = vmatpush1.msra.mxu0 0.0
      %5646 = vmatprep.subr.mxu0 0.0
      %5647 = vmatpush1.msra.mxu0 0.0
      %5648 = vmatprep.subr.mxu0 0.0
      %5649 = vmatpush1.msra.mxu0 0.0
      %5650 = vmatprep.subr.mxu0 0.0
      %5651 = vmatpush1.msra.mxu0 0.0
      %5652 = vmatprep.subr.mxu0 0.0
      %5653 = vmatpush1.msra.mxu0 0.0
      %5654 = vmatprep.subr.mxu0 0.0
      %5655 = vmatpush1.msra.mxu0 0.0
      %5656 = vmatprep.subr.mxu0 0.0
      %5657 = vmatpush1.msra.mxu0 0.0
      %5658 = vmatprep.subr.mxu0 0.0
      %5659 = vmatpush1.msra.mxu0 0.0
      %5660 = vmatprep.subr.mxu0 0.0
      %5661 = vmatpush1.msra.mxu0 0.0
      %5662 = vmatprep.subr.mxu0 0.0
      %5663 = vmatpush1.msra.mxu0 0.0
      %5664 = vmatprep.subr.mxu0 0.0
      %5665 = vmatpush1.msra.mxu0 0.0
      %5666 = vmatprep.subr.mxu0 0.0
      %5667 = vmatpush1.msra.mxu0 0.0
      %v5668 = vand.u32 %v4894, 4294901760
      %v5669 = vsub.f32 %v4894, %v5668
      %5670 = vmatprep.subr.mxu0 %v5669
      %v5671 = vand.u32 %v4893, 4294901760
      %v5672 = vsub.f32 %v4893, %v5671
      %5673 = vmatpush1.msra.mxu0 %v5672
      %v5674 = vand.u32 %v4890, 4294901760
      %v5675 = vsub.f32 %v4890, %v5674
      %5676 = vmatprep.subr.mxu0 %v5675
      %v5677 = vand.u32 %v4889, 4294901760
      %v5678 = vsub.f32 %v4889, %v5677
      %5679 = vmatpush1.msra.mxu0 %v5678
      %v5680 = vand.u32 %v4886, 4294901760
      %v5681 = vsub.f32 %v4886, %v5680
      %5682 = vmatprep.subr.mxu0 %v5681
      %v5683 = vand.u32 %v4885, 4294901760
      %v5684 = vsub.f32 %v4885, %v5683
      %5685 = vmatpush1.msra.mxu0 %v5684
      %v5686 = vand.u32 %v4882, 4294901760
      %v5687 = vsub.f32 %v4882, %v5686
      %5688 = vmatprep.subr.mxu0 %v5687
      %v5689 = vand.u32 %v4881, 4294901760
      %v5690 = vsub.f32 %v4881, %v5689
      %5691 = vmatpush1.msra.mxu0 %v5690
      %5692 = vmatprep.subr.mxu0 0.0
      %5693 = vmatpush2.msra.mxu0 0.0
      %5694 = vmatprep.subr.mxu0 0.0
      %5695 = vmatpush2.msra.mxu0 0.0
      %5696 = vmatprep.subr.mxu0 0.0
      %5697 = vmatpush2.msra.mxu0 0.0
      %5698 = vmatprep.subr.mxu0 0.0
      %5699 = vmatpush2.msra.mxu0 0.0
      %5700 = vmatprep.subr.mxu0 0.0
      %5701 = vmatpush2.msra.mxu0 0.0
      %5702 = vmatprep.subr.mxu0 0.0
      %5703 = vmatpush2.msra.mxu0 0.0
      %5704 = vmatprep.subr.mxu0 0.0
      %5705 = vmatpush2.msra.mxu0 0.0
      %5706 = vmatprep.subr.mxu0 0.0
      %5707 = vmatpush2.msra.mxu0 0.0
      %5708 = vmatprep.subr.mxu0 0.0
      %5709 = vmatpush2.msra.mxu0 0.0
      %5710 = vmatprep.subr.mxu0 0.0
      %5711 = vmatpush2.msra.mxu0 0.0
      %5712 = vmatprep.subr.mxu0 0.0
      %5713 = vmatpush2.msra.mxu0 0.0
      %5714 = vmatprep.subr.mxu0 0.0
      %5715 = vmatpush2.msra.mxu0 0.0
      %5716 = vmatprep.subr.mxu0 0.0
      %5717 = vmatpush2.msra.mxu0 0.0
      %5718 = vmatprep.subr.mxu0 0.0
      %5719 = vmatpush2.msra.mxu0 0.0
      %5720 = vmatprep.subr.mxu0 0.0
      %5721 = vmatpush2.msra.mxu0 0.0
      %5722 = vmatprep.subr.mxu0 0.0
      %5723 = vmatpush2.msra.mxu0 0.0
      %5724 = vmatprep.mubr.f32.mxu0 0.0
      %v5725 = vand.u32 %v4903, 4294901760
      %v5726 = vsub.f32 %v4903, %v5725
      %5727 = vmatmul.mubr.f32.gmra.mxu0 %v5726
      %v5728 = vpop.f32.mrf.mxu0
      %v5729 = vadd.f32 %v5640, %v5728
      %v5730 = vpop.f32.mrf.mxu0
      %v5731 = vadd.f32 %v5642, %v5730
      %5732 = vdwg.mxu0
      %5733 = vmatprep.subr.mxu0 0.0
      %5734 = vmatpush1.msra.mxu0 0.0
      %5735 = vmatprep.subr.mxu0 0.0
      %5736 = vmatpush1.msra.mxu0 0.0
      %5737 = vmatprep.subr.mxu0 0.0
      %5738 = vmatpush1.msra.mxu0 0.0
      %5739 = vmatprep.subr.mxu0 0.0
      %5740 = vmatpush1.msra.mxu0 0.0
      %5741 = vmatprep.subr.mxu0 0.0
      %5742 = vmatpush1.msra.mxu0 0.0
      %5743 = vmatprep.subr.mxu0 0.0
      %5744 = vmatpush1.msra.mxu0 0.0
      %5745 = vmatprep.subr.mxu0 0.0
      %5746 = vmatpush1.msra.mxu0 0.0
      %5747 = vmatprep.subr.mxu0 0.0
      %5748 = vmatpush1.msra.mxu0 0.0
      %5749 = vmatprep.subr.mxu0 0.0
      %5750 = vmatpush1.msra.mxu0 0.0
      %5751 = vmatprep.subr.mxu0 0.0
      %5752 = vmatpush1.msra.mxu0 0.0
      %5753 = vmatprep.subr.mxu0 0.0
      %5754 = vmatpush1.msra.mxu0 0.0
      %5755 = vmatprep.subr.mxu0 0.0
      %5756 = vmatpush1.msra.mxu0 0.0
      %v5757 = vand.u32 %v4894, 4294901760
      %5758 = vmatprep.subr.mxu0 %v5757
      %v5759 = vand.u32 %v4893, 4294901760
      %5760 = vmatpush1.msra.mxu0 %v5759
      %v5761 = vand.u32 %v4890, 4294901760
      %5762 = vmatprep.subr.mxu0 %v5761
      %v5763 = vand.u32 %v4889, 4294901760
      %5764 = vmatpush1.msra.mxu0 %v5763
      %v5765 = vand.u32 %v4886, 4294901760
      %5766 = vmatprep.subr.mxu0 %v5765
      %v5767 = vand.u32 %v4885, 4294901760
      %5768 = vmatpush1.msra.mxu0 %v5767
      %v5769 = vand.u32 %v4882, 4294901760
      %5770 = vmatprep.subr.mxu0 %v5769
      %v5771 = vand.u32 %v4881, 4294901760
      %5772 = vmatpush1.msra.mxu0 %v5771
      %5773 = vmatprep.subr.mxu0 0.0
      %5774 = vmatpush2.msra.mxu0 0.0
      %5775 = vmatprep.subr.mxu0 0.0
      %5776 = vmatpush2.msra.mxu0 0.0
      %5777 = vmatprep.subr.mxu0 0.0
      %5778 = vmatpush2.msra.mxu0 0.0
      %5779 = vmatprep.subr.mxu0 0.0
      %5780 = vmatpush2.msra.mxu0 0.0
      %5781 = vmatprep.subr.mxu0 0.0
      %5782 = vmatpush2.msra.mxu0 0.0
      %5783 = vmatprep.subr.mxu0 0.0
      %5784 = vmatpush2.msra.mxu0 0.0
      %5785 = vmatprep.subr.mxu0 0.0
      %5786 = vmatpush2.msra.mxu0 0.0
      %5787 = vmatprep.subr.mxu0 0.0
      %5788 = vmatpush2.msra.mxu0 0.0
      %5789 = vmatprep.subr.mxu0 0.0
      %5790 = vmatpush2.msra.mxu0 0.0
      %5791 = vmatprep.subr.mxu0 0.0
      %5792 = vmatpush2.msra.mxu0 0.0
      %5793 = vmatprep.subr.mxu0 0.0
      %5794 = vmatpush2.msra.mxu0 0.0
      %5795 = vmatprep.subr.mxu0 0.0
      %5796 = vmatpush2.msra.mxu0 0.0
      %5797 = vmatprep.subr.mxu0 0.0
      %5798 = vmatpush2.msra.mxu0 0.0
      %5799 = vmatprep.subr.mxu0 0.0
      %5800 = vmatpush2.msra.mxu0 0.0
      %5801 = vmatprep.subr.mxu0 0.0
      %5802 = vmatpush2.msra.mxu0 0.0
      %5803 = vmatprep.subr.mxu0 0.0
      %5804 = vmatpush2.msra.mxu0 0.0
      %5805 = vmatprep.mubr.f32.mxu0 0.0
      %v5806 = vand.u32 %v4903, 4294901760
      %v5807 = vsub.f32 %v4903, %v5806
      %v5808 = vand.u32 %v5807, 4294901760
      %5809 = vmatmul.mubr.f32.gmra.mxu0 %v5808
      %v5810 = vpop.f32.mrf.mxu0
      %v5811 = vadd.f32 %v5729, %v5810
      %v5812 = vpop.f32.mrf.mxu0
      %v5813 = vadd.f32 %v5731, %v5812
      %5814 = vdwg.mxu0
      %5815 = vmatprep.subr.mxu0 0.0
      %5816 = vmatpush1.msra.mxu0 0.0
      %5817 = vmatprep.subr.mxu0 0.0
      %5818 = vmatpush1.msra.mxu0 0.0
      %5819 = vmatprep.subr.mxu0 0.0
      %5820 = vmatpush1.msra.mxu0 0.0
      %5821 = vmatprep.subr.mxu0 0.0
      %5822 = vmatpush1.msra.mxu0 0.0
      %5823 = vmatprep.subr.mxu0 0.0
      %5824 = vmatpush1.msra.mxu0 0.0
      %5825 = vmatprep.subr.mxu0 0.0
      %5826 = vmatpush1.msra.mxu0 0.0
      %5827 = vmatprep.subr.mxu0 0.0
      %5828 = vmatpush1.msra.mxu0 0.0
      %5829 = vmatprep.subr.mxu0 0.0
      %5830 = vmatpush1.msra.mxu0 0.0
      %5831 = vmatprep.subr.mxu0 0.0
      %5832 = vmatpush1.msra.mxu0 0.0
      %5833 = vmatprep.subr.mxu0 0.0
      %5834 = vmatpush1.msra.mxu0 0.0
      %5835 = vmatprep.subr.mxu0 0.0
      %5836 = vmatpush1.msra.mxu0 0.0
      %5837 = vmatprep.subr.mxu0 0.0
      %5838 = vmatpush1.msra.mxu0 0.0
      %v5839 = vand.u32 %v4894, 4294901760
      %v5840 = vsub.f32 %v4894, %v5839
      %v5841 = vand.u32 %v5840, 4294901760
      %5842 = vmatprep.subr.mxu0 %v5841
      %v5843 = vand.u32 %v4893, 4294901760
      %v5844 = vsub.f32 %v4893, %v5843
      %v5845 = vand.u32 %v5844, 4294901760
      %5846 = vmatpush1.msra.mxu0 %v5845
      %v5847 = vand.u32 %v4890, 4294901760
      %v5848 = vsub.f32 %v4890, %v5847
      %v5849 = vand.u32 %v5848, 4294901760
      %5850 = vmatprep.subr.mxu0 %v5849
      %v5851 = vand.u32 %v4889, 4294901760
      %v5852 = vsub.f32 %v4889, %v5851
      %v5853 = vand.u32 %v5852, 4294901760
      %5854 = vmatpush1.msra.mxu0 %v5853
      %v5855 = vand.u32 %v4886, 4294901760
      %v5856 = vsub.f32 %v4886, %v5855
      %v5857 = vand.u32 %v5856, 4294901760
      %5858 = vmatprep.subr.mxu0 %v5857
      %v5859 = vand.u32 %v4885, 4294901760
      %v5860 = vsub.f32 %v4885, %v5859
      %v5861 = vand.u32 %v5860, 4294901760
      %5862 = vmatpush1.msra.mxu0 %v5861
      %v5863 = vand.u32 %v4882, 4294901760
      %v5864 = vsub.f32 %v4882, %v5863
      %v5865 = vand.u32 %v5864, 4294901760
      %5866 = vmatprep.subr.mxu0 %v5865
      %v5867 = vand.u32 %v4881, 4294901760
      %v5868 = vsub.f32 %v4881, %v5867
      %v5869 = vand.u32 %v5868, 4294901760
      %5870 = vmatpush1.msra.mxu0 %v5869
      %5871 = vmatprep.subr.mxu0 0.0
      %5872 = vmatpush2.msra.mxu0 0.0
      %5873 = vmatprep.subr.mxu0 0.0
      %5874 = vmatpush2.msra.mxu0 0.0
      %5875 = vmatprep.subr.mxu0 0.0
      %5876 = vmatpush2.msra.mxu0 0.0
      %5877 = vmatprep.subr.mxu0 0.0
      %5878 = vmatpush2.msra.mxu0 0.0
      %5879 = vmatprep.subr.mxu0 0.0
      %5880 = vmatpush2.msra.mxu0 0.0
      %5881 = vmatprep.subr.mxu0 0.0
      %5882 = vmatpush2.msra.mxu0 0.0
      %5883 = vmatprep.subr.mxu0 0.0
      %5884 = vmatpush2.msra.mxu0 0.0
      %5885 = vmatprep.subr.mxu0 0.0
      %5886 = vmatpush2.msra.mxu0 0.0
      %5887 = vmatprep.subr.mxu0 0.0
      %5888 = vmatpush2.msra.mxu0 0.0
      %5889 = vmatprep.subr.mxu0 0.0
      %5890 = vmatpush2.msra.mxu0 0.0
      %5891 = vmatprep.subr.mxu0 0.0
      %5892 = vmatpush2.msra.mxu0 0.0
      %5893 = vmatprep.subr.mxu0 0.0
      %5894 = vmatpush2.msra.mxu0 0.0
      %5895 = vmatprep.subr.mxu0 0.0
      %5896 = vmatpush2.msra.mxu0 0.0
      %5897 = vmatprep.subr.mxu0 0.0
      %5898 = vmatpush2.msra.mxu0 0.0
      %5899 = vmatprep.subr.mxu0 0.0
      %5900 = vmatpush2.msra.mxu0 0.0
      %5901 = vmatprep.subr.mxu0 0.0
      %5902 = vmatpush2.msra.mxu0 0.0
      %5903 = vmatprep.mubr.f32.mxu0 0.0
      %v5904 = vand.u32 %v4903, 4294901760
      %5905 = vmatmul.mubr.f32.gmra.mxu0 %v5904
      %v5906 = vpop.f32.mrf.mxu0
      %v5907 = vadd.f32 %v5811, %v5906
      %v5908 = vpop.f32.mrf.mxu0
      %v5909 = vadd.f32 %v5813, %v5908
      %5910 = vdwg.mxu0
      %5911 = vmatprep.subr.mxu0 0.0
      %5912 = vmatpush1.msra.mxu0 0.0
      %5913 = vmatprep.subr.mxu0 0.0
      %5914 = vmatpush1.msra.mxu0 0.0
      %5915 = vmatprep.subr.mxu0 0.0
      %5916 = vmatpush1.msra.mxu0 0.0
      %5917 = vmatprep.subr.mxu0 0.0
      %5918 = vmatpush1.msra.mxu0 0.0
      %5919 = vmatprep.subr.mxu0 0.0
      %5920 = vmatpush1.msra.mxu0 0.0
      %5921 = vmatprep.subr.mxu0 0.0
      %5922 = vmatpush1.msra.mxu0 0.0
      %5923 = vmatprep.subr.mxu0 0.0
      %5924 = vmatpush1.msra.mxu0 0.0
      %5925 = vmatprep.subr.mxu0 0.0
      %5926 = vmatpush1.msra.mxu0 0.0
      %5927 = vmatprep.subr.mxu0 0.0
      %5928 = vmatpush1.msra.mxu0 0.0
      %5929 = vmatprep.subr.mxu0 0.0
      %5930 = vmatpush1.msra.mxu0 0.0
      %5931 = vmatprep.subr.mxu0 0.0
      %5932 = vmatpush1.msra.mxu0 0.0
      %5933 = vmatprep.subr.mxu0 0.0
      %5934 = vmatpush1.msra.mxu0 0.0
      %v5935 = vand.u32 %v4894, 4294901760
      %5936 = vmatprep.subr.mxu0 %v5935
      %v5937 = vand.u32 %v4893, 4294901760
      %5938 = vmatpush1.msra.mxu0 %v5937
      %v5939 = vand.u32 %v4890, 4294901760
      %5940 = vmatprep.subr.mxu0 %v5939
      %v5941 = vand.u32 %v4889, 4294901760
      %5942 = vmatpush1.msra.mxu0 %v5941
      %v5943 = vand.u32 %v4886, 4294901760
      %5944 = vmatprep.subr.mxu0 %v5943
      %v5945 = vand.u32 %v4885, 4294901760
      %5946 = vmatpush1.msra.mxu0 %v5945
      %v5947 = vand.u32 %v4882, 4294901760
      %5948 = vmatprep.subr.mxu0 %v5947
      %v5949 = vand.u32 %v4881, 4294901760
      %5950 = vmatpush1.msra.mxu0 %v5949
      %5951 = vmatprep.subr.mxu0 0.0
      %5952 = vmatpush2.msra.mxu0 0.0
      %5953 = vmatprep.subr.mxu0 0.0
      %5954 = vmatpush2.msra.mxu0 0.0
      %5955 = vmatprep.subr.mxu0 0.0
      %5956 = vmatpush2.msra.mxu0 0.0
      %5957 = vmatprep.subr.mxu0 0.0
      %5958 = vmatpush2.msra.mxu0 0.0
      %5959 = vmatprep.subr.mxu0 0.0
      %5960 = vmatpush2.msra.mxu0 0.0
      %5961 = vmatprep.subr.mxu0 0.0
      %5962 = vmatpush2.msra.mxu0 0.0
      %5963 = vmatprep.subr.mxu0 0.0
      %5964 = vmatpush2.msra.mxu0 0.0
      %5965 = vmatprep.subr.mxu0 0.0
      %5966 = vmatpush2.msra.mxu0 0.0
      %5967 = vmatprep.subr.mxu0 0.0
      %5968 = vmatpush2.msra.mxu0 0.0
      %5969 = vmatprep.subr.mxu0 0.0
      %5970 = vmatpush2.msra.mxu0 0.0
      %5971 = vmatprep.subr.mxu0 0.0
      %5972 = vmatpush2.msra.mxu0 0.0
      %5973 = vmatprep.subr.mxu0 0.0
      %5974 = vmatpush2.msra.mxu0 0.0
      %5975 = vmatprep.subr.mxu0 0.0
      %5976 = vmatpush2.msra.mxu0 0.0
      %5977 = vmatprep.subr.mxu0 0.0
      %5978 = vmatpush2.msra.mxu0 0.0
      %5979 = vmatprep.subr.mxu0 0.0
      %5980 = vmatpush2.msra.mxu0 0.0
      %5981 = vmatprep.subr.mxu0 0.0
      %5982 = vmatpush2.msra.mxu0 0.0
      %5983 = vmatprep.mubr.f32.mxu0 0.0
      %v5984 = vand.u32 %v4903, 4294901760
      %5985 = vmatmul.mubr.f32.gmra.mxu0 %v5984
      %v5986 = vpop.f32.mrf.mxu0
      %v5987 = vadd.f32 %v5907, %v5986
      %v5988 = vpop.f32.mrf.mxu0
      %v5989 = vadd.f32 %v5909, %v5988
      %5990 = vdwg.mxu0
      %v5995 = vcombine.low %v5444, %v5446
      %v5996 = vcombine.low %v5987, %v5989
      %5999 = vst [vmem:[%s363] sm:$0x77] %v5995
      %6000 = vst [vmem:[%s363 + $0x8] sm:$0x77] %v5996
      %s6001 = smul.u32 4, %s24
      %p6002 = scmp.lt.s32.totalorder %s23, 1
      %s6003 = scalar_select %p6002, %s23, 1
      %p6004 = scmp.lt.s32.totalorder %s6001, 7
      %s6005 = scalar_select %p6004, %s6001, 7
      %s6006 = smul.addr %s6003, 8
      %s6007 = sadd.s32 %s6005, %s6006
      %s6008 = smul.addr %s6007, 4
      %s6009 = scalar_lea.vmem %s8, %s6008
      // Predicated region
      $region53: #{tpu_custom_call.1} parent=51 // pred_check
        %p6010 = pneg %p231
      $region54: #{tpu_custom_call.1} parent=51 // pred_check_branch
        %6012 = sbr.rel (%p6010) target = $region56
      $region55: #{tpu_custom_call.1} parent=51 // pred_region
        %s6013 = smul.u32 4, %s24
      $region56: #{tpu_custom_call.1} parent=51 // pred_fallthru
        _
    $region52: #{tpu_custom_call.1} parent=5 // pred_fallthru
      _
    %p6014 = scmp.le.s32.totalorder 2, %s14
    // Predicated region
    $region57: #{tpu_custom_call.1} parent=5 // pred_check
      %p6015 = pneg %p6014
    $region58: #{tpu_custom_call.1} parent=5 // pred_check_branch
      %6017 = sbr.rel (%p6015) target = $region60
    $region59: #{tpu_custom_call.1} parent=5 // pred_region
      %s6018 = ssub.s32 %s14, 2
      // Predicated region
      $region61: #{tpu_custom_call.1} parent=59 // pred_check
        %p6019 = pneg %p237
      $region62: #{tpu_custom_call.1} parent=59 // pred_check_branch
        %6021 = sbr.rel (%p6019) target = $region64
      $region63: #{tpu_custom_call.1} parent=59 // pred_region
        %s6022 = smul.u32 4, %s26
        %p6023 = scmp.lt.s32.totalorder %s25, 1
        %s6024 = scalar_select %p6023, %s25, 1
        %p6025 = scmp.lt.s32.totalorder %s6022, 7
        %s6026 = scalar_select %p6025, %s6022, 7
        %s6027 = smul.addr %s6024, 8
        %s6028 = sadd.s32 %s6026, %s6027
        %s6029 = smul.addr %s6028, 4
        %s6030 = scalar_lea.vmem %s8, %s6029
      $region64: #{tpu_custom_call.1} parent=59 // pred_fallthru
        _
    $region60: #{tpu_custom_call.1} parent=5 // pred_fallthru
      _
  $region6: #{tpu_custom_call.1} parent=0 // loop_footer
    %s18 = sadd.s32 1, %s14
  $region7: #{tpu_custom_call.1} parent=0 // loop_footer_branch
    %13 = sbr.rel target = $region3
  $region8: #{tpu_custom_call.1} parent=0 // loop_exit
    _

</llo_original>
